<compile_context>
chip_gen: v7x
topology: tpu7x:2x2x1
jax: 0.10.0
libtpu: 0.0.40
codegen_flags: <defaults>
</compile_context>

<pallas_src>
import jax
import jax.numpy as jnp
from jax.experimental import pallas as pl
from jax.experimental.pallas import tpu as pltpu


# ---------------------------------------------------------------------------
# Model / layout constants
# ---------------------------------------------------------------------------
BATCH = 2
LATENT_DIM = 16
LATTICE = 16
C1, C2 = 16, 32
FEAT_HW = LATTICE // 4                 # two stride-2 stages: 16 -> 8 -> 4
FLAT = C2 * FEAT_HW * FEAT_HW          # 32*4*4 = 512

IN_FLAT = 1 * LATTICE * LATTICE        # 256
H1 = C1 * (LATTICE // 2) ** 2          # 16*8*8 = 1024
LAT_PAD = 128                          # latent lanes padded to one full vreg
MROWS = 8                              # batch rows padded to one sublane tile

_LAYER_DIMS = [(IN_FLAT, H1), (H1, FLAT), (FLAT, 2 * LAT_PAD),
               (LAT_PAD, FLAT), (FLAT, H1), (H1, IN_FLAT)]
_FLOPS = 2 * MROWS * sum(k * n for k, n in _LAYER_DIMS)
_TRANSCENDENTALS = MROWS * LAT_PAD + MROWS * IN_FLAT          # exp + sigmoid
_BYTES = (sum(k * n for k, n in _LAYER_DIMS) * 2              # bf16 weights
          + sum(n for _, n in _LAYER_DIMS) * 4                # f32 biases
          + (MROWS * IN_FLAT + MROWS * LAT_PAD) * 4           # x, eps
          + 2 * MROWS * (2 * LAT_PAD + IN_FLAT) * 4 // 2)     # outputs


# ---------------------------------------------------------------------------
# Fused Pallas kernel: entire VAE forward, all intermediates VMEM-resident
# ---------------------------------------------------------------------------
def _vae_fused_kernel(x_ref, w1_ref, b1_ref, w2_ref, b2_ref,
                      wml_ref, bml_ref, eps_ref, wd_ref, bd_ref,
                      wt1_ref, bt1_ref, wt2_ref, bt2_ref,
                      mulv_ref, recon_ref):
    def mm(a, w_ref, b_ref):
        # bf16 MXU matmul, f32 accumulation, f32 bias broadcast over rows.
        return jnp.dot(a.astype(jnp.bfloat16), w_ref[...],
                       preferred_element_type=jnp.float32) + b_ref[...]

    relu = lambda t: jnp.maximum(t, 0.0)

    # ---- encoder (conv layers pre-lowered to dense matrices) ----
    h = relu(mm(x_ref[...], w1_ref, b1_ref))          # (8, 1024)
    h = relu(mm(h, w2_ref, b2_ref))                   # (8, 512)
    mulv = mm(h, wml_ref, bml_ref)                    # (8, 256): mu | log_var
    mulv_ref[...] = mulv

    # ---- reparameterize: z = mu + exp(0.5 * log_var) * eps ----
    mu = mulv[:, :LAT_PAD]                            # 128-aligned lane slices
    log_var = mulv[:, LAT_PAD:]
    z = mu + jnp.exp(0.5 * log_var) * eps_ref[...]    # (8, 128); padded lanes = 0

    # ---- decoder ----
    h = relu(mm(z, wd_ref, bd_ref))                   # (8, 512)
    h = relu(mm(h, wt1_ref, bt1_ref))                 # (8, 1024)
    recon_ref[...] = jax.nn.sigmoid(mm(h, wt2_ref, bt2_ref))   # (8, 256)


# ---------------------------------------------------------------------------
# One-time parameter preparation (outside the hot path):
# lower each conv / conv-transpose to an exact dense matrix, pad, cast to bf16
# ---------------------------------------------------------------------------
def _conv_to_dense(w, b, in_shape, *, stride, padding):
    """PyTorch Conv2d (OIHW weight) as dense (Cin*H*W, Cout*OH*OW) matrix."""
    Cin, H, W = in_shape
    eye = jnp.eye(Cin * H * W, dtype=jnp.float32).reshape(Cin * H * W, Cin, H, W)
    out = jax.lax.conv_general_dilated(
        eye, w, window_strides=(stride, stride),
        padding=((padding, padding), (padding, padding)),
        dimension_numbers=("NCHW", "OIHW", "NCHW"))
    _, Cout, OH, OW = out.shape
    dense = out.reshape(Cin * H * W, Cout * OH * OW)
    bias = jnp.repeat(b, OH * OW)
    return dense, bias, (Cout, OH, OW)


def _convt_to_dense(w, b, in_shape, *, stride, padding, output_padding):
    """PyTorch ConvTranspose2d ((Cin,Cout,K,K) weight) as a dense matrix via
    input-dilation + asymmetric pad + stride-1 conv with the flipped kernel."""
    Cin, H, W = in_shape
    _, Cout, K, _ = w.shape
    eye = jnp.eye(Cin * H * W, dtype=jnp.float32).reshape(Cin * H * W, Cin, H, W)
    w_conv = jnp.flip(w, axis=(2, 3)).transpose(1, 0, 2, 3)   # (Cout, Cin, K, K)
    lo = K - 1 - padding
    hi = K - 1 - padding + output_padding
    out = jax.lax.conv_general_dilated(
        eye, w_conv, window_strides=(1, 1), padding=((lo, hi), (lo, hi)),
        lhs_dilation=(stride, stride),
        dimension_numbers=("NCHW", "OIHW", "NCHW"))
    _, _, OH, OW = out.shape
    dense = out.reshape(Cin * H * W, Cout * OH * OW)
    bias = jnp.repeat(b, OH * OW)
    return dense, bias, (Cout, OH, OW)


def prepare_params(params):
    d1, bv1, s1 = _conv_to_dense(params["enc_conv1_w"], params["enc_conv1_b"],
                                 (1, LATTICE, LATTICE), stride=2, padding=1)
    d2, bv2, _ = _conv_to_dense(params["enc_conv2_w"], params["enc_conv2_b"],
                                s1, stride=2, padding=1)

    # merged mu / log_var projection, lane-padded: mu -> lanes [0,128), lv -> [128,256)
    wml = jnp.zeros((FLAT, 2 * LAT_PAD), jnp.float32)
    wml = wml.at[:, :LATENT_DIM].set(params["enc_mu_w"])
    wml = wml.at[:, LAT_PAD:LAT_PAD + LATENT_DIM].set(params["enc_lv_w"])
    bml = jnp.zeros((2 * LAT_PAD,), jnp.float32)
    bml = bml.at[:LATENT_DIM].set(params["enc_mu_b"])
    bml = bml.at[LAT_PAD:LAT_PAD + LATENT_DIM].set(params["enc_lv_b"])

    # decoder fc with latent rows padded to 128 (padded z lanes are exactly 0)
    wd = jnp.zeros((LAT_PAD, FLAT), jnp.float32).at[:LATENT_DIM].set(params["dec_fc_w"])
    bd = params["dec_fc_b"]

    d3, bv3, s3 = _convt_to_dense(params["dec_ct1_w"], params["dec_ct1_b"],
                                  (C2, FEAT_HW, FEAT_HW),
                                  stride=2, padding=1, output_padding=1)
    d4, bv4, _ = _convt_to_dense(params["dec_ct2_w"], params["dec_ct2_b"],
                                 s3, stride=2, padding=1, output_padding=1)

    tobf = lambda a: a.astype(jnp.bfloat16)
    row = lambda v: v.astype(jnp.float32).reshape(1, -1)
    return {
        "w1": tobf(d1), "b1": row(bv1),       # (256,1024), (1,1024)
        "w2": tobf(d2), "b2": row(bv2),       # (1024,512), (1,512)
        "wml": tobf(wml), "bml": row(bml),    # (512,256),  (1,256)
        "wd": tobf(wd), "bd": row(bd),        # (128,512),  (1,512)
        "wt1": tobf(d3), "bt1": row(bv3),     # (512,1024), (1,1024)
        "wt2": tobf(d4), "bt2": row(bv4),     # (1024,256), (1,256)
    }


# ---------------------------------------------------------------------------
# Forward wrapper: one pallas_call, minimal pad/slice glue at the boundary
# ---------------------------------------------------------------------------
def conv_vae_forward(prep, x, eps):
    """Matches Conv_VAE.forward(x, p=None): returns (reconstructed, mu, log_var).
    torch.randn_like is replaced by the explicit `eps` argument."""
    N = x.shape[0]
    x_flat = x.reshape(N, -1).astype(jnp.float32)                 # NCHW flatten
    x_pad = jnp.zeros((MROWS, IN_FLAT), jnp.float32).at[:N].set(x_flat)
    eps_pad = jnp.zeros((MROWS, LAT_PAD), jnp.float32).at[:N, :LATENT_DIM].set(eps)

    args = (x_pad, prep["w1"], prep["b1"], prep["w2"], prep["b2"],
            prep["wml"], prep["bml"], eps_pad, prep["wd"], prep["bd"],
            prep["wt1"], prep["bt1"], prep["wt2"], prep["bt2"])
    in_specs = [pl.BlockSpec(a.shape, lambda i: (0, 0)) for a in args]

    mulv, recon_rows = pl.pallas_call(
        _vae_fused_kernel,
        out_shape=(jax.ShapeDtypeStruct((MROWS, 2 * LAT_PAD), jnp.float32),
                   jax.ShapeDtypeStruct((MROWS, IN_FLAT), jnp.float32)),
        grid=(1,),
        in_specs=in_specs,
        out_specs=(pl.BlockSpec((MROWS, 2 * LAT_PAD), lambda i: (0, 0)),
                   pl.BlockSpec((MROWS, IN_FLAT), lambda i: (0, 0))),
        compiler_params=pltpu.CompilerParams(vmem_limit_bytes=32 * 1024 * 1024),
        cost_estimate=pl.CostEstimate(flops=_FLOPS,
                                      transcendentals=_TRANSCENDENTALS,
                                      bytes_accessed=_BYTES),
    )(*args)

    mu = mulv[:N, :LATENT_DIM]
    log_var = mulv[:N, LAT_PAD:LAT_PAD + LATENT_DIM]
    recon = recon_rows[:N].reshape(N, 1, LATTICE, LATTICE)
    return recon, mu, log_var


# ---------------------------------------------------------------------------
# Parameter init (raw PyTorch-layout weights) + plain-JAX f32 reference
# ---------------------------------------------------------------------------
def init_params(key):
    ks = jax.random.split(key, 8)
    n = lambda k, shape, scale=0.05: scale * jax.random.normal(k, shape, jnp.float32)
    z = lambda shape: jnp.zeros(shape, jnp.float32)
    return {
        # encoder: Conv2d(1,C1,3,s2,p1)+ReLU -> Conv2d(C1,C2,3,s2,p1)+ReLU
        "enc_conv1_w": n(ks[0], (C1, 1, 3, 3)),  "enc_conv1_b": z((C1,)),
        "enc_conv2_w": n(ks[1], (C2, C1, 3, 3)), "enc_conv2_b": z((C2,)),
        # flatten -> Linear(FLAT, latent) for mu and log_var
        "enc_mu_w": n(ks[2], (FLAT, LATENT_DIM)), "enc_mu_b": z((LATENT_DIM,)),
        "enc_lv_w": n(ks[3], (FLAT, LATENT_DIM)), "enc_lv_b": z((LATENT_DIM,)),
        # decoder: Linear(latent, FLAT)+ReLU -> reshape (C2,4,4)
        "dec_fc_w": n(ks[4], (LATENT_DIM, FLAT)), "dec_fc_b": z((FLAT,)),
        # ConvT(C2,C1,3,s2,p1,op1)+ReLU -> ConvT(C1,1,3,s2,p1,op1)+Sigmoid
        "dec_ct1_w": n(ks[5], (C2, C1, 3, 3)), "dec_ct1_b": z((C1,)),
        "dec_ct2_w": n(ks[6], (C1, 1, 3, 3)),  "dec_ct2_b": z((1,)),
    }


def reference_forward(params, x, eps):
    """Pure-JAX f32 reference with PyTorch conv / conv-transpose semantics."""
    def conv(h, w, b, s, p):
        y = jax.lax.conv_general_dilated(
            h, w, (s, s), ((p, p), (p, p)),
            dimension_numbers=("NCHW", "OIHW", "NCHW"))
        return y + b.reshape(1, -1, 1, 1)

    def convt(h, w, b, s, p, op):
        K = w.shape[2]
        w_conv = jnp.flip(w, axis=(2, 3)).transpose(1, 0, 2, 3)
        lo, hi = K - 1 - p, K - 1 - p + op
        y = jax.lax.conv_general_dilated(
            h, w_conv, (1, 1), ((lo, hi), (lo, hi)), lhs_dilation=(s, s),
            dimension_numbers=("NCHW", "OIHW", "NCHW"))
        return y + b.reshape(1, -1, 1, 1)

    N = x.shape[0]
    h = jax.nn.relu(conv(x, params["enc_conv1_w"], params["enc_conv1_b"], 2, 1))
    h = jax.nn.relu(conv(h, params["enc_conv2_w"], params["enc_conv2_b"], 2, 1))
    h = h.reshape(N, -1)
    mu = h @ params["enc_mu_w"] + params["enc_mu_b"]
    lv = h @ params["enc_lv_w"] + params["enc_lv_b"]
    z = mu + jnp.exp(0.5 * lv) * eps
    d = jax.nn.relu(z @ params["dec_fc_w"] + params["dec_fc_b"])
    d = d.reshape(N, C2, FEAT_HW, FEAT_HW)
    d = jax.nn.relu(convt(d, params["dec_ct1_w"], params["dec_ct1_b"], 2, 1, 1))
    recon = jax.nn.sigmoid(convt(d, params["dec_ct2_w"], params["dec_ct2_b"], 2, 1, 1))
    return recon, mu, lv


# ---------------------------------------------------------------------------
if __name__ == "__main__":
    key = jax.random.PRNGKey(0)
    k_param, k_input, k_noise = jax.random.split(key, 3)

    params = init_params(k_param)
    prep = prepare_params(params)   # one-time: conv->dense lowering, pad, bf16

    # Ising-style lattice input, NCHW: (batch=2, channels=1, 16, 16) in [0, 1]
    x = (jax.random.bernoulli(k_input, 0.5, (BATCH, 1, LATTICE, LATTICE))
         .astype(jnp.float32))
    eps = jax.random.normal(k_noise, (BATCH, LATENT_DIM), jnp.float32)

    fwd = jax.jit(conv_vae_forward)
    recon, mu, log_var = fwd(prep, x, eps)
    jax.block_until_ready((recon, mu, log_var))

    # shape / range checks
    assert recon.shape == (BATCH, 1, LATTICE, LATTICE)
    assert mu.shape == (BATCH, LATENT_DIM) and log_var.shape == (BATCH, LATENT_DIM)
    assert bool(jnp.all(jnp.isfinite(recon)))
    assert bool(jnp.all((recon >= 0.0) & (recon <= 1.0)))   # sigmoid output

    # numerical check against the plain-JAX f32 reference (bf16 matmul tolerance)
    r_ref, mu_ref, lv_ref = reference_forward(params, x, eps)
    assert bool(jnp.allclose(recon, r_ref, atol=5e-2))
    assert bool(jnp.allclose(mu, mu_ref, atol=5e-2))
    assert bool(jnp.allclose(log_var, lv_ref, atol=5e-2))

    print("KERNEL_OK")
</pallas_src>

<mosaic_0001>
module attributes {stable_mosaic.version = 11 : i64} {
  func.func @_vae_fused_kernel(%arg0: i32, %arg1: memref<8x256xf32, #tpu.memory_space<vmem>>, %arg2: memref<256x1024xbf16, #tpu.memory_space<vmem>>, %arg3: memref<1x1024xf32, #tpu.memory_space<vmem>>, %arg4: memref<1024x512xbf16, #tpu.memory_space<vmem>>, %arg5: memref<1x512xf32, #tpu.memory_space<vmem>>, %arg6: memref<512x256xbf16, #tpu.memory_space<vmem>>, %arg7: memref<1x256xf32, #tpu.memory_space<vmem>>, %arg8: memref<8x128xf32, #tpu.memory_space<vmem>>, %arg9: memref<128x512xbf16, #tpu.memory_space<vmem>>, %arg10: memref<1x512xf32, #tpu.memory_space<vmem>>, %arg11: memref<512x1024xbf16, #tpu.memory_space<vmem>>, %arg12: memref<1x1024xf32, #tpu.memory_space<vmem>>, %arg13: memref<1024x256xbf16, #tpu.memory_space<vmem>>, %arg14: memref<1x256xf32, #tpu.memory_space<vmem>>, %arg15: memref<8x256xf32, #tpu.memory_space<vmem>>, %arg16: memref<8x256xf32, #tpu.memory_space<vmem>>) attributes {dimension_semantics = [#tpu.dimension_semantics<arbitrary>], iteration_bounds = array<i64: 1>, scalar_prefetch = 0 : i64, scratch_operands = 0 : i64, tpu.core_type = #tpu.core_type<tc>, window_params = [{pipeline_mode = #tpu.pipeline_mode<synchronous>, transform_indices = @transform_0, window_bounds = array<i64: 8, 256>}, {pipeline_mode = #tpu.pipeline_mode<synchronous>, transform_indices = @transform_1, window_bounds = array<i64: 256, 1024>}, {pipeline_mode = #tpu.pipeline_mode<synchronous>, transform_indices = @transform_2, window_bounds = array<i64: 1, 1024>}, {pipeline_mode = #tpu.pipeline_mode<synchronous>, transform_indices = @transform_3, window_bounds = array<i64: 1024, 512>}, {pipeline_mode = #tpu.pipeline_mode<synchronous>, transform_indices = @transform_4, window_bounds = array<i64: 1, 512>}, {pipeline_mode = #tpu.pipeline_mode<synchronous>, transform_indices = @transform_5, window_bounds = array<i64: 512, 256>}, {pipeline_mode = #tpu.pipeline_mode<synchronous>, transform_indices = @transform_6, window_bounds = array<i64: 1, 256>}, {pipeline_mode = #tpu.pipeline_mode<synchronous>, transform_indices = @transform_7, window_bounds = array<i64: 8, 128>}, {pipeline_mode = #tpu.pipeline_mode<synchronous>, transform_indices = @transform_8, window_bounds = array<i64: 128, 512>}, {pipeline_mode = #tpu.pipeline_mode<synchronous>, transform_indices = @transform_9, window_bounds = array<i64: 1, 512>}, {pipeline_mode = #tpu.pipeline_mode<synchronous>, transform_indices = @transform_10, window_bounds = array<i64: 512, 1024>}, {pipeline_mode = #tpu.pipeline_mode<synchronous>, transform_indices = @transform_11, window_bounds = array<i64: 1, 1024>}, {pipeline_mode = #tpu.pipeline_mode<synchronous>, transform_indices = @transform_12, window_bounds = array<i64: 1024, 256>}, {pipeline_mode = #tpu.pipeline_mode<synchronous>, transform_indices = @transform_13, window_bounds = array<i64: 1, 256>}, {pipeline_mode = #tpu.pipeline_mode<synchronous>, transform_indices = @transform_14, window_bounds = array<i64: 8, 256>}, {pipeline_mode = #tpu.pipeline_mode<synchronous>, transform_indices = @transform_15, window_bounds = array<i64: 8, 256>}]} {
    %c0 = arith.constant 0 : index
    %c0_0 = arith.constant 0 : index
    %0 = vector.load %arg1[%c0, %c0_0] : memref<8x256xf32, #tpu.memory_space<vmem>>, vector<8x256xf32>
    %1 = arith.truncf %0 : vector<8x256xf32> to vector<8x256xbf16>
    %c0_1 = arith.constant 0 : index
    %c0_2 = arith.constant 0 : index
    %2 = vector.load %arg2[%c0_1, %c0_2] : memref<256x1024xbf16, #tpu.memory_space<vmem>>, vector<256x1024xbf16>
    %cst = arith.constant dense<0.000000e+00> : vector<8x1024xf32>
    %3 = tpu.matmul %1, %2, %cst {dimension_numbers = #tpu.dot_dimension_numbers<[1], [0], [0], [1], [0, 0, 1, 1], [], []>} : vector<8x256xbf16>, vector<256x1024xbf16>, vector<8x1024xf32> -> vector<8x1024xf32>
    %c0_3 = arith.constant 0 : index
    %c0_4 = arith.constant 0 : index
    %4 = vector.load %arg3[%c0_3, %c0_4] : memref<1x1024xf32, #tpu.memory_space<vmem>>, vector<1x1024xf32>
    %5 = vector.broadcast %4 : vector<1x1024xf32> to vector<8x1024xf32>
    %6 = arith.addf %3, %5 : vector<8x1024xf32>
    %cst_5 = arith.constant 0.000000e+00 : f32
    %7 = vector.broadcast %cst_5 : f32 to vector<8x1024xf32>
    %8 = arith.maximumf %6, %7 : vector<8x1024xf32>
    %9 = arith.truncf %8 : vector<8x1024xf32> to vector<8x1024xbf16>
    %c0_6 = arith.constant 0 : index
    %c0_7 = arith.constant 0 : index
    %10 = vector.load %arg4[%c0_6, %c0_7] : memref<1024x512xbf16, #tpu.memory_space<vmem>>, vector<1024x512xbf16>
    %cst_8 = arith.constant dense<0.000000e+00> : vector<8x512xf32>
    %11 = tpu.matmul %9, %10, %cst_8 {dimension_numbers = #tpu.dot_dimension_numbers<[1], [0], [0], [1], [0, 0, 1, 1], [], []>} : vector<8x1024xbf16>, vector<1024x512xbf16>, vector<8x512xf32> -> vector<8x512xf32>
    %c0_9 = arith.constant 0 : index
    %c0_10 = arith.constant 0 : index
    %12 = vector.load %arg5[%c0_9, %c0_10] : memref<1x512xf32, #tpu.memory_space<vmem>>, vector<1x512xf32>
    %13 = vector.broadcast %12 : vector<1x512xf32> to vector<8x512xf32>
    %14 = arith.addf %11, %13 : vector<8x512xf32>
    %cst_11 = arith.constant 0.000000e+00 : f32
    %15 = vector.broadcast %cst_11 : f32 to vector<8x512xf32>
    %16 = arith.maximumf %14, %15 : vector<8x512xf32>
    %17 = arith.truncf %16 : vector<8x512xf32> to vector<8x512xbf16>
    %c0_12 = arith.constant 0 : index
    %c0_13 = arith.constant 0 : index
    %18 = vector.load %arg6[%c0_12, %c0_13] : memref<512x256xbf16, #tpu.memory_space<vmem>>, vector<512x256xbf16>
    %cst_14 = arith.constant dense<0.000000e+00> : vector<8x256xf32>
    %19 = tpu.matmul %17, %18, %cst_14 {dimension_numbers = #tpu.dot_dimension_numbers<[1], [0], [0], [1], [0, 0, 1, 1], [], []>} : vector<8x512xbf16>, vector<512x256xbf16>, vector<8x256xf32> -> vector<8x256xf32>
    %c0_15 = arith.constant 0 : index
    %c0_16 = arith.constant 0 : index
    %20 = vector.load %arg7[%c0_15, %c0_16] : memref<1x256xf32, #tpu.memory_space<vmem>>, vector<1x256xf32>
    %21 = vector.broadcast %20 : vector<1x256xf32> to vector<8x256xf32>
    %22 = arith.addf %19, %21 : vector<8x256xf32>
    %c0_17 = arith.constant 0 : index
    %c0_18 = arith.constant 0 : index
    %23 = vector.load %arg15[%c0_17, %c0_18] : memref<8x256xf32, #tpu.memory_space<vmem>>, vector<8x256xf32>
    tpu.vector_store %arg15[%c0_17, %c0_18], %22 {strides = array<i32>} : memref<8x256xf32, #tpu.memory_space<vmem>>, vector<8x256xf32>,
    %24 = vector.extract_strided_slice %22 {offsets = [0, 0], sizes = [8, 128], strides = [1, 1]} : vector<8x256xf32> to vector<8x128xf32>
    %25 = vector.extract_strided_slice %22 {offsets = [0, 128], sizes = [8, 128], strides = [1, 1]} : vector<8x256xf32> to vector<8x128xf32>
    %cst_19 = arith.constant 5.000000e-01 : f32
    %26 = vector.broadcast %cst_19 : f32 to vector<8x128xf32>
    %27 = arith.mulf %26, %25 : vector<8x128xf32>
    %28 = math.exp %27 : vector<8x128xf32>
    %c0_20 = arith.constant 0 : index
    %c0_21 = arith.constant 0 : index
    %29 = vector.load %arg8[%c0_20, %c0_21] : memref<8x128xf32, #tpu.memory_space<vmem>>, vector<8x128xf32>
    %30 = arith.mulf %28, %29 : vector<8x128xf32>
    %31 = arith.addf %24, %30 : vector<8x128xf32>
    %32 = arith.truncf %31 : vector<8x128xf32> to vector<8x128xbf16>
    %c0_22 = arith.constant 0 : index
    %c0_23 = arith.constant 0 : index
    %33 = vector.load %arg9[%c0_22, %c0_23] : memref<128x512xbf16, #tpu.memory_space<vmem>>, vector<128x512xbf16>
    %cst_24 = arith.constant dense<0.000000e+00> : vector<8x512xf32>
    %34 = tpu.matmul %32, %33, %cst_24 {dimension_numbers = #tpu.dot_dimension_numbers<[1], [0], [0], [1], [0, 0, 1, 1], [], []>} : vector<8x128xbf16>, vector<128x512xbf16>, vector<8x512xf32> -> vector<8x512xf32>
    %c0_25 = arith.constant 0 : index
    %c0_26 = arith.constant 0 : index
    %35 = vector.load %arg10[%c0_25, %c0_26] : memref<1x512xf32, #tpu.memory_space<vmem>>, vector<1x512xf32>
    %36 = vector.broadcast %35 : vector<1x512xf32> to vector<8x512xf32>
    %37 = arith.addf %34, %36 : vector<8x512xf32>
    %cst_27 = arith.constant 0.000000e+00 : f32
    %38 = vector.broadcast %cst_27 : f32 to vector<8x512xf32>
    %39 = arith.maximumf %37, %38 : vector<8x512xf32>
    %40 = arith.truncf %39 : vector<8x512xf32> to vector<8x512xbf16>
    %c0_28 = arith.constant 0 : index
    %c0_29 = arith.constant 0 : index
    %41 = vector.load %arg11[%c0_28, %c0_29] : memref<512x1024xbf16, #tpu.memory_space<vmem>>, vector<512x1024xbf16>
    %cst_30 = arith.constant dense<0.000000e+00> : vector<8x1024xf32>
    %42 = tpu.matmul %40, %41, %cst_30 {dimension_numbers = #tpu.dot_dimension_numbers<[1], [0], [0], [1], [0, 0, 1, 1], [], []>} : vector<8x512xbf16>, vector<512x1024xbf16>, vector<8x1024xf32> -> vector<8x1024xf32>
    %c0_31 = arith.constant 0 : index
    %c0_32 = arith.constant 0 : index
    %43 = vector.load %arg12[%c0_31, %c0_32] : memref<1x1024xf32, #tpu.memory_space<vmem>>, vector<1x1024xf32>
    %44 = vector.broadcast %43 : vector<1x1024xf32> to vector<8x1024xf32>
    %45 = arith.addf %42, %44 : vector<8x1024xf32>
    %cst_33 = arith.constant 0.000000e+00 : f32
    %46 = vector.broadcast %cst_33 : f32 to vector<8x1024xf32>
    %47 = arith.maximumf %45, %46 : vector<8x1024xf32>
    %48 = arith.truncf %47 : vector<8x1024xf32> to vector<8x1024xbf16>
    %c0_34 = arith.constant 0 : index
    %c0_35 = arith.constant 0 : index
    %49 = vector.load %arg13[%c0_34, %c0_35] : memref<1024x256xbf16, #tpu.memory_space<vmem>>, vector<1024x256xbf16>
    %cst_36 = arith.constant dense<0.000000e+00> : vector<8x256xf32>
    %50 = tpu.matmul %48, %49, %cst_36 {dimension_numbers = #tpu.dot_dimension_numbers<[1], [0], [0], [1], [0, 0, 1, 1], [], []>} : vector<8x1024xbf16>, vector<1024x256xbf16>, vector<8x256xf32> -> vector<8x256xf32>
    %c0_37 = arith.constant 0 : index
    %c0_38 = arith.constant 0 : index
    %51 = vector.load %arg14[%c0_37, %c0_38] : memref<1x256xf32, #tpu.memory_space<vmem>>, vector<1x256xf32>
    %52 = vector.broadcast %51 : vector<1x256xf32> to vector<8x256xf32>
    %53 = arith.addf %50, %52 : vector<8x256xf32>
    %54 = arith.negf %53 : vector<8x256xf32>
    %55 = math.exp %54 : vector<8x256xf32>
    %cst_39 = arith.constant 1.000000e+00 : f32
    %56 = vector.broadcast %cst_39 : f32 to vector<8x256xf32>
    %57 = arith.addf %56, %55 : vector<8x256xf32>
    %58 = arith.divf %56, %57 : vector<8x256xf32>
    %c0_40 = arith.constant 0 : index
    %c0_41 = arith.constant 0 : index
    %59 = vector.load %arg16[%c0_40, %c0_41] : memref<8x256xf32, #tpu.memory_space<vmem>>, vector<8x256xf32>
    tpu.vector_store %arg16[%c0_40, %c0_41], %58 {strides = array<i32>} : memref<8x256xf32, #tpu.memory_space<vmem>>, vector<8x256xf32>,
    return
  }
  func.func @transform_0(%arg0: i32) -> (i32, i32) {
    %c0_i32 = arith.constant 0 : i32
    %c0_i32_0 = arith.constant 0 : i32
    %c0_i32_1 = arith.constant 0 : i32
    return %c0_i32, %c0_i32_0 : i32, i32
  }
  func.func @transform_1(%arg0: i32) -> (i32, i32) {
    %c0_i32 = arith.constant 0 : i32
    %c0_i32_0 = arith.constant 0 : i32
    %c0_i32_1 = arith.constant 0 : i32
    return %c0_i32, %c0_i32_0 : i32, i32
  }
  func.func @transform_2(%arg0: i32) -> (i32, i32) {
    %c0_i32 = arith.constant 0 : i32
    %c0_i32_0 = arith.constant 0 : i32
    %c0_i32_1 = arith.constant 0 : i32
    return %c0_i32, %c0_i32_0 : i32, i32
  }
  func.func @transform_3(%arg0: i32) -> (i32, i32) {
    %c0_i32 = arith.constant 0 : i32
    %c0_i32_0 = arith.constant 0 : i32
    %c0_i32_1 = arith.constant 0 : i32
    return %c0_i32, %c0_i32_0 : i32, i32
  }
  func.func @transform_4(%arg0: i32) -> (i32, i32) {
    %c0_i32 = arith.constant 0 : i32
    %c0_i32_0 = arith.constant 0 : i32
    %c0_i32_1 = arith.constant 0 : i32
    return %c0_i32, %c0_i32_0 : i32, i32
  }
  func.func @transform_5(%arg0: i32) -> (i32, i32) {
    %c0_i32 = arith.constant 0 : i32
    %c0_i32_0 = arith.constant 0 : i32
    %c0_i32_1 = arith.constant 0 : i32
    return %c0_i32, %c0_i32_0 : i32, i32
  }
  func.func @transform_6(%arg0: i32) -> (i32, i32) {
    %c0_i32 = arith.constant 0 : i32
    %c0_i32_0 = arith.constant 0 : i32
    %c0_i32_1 = arith.constant 0 : i32
    return %c0_i32, %c0_i32_0 : i32, i32
  }
  func.func @transform_7(%arg0: i32) -> (i32, i32) {
    %c0_i32 = arith.constant 0 : i32
    %c0_i32_0 = arith.constant 0 : i32
    %c0_i32_1 = arith.constant 0 : i32
    return %c0_i32, %c0_i32_0 : i32, i32
  }
  func.func @transform_8(%arg0: i32) -> (i32, i32) {
    %c0_i32 = arith.constant 0 : i32
    %c0_i32_0 = arith.constant 0 : i32
    %c0_i32_1 = arith.constant 0 : i32
    return %c0_i32, %c0_i32_0 : i32, i32
  }
  func.func @transform_9(%arg0: i32) -> (i32, i32) {
    %c0_i32 = arith.constant 0 : i32
    %c0_i32_0 = arith.constant 0 : i32
    %c0_i32_1 = arith.constant 0 : i32
    return %c0_i32, %c0_i32_0 : i32, i32
  }
  func.func @transform_10(%arg0: i32) -> (i32, i32) {
    %c0_i32 = arith.constant 0 : i32
    %c0_i32_0 = arith.constant 0 : i32
    %c0_i32_1 = arith.constant 0 : i32
    return %c0_i32, %c0_i32_0 : i32, i32
  }
  func.func @transform_11(%arg0: i32) -> (i32, i32) {
    %c0_i32 = arith.constant 0 : i32
    %c0_i32_0 = arith.constant 0 : i32
    %c0_i32_1 = arith.constant 0 : i32
    return %c0_i32, %c0_i32_0 : i32, i32
  }
  func.func @transform_12(%arg0: i32) -> (i32, i32) {
    %c0_i32 = arith.constant 0 : i32
    %c0_i32_0 = arith.constant 0 : i32
    %c0_i32_1 = arith.constant 0 : i32
    return %c0_i32, %c0_i32_0 : i32, i32
  }
  func.func @transform_13(%arg0: i32) -> (i32, i32) {
    %c0_i32 = arith.constant 0 : i32
    %c0_i32_0 = arith.constant 0 : i32
    %c0_i32_1 = arith.constant 0 : i32
    return %c0_i32, %c0_i32_0 : i32, i32
  }
  func.func @transform_14(%arg0: i32) -> (i32, i32) {
    %c0_i32 = arith.constant 0 : i32
    %c0_i32_0 = arith.constant 0 : i32
    %c0_i32_1 = arith.constant 0 : i32
    return %c0_i32, %c0_i32_0 : i32, i32
  }
  func.func @transform_15(%arg0: i32) -> (i32, i32) {
    %c0_i32 = arith.constant 0 : i32
    %c0_i32_0 = arith.constant 0 : i32
    %c0_i32_1 = arith.constant 0 : i32
    return %c0_i32, %c0_i32_0 : i32, i32
  }
}

</mosaic_0001>

<llo_original>
// kernel: conv_vae_forward.1
$region0: #{conv_vae_forward.1}
  #allocation0 [shape = 'u32[]', space=smem, size = 0x4, offset = 0x4, fixed_abs, tag = 'smem constant byte address 0x4 - core index']
  #allocation1 [shape = 'u32[144,128]{1,0:T(1,128)}', space=vmem, size = 0x12000, scoped, tag = 'internal scratch']
  %s0 = inlined_call_operand.vmem [shape: f32[8,256], index: 0, kind: input, shape index: {}]
  %s1 = inlined_call_operand.hbm [shape: bf16[256,1024], index: 1, kind: input, shape index: {}]
  %s2 = inlined_call_operand.vmem [shape: f32[1,1024], index: 2, kind: input, shape index: {}]
  %s3 = inlined_call_operand.hbm [shape: bf16[1024,512], index: 3, kind: input, shape index: {}]
  %s4 = inlined_call_operand.vmem [shape: f32[1,512], index: 4, kind: input, shape index: {}]
  %s5 = inlined_call_operand.hbm [shape: bf16[512,256], index: 5, kind: input, shape index: {}]
  %s6 = inlined_call_operand.vmem [shape: f32[1,256], index: 6, kind: input, shape index: {}]
  %s7 = inlined_call_operand.vmem [shape: f32[8,128], index: 7, kind: input, shape index: {}]
  %s8 = inlined_call_operand.hbm [shape: bf16[128,512], index: 8, kind: input, shape index: {}]
  %s9 = inlined_call_operand.vmem [shape: f32[1,512], index: 9, kind: input, shape index: {}]
  %s10 = inlined_call_operand.hbm [shape: bf16[512,1024], index: 10, kind: input, shape index: {}]
  %s11 = inlined_call_operand.vmem [shape: f32[1,1024], index: 11, kind: input, shape index: {}]
  %s12 = inlined_call_operand.hbm [shape: bf16[1024,256], index: 12, kind: input, shape index: {}]
  %s13 = inlined_call_operand.vmem [shape: f32[1,256], index: 13, kind: input, shape index: {}]
  %s14 = inlined_call_operand.vmem [shape: f32[8,256], index: 14, kind: output, shape index: {0}]
  %s15 = inlined_call_operand.vmem [shape: f32[8,256], index: 15, kind: output, shape index: {1}]
  %16 = xla_tuple %s14, %s15
  %s17 = sld [smem:[#allocation0]]
  $region98: #{conv_vae_forward.1} parent=0
    _
  %s19 = ssub.s32 1, %s17
  %s20 = scalar_select 0, %s19, %s17
  $region1: #{conv_vae_forward.1} parent=0
    #allocation2 [shape = 'u8[524288]{0}', space=vmem, size = 0x80000, scoped, tag = 'input window, operand 1, single buffered']
    #allocation3 [shape = 's32[1]{0}', space=sflag, size = 0x4, scoped, tag = 'scoped memory for conv_vae_forward.1']
    #allocation4 [shape = 'u8[1048576]{0}', space=vmem, size = 0x100000, scoped, tag = 'input window, operand 3, single buffered']
    #allocation5 [shape = 's32[1]{0}', space=sflag, size = 0x4, scoped, tag = 'scoped memory for conv_vae_forward.1']
    #allocation6 [shape = 'u8[262144]{0}', space=vmem, size = 0x40000, scoped, tag = 'input window, operand 5, single buffered']
    #allocation7 [shape = 'u8[131072]{0}', space=vmem, size = 0x20000, scoped, tag = 'input window, operand 8, single buffered']
    #allocation8 [shape = 's32[1]{0}', space=sflag, size = 0x4, scoped, tag = 'scoped memory for conv_vae_forward.1']
    #allocation9 [shape = 'u8[1048576]{0}', space=vmem, size = 0x100000, scoped, tag = 'input window, operand 10, single buffered']
    #allocation10 [shape = 'u8[524288]{0}', space=vmem, size = 0x80000, scoped, tag = 'input window, operand 12, single buffered']
    #allocation11 [shape = 's32[1]{0}', space=sflag, size = 0x4, scoped, tag = 'scoped memory for conv_vae_forward.1']
    %21 = vsyncpa [#allocation3], 0
    %22 = vsyncpa [#allocation5], 0
    %23 = vsyncpa [#allocation8], 0
    %24 = vsyncpa [#allocation11], 0
    // Predicated region
    $region2: #{conv_vae_forward.1} parent=1 // pred_check
      _
    $region3: #{conv_vae_forward.1} parent=1 // pred_check_branch
      %26 = sbr.rel (0) target = $region5
    $region4: #{conv_vae_forward.1} parent=1 // pred_region
      _
    $region5: #{conv_vae_forward.1} parent=1 // pred_fallthru
      _
    // Predicated region
    $region6: #{conv_vae_forward.1} parent=1 // pred_check
      _
    $region7: #{conv_vae_forward.1} parent=1 // pred_check_branch
      %28 = sbr.rel (0) target = $region9
    $region8: #{conv_vae_forward.1} parent=1 // pred_region
      %s30 = ssub.s32 16384, 16384
      %31 = vsyncadd [#allocation3], %s30
      %s32 = sshll.u32 [#allocation2], 4
      %s33 = int_to_ptr.vmem [resolvable:$true] %s32
      %38 = dma.hbm_to_vmem [thread:$0]  %s1, 16384, %s33, [#allocation3], 512, 512, 32
    $region9: #{conv_vae_forward.1} parent=1 // pred_fallthru
      _
    // Predicated region
    $region10: #{conv_vae_forward.1} parent=1 // pred_check
      _
    $region11: #{conv_vae_forward.1} parent=1 // pred_check_branch
      %40 = sbr.rel (0) target = $region13
    $region12: #{conv_vae_forward.1} parent=1 // pred_region
      _
    $region13: #{conv_vae_forward.1} parent=1 // pred_fallthru
      _
    // Predicated region
    $region14: #{conv_vae_forward.1} parent=1 // pred_check
      _
    $region15: #{conv_vae_forward.1} parent=1 // pred_check_branch
      %42 = sbr.rel (0) target = $region17
    $region16: #{conv_vae_forward.1} parent=1 // pred_region
      %s44 = ssub.s32 32768, 32768
      %45 = vsyncadd [#allocation5], %s44
      %s46 = sshll.u32 [#allocation4], 4
      %s47 = int_to_ptr.vmem [resolvable:$true] %s46
      %52 = dma.hbm_to_vmem [thread:$0]  %s3, 32768, %s47, [#allocation5], 256, 256, 16
    $region17: #{conv_vae_forward.1} parent=1 // pred_fallthru
      _
    // Predicated region
    $region18: #{conv_vae_forward.1} parent=1 // pred_check
      _
    $region19: #{conv_vae_forward.1} parent=1 // pred_check_branch
      %54 = sbr.rel (0) target = $region21
    $region20: #{conv_vae_forward.1} parent=1 // pred_region
      _
    $region21: #{conv_vae_forward.1} parent=1 // pred_fallthru
      _
    // Predicated region
    $region22: #{conv_vae_forward.1} parent=1 // pred_check
      _
    $region23: #{conv_vae_forward.1} parent=1 // pred_check_branch
      %56 = sbr.rel (0) target = $region25
    $region24: #{conv_vae_forward.1} parent=1 // pred_region
      %s58 = ssub.s32 8192, 8192
      %59 = vsyncadd [#allocation5], %s58
      %s60 = sshll.u32 [#allocation6], 4
      %s61 = int_to_ptr.vmem [resolvable:$true] %s60
      %66 = dma.hbm_to_vmem [thread:$0]  %s5, 8192, %s61, [#allocation5], 128, 128, 8
    $region25: #{conv_vae_forward.1} parent=1 // pred_fallthru
      _
    // Predicated region
    $region26: #{conv_vae_forward.1} parent=1 // pred_check
      _
    $region27: #{conv_vae_forward.1} parent=1 // pred_check_branch
      %68 = sbr.rel (0) target = $region29
    $region28: #{conv_vae_forward.1} parent=1 // pred_region
      _
    $region29: #{conv_vae_forward.1} parent=1 // pred_fallthru
      _
    // Predicated region
    $region30: #{conv_vae_forward.1} parent=1 // pred_check
      _
    $region31: #{conv_vae_forward.1} parent=1 // pred_check_branch
      %70 = sbr.rel (0) target = $region33
    $region32: #{conv_vae_forward.1} parent=1 // pred_region
      _
    $region33: #{conv_vae_forward.1} parent=1 // pred_fallthru
      _
    // Predicated region
    $region34: #{conv_vae_forward.1} parent=1 // pred_check
      _
    $region35: #{conv_vae_forward.1} parent=1 // pred_check_branch
      %72 = sbr.rel (0) target = $region37
    $region36: #{conv_vae_forward.1} parent=1 // pred_region
      %s74 = ssub.s32 4096, 4096
      %75 = vsyncadd [#allocation8], %s74
      %s76 = sshll.u32 [#allocation7], 4
      %s77 = int_to_ptr.vmem [resolvable:$true] %s76
      %82 = dma.hbm_to_vmem [thread:$0]  %s8, 4096, %s77, [#allocation8], 256, 256, 16
    $region37: #{conv_vae_forward.1} parent=1 // pred_fallthru
      _
    // Predicated region
    $region38: #{conv_vae_forward.1} parent=1 // pred_check
      _
    $region39: #{conv_vae_forward.1} parent=1 // pred_check_branch
      %84 = sbr.rel (0) target = $region41
    $region40: #{conv_vae_forward.1} parent=1 // pred_region
      _
    $region41: #{conv_vae_forward.1} parent=1 // pred_fallthru
      _
    // Predicated region
    $region42: #{conv_vae_forward.1} parent=1 // pred_check
      _
    $region43: #{conv_vae_forward.1} parent=1 // pred_check_branch
      %86 = sbr.rel (0) target = $region45
    $region44: #{conv_vae_forward.1} parent=1 // pred_region
      %s88 = ssub.s32 32768, 32768
      %89 = vsyncadd [#allocation8], %s88
      %s90 = sshll.u32 [#allocation9], 4
      %s91 = int_to_ptr.vmem [resolvable:$true] %s90
      %96 = dma.hbm_to_vmem [thread:$0]  %s10, 32768, %s91, [#allocation8], 512, 512, 32
    $region45: #{conv_vae_forward.1} parent=1 // pred_fallthru
      _
    // Predicated region
    $region46: #{conv_vae_forward.1} parent=1 // pred_check
      _
    $region47: #{conv_vae_forward.1} parent=1 // pred_check_branch
      %98 = sbr.rel (0) target = $region49
    $region48: #{conv_vae_forward.1} parent=1 // pred_region
      _
    $region49: #{conv_vae_forward.1} parent=1 // pred_fallthru
      _
    // Predicated region
    $region50: #{conv_vae_forward.1} parent=1 // pred_check
      _
    $region51: #{conv_vae_forward.1} parent=1 // pred_check_branch
      %100 = sbr.rel (0) target = $region53
    $region52: #{conv_vae_forward.1} parent=1 // pred_region
      %s102 = ssub.s32 16384, 16384
      %103 = vsyncadd [#allocation11], %s102
      %s104 = sshll.u32 [#allocation10], 4
      %s105 = int_to_ptr.vmem [resolvable:$true] %s104
      %110 = dma.hbm_to_vmem [thread:$0]  %s12, 16384, %s105, [#allocation11], 128, 128, 8
    $region53: #{conv_vae_forward.1} parent=1 // pred_fallthru
      _
    // Predicated region
    $region54: #{conv_vae_forward.1} parent=1 // pred_check
      _
    $region55: #{conv_vae_forward.1} parent=1 // pred_check_branch
      %112 = sbr.rel (0) target = $region57
    $region56: #{conv_vae_forward.1} parent=1 // pred_region
      _
    $region57: #{conv_vae_forward.1} parent=1 // pred_fallthru
      _
    // Predicated region
    $region58: #{conv_vae_forward.1} parent=1 // pred_check
      _
    $region59: #{conv_vae_forward.1} parent=1 // pred_check_branch
      %114 = sbr.rel (0) target = $region61
    $region60: #{conv_vae_forward.1} parent=1 // pred_region
      %115 = dma.done [#allocation3], 16384
    $region61: #{conv_vae_forward.1} parent=1 // pred_fallthru
      _
    // Predicated region
    $region62: #{conv_vae_forward.1} parent=1 // pred_check
      _
    $region63: #{conv_vae_forward.1} parent=1 // pred_check_branch
      %117 = sbr.rel (0) target = $region65
    $region64: #{conv_vae_forward.1} parent=1 // pred_region
      %118 = dma.done [#allocation5], 32768
    $region65: #{conv_vae_forward.1} parent=1 // pred_fallthru
      _
    // Predicated region
    $region66: #{conv_vae_forward.1} parent=1 // pred_check
      _
    $region67: #{conv_vae_forward.1} parent=1 // pred_check_branch
      %120 = sbr.rel (0) target = $region69
    $region68: #{conv_vae_forward.1} parent=1 // pred_region
      %121 = dma.done [#allocation5], 8192
    $region69: #{conv_vae_forward.1} parent=1 // pred_fallthru
      _
    // Predicated region
    $region70: #{conv_vae_forward.1} parent=1 // pred_check
      _
    $region71: #{conv_vae_forward.1} parent=1 // pred_check_branch
      %123 = sbr.rel (0) target = $region73
    $region72: #{conv_vae_forward.1} parent=1 // pred_region
      %124 = dma.done [#allocation8], 4096
    $region73: #{conv_vae_forward.1} parent=1 // pred_fallthru
      _
    // Predicated region
    $region74: #{conv_vae_forward.1} parent=1 // pred_check
      _
    $region75: #{conv_vae_forward.1} parent=1 // pred_check_branch
      %126 = sbr.rel (0) target = $region77
    $region76: #{conv_vae_forward.1} parent=1 // pred_region
      %127 = dma.done [#allocation8], 32768
    $region77: #{conv_vae_forward.1} parent=1 // pred_fallthru
      _
    // Predicated region
    $region78: #{conv_vae_forward.1} parent=1 // pred_check
      _
    $region79: #{conv_vae_forward.1} parent=1 // pred_check_branch
      %129 = sbr.rel (0) target = $region81
    $region80: #{conv_vae_forward.1} parent=1 // pred_region
      %130 = dma.done [#allocation11], 16384
    $region81: #{conv_vae_forward.1} parent=1 // pred_fallthru
      _
    %v132 = vld [vmem:[%s0] sm:$0xff]
    %v133 = vld [vmem:[%s0 + $0x8] sm:$0xff]
    %v134 = vpack.c.bf16 %v132, %v132
    %v135 = vpack.c.bf16 %v133, %v133
    %v136 = vld [vmem:[#allocation2] sm:$0xff]
    %v137 = vld [vmem:[#allocation2 + $0x8] sm:$0xff]
    %v138 = vld [vmem:[#allocation2 + $0x10] sm:$0xff]
    %v139 = vld [vmem:[#allocation2 + $0x18] sm:$0xff]
    %v140 = vld [vmem:[#allocation2 + $0x20] sm:$0xff]
    %v141 = vld [vmem:[#allocation2 + $0x28] sm:$0xff]
    %v142 = vld [vmem:[#allocation2 + $0x30] sm:$0xff]
    %v143 = vld [vmem:[#allocation2 + $0x38] sm:$0xff]
    %v144 = vld [vmem:[#allocation2 + $0x40] sm:$0xff]
    %v145 = vld [vmem:[#allocation2 + $0x48] sm:$0xff]
    %v146 = vld [vmem:[#allocation2 + $0x50] sm:$0xff]
    %v147 = vld [vmem:[#allocation2 + $0x58] sm:$0xff]
    %v148 = vld [vmem:[#allocation2 + $0x60] sm:$0xff]
    %v149 = vld [vmem:[#allocation2 + $0x68] sm:$0xff]
    %v150 = vld [vmem:[#allocation2 + $0x70] sm:$0xff]
    %v151 = vld [vmem:[#allocation2 + $0x78] sm:$0xff]
    %v152 = vld [vmem:[#allocation2 + $0x80] sm:$0xff]
    %v153 = vld [vmem:[#allocation2 + $0x88] sm:$0xff]
    %v154 = vld [vmem:[#allocation2 + $0x90] sm:$0xff]
    %v155 = vld [vmem:[#allocation2 + $0x98] sm:$0xff]
    %v156 = vld [vmem:[#allocation2 + $0xa0] sm:$0xff]
    %v157 = vld [vmem:[#allocation2 + $0xa8] sm:$0xff]
    %v158 = vld [vmem:[#allocation2 + $0xb0] sm:$0xff]
    %v159 = vld [vmem:[#allocation2 + $0xb8] sm:$0xff]
    %v160 = vld [vmem:[#allocation2 + $0xc0] sm:$0xff]
    %v161 = vld [vmem:[#allocation2 + $0xc8] sm:$0xff]
    %v162 = vld [vmem:[#allocation2 + $0xd0] sm:$0xff]
    %v163 = vld [vmem:[#allocation2 + $0xd8] sm:$0xff]
    %v164 = vld [vmem:[#allocation2 + $0xe0] sm:$0xff]
    %v165 = vld [vmem:[#allocation2 + $0xe8] sm:$0xff]
    %v166 = vld [vmem:[#allocation2 + $0xf0] sm:$0xff]
    %v167 = vld [vmem:[#allocation2 + $0xf8] sm:$0xff]
    %v168 = vld [vmem:[#allocation2 + $0x100] sm:$0xff]
    %v169 = vld [vmem:[#allocation2 + $0x108] sm:$0xff]
    %v170 = vld [vmem:[#allocation2 + $0x110] sm:$0xff]
    %v171 = vld [vmem:[#allocation2 + $0x118] sm:$0xff]
    %v172 = vld [vmem:[#allocation2 + $0x120] sm:$0xff]
    %v173 = vld [vmem:[#allocation2 + $0x128] sm:$0xff]
    %v174 = vld [vmem:[#allocation2 + $0x130] sm:$0xff]
    %v175 = vld [vmem:[#allocation2 + $0x138] sm:$0xff]
    %v176 = vld [vmem:[#allocation2 + $0x140] sm:$0xff]
    %v177 = vld [vmem:[#allocation2 + $0x148] sm:$0xff]
    %v178 = vld [vmem:[#allocation2 + $0x150] sm:$0xff]
    %v179 = vld [vmem:[#allocation2 + $0x158] sm:$0xff]
    %v180 = vld [vmem:[#allocation2 + $0x160] sm:$0xff]
    %v181 = vld [vmem:[#allocation2 + $0x168] sm:$0xff]
    %v182 = vld [vmem:[#allocation2 + $0x170] sm:$0xff]
    %v183 = vld [vmem:[#allocation2 + $0x178] sm:$0xff]
    %v184 = vld [vmem:[#allocation2 + $0x180] sm:$0xff]
    %v185 = vld [vmem:[#allocation2 + $0x188] sm:$0xff]
    %v186 = vld [vmem:[#allocation2 + $0x190] sm:$0xff]
    %v187 = vld [vmem:[#allocation2 + $0x198] sm:$0xff]
    %v188 = vld [vmem:[#allocation2 + $0x1a0] sm:$0xff]
    %v189 = vld [vmem:[#allocation2 + $0x1a8] sm:$0xff]
    %v190 = vld [vmem:[#allocation2 + $0x1b0] sm:$0xff]
    %v191 = vld [vmem:[#allocation2 + $0x1b8] sm:$0xff]
    %v192 = vld [vmem:[#allocation2 + $0x1c0] sm:$0xff]
    %v193 = vld [vmem:[#allocation2 + $0x1c8] sm:$0xff]
    %v194 = vld [vmem:[#allocation2 + $0x1d0] sm:$0xff]
    %v195 = vld [vmem:[#allocation2 + $0x1d8] sm:$0xff]
    %v196 = vld [vmem:[#allocation2 + $0x1e0] sm:$0xff]
    %v197 = vld [vmem:[#allocation2 + $0x1e8] sm:$0xff]
    %v198 = vld [vmem:[#allocation2 + $0x1f0] sm:$0xff]
    %v199 = vld [vmem:[#allocation2 + $0x1f8] sm:$0xff]
    %v200 = vld [vmem:[#allocation2 + $0x200] sm:$0xff]
    %v201 = vld [vmem:[#allocation2 + $0x208] sm:$0xff]
    %v202 = vld [vmem:[#allocation2 + $0x210] sm:$0xff]
    %v203 = vld [vmem:[#allocation2 + $0x218] sm:$0xff]
    %v204 = vld [vmem:[#allocation2 + $0x220] sm:$0xff]
    %v205 = vld [vmem:[#allocation2 + $0x228] sm:$0xff]
    %v206 = vld [vmem:[#allocation2 + $0x230] sm:$0xff]
    %v207 = vld [vmem:[#allocation2 + $0x238] sm:$0xff]
    %v208 = vld [vmem:[#allocation2 + $0x240] sm:$0xff]
    %v209 = vld [vmem:[#allocation2 + $0x248] sm:$0xff]
    %v210 = vld [vmem:[#allocation2 + $0x250] sm:$0xff]
    %v211 = vld [vmem:[#allocation2 + $0x258] sm:$0xff]
    %v212 = vld [vmem:[#allocation2 + $0x260] sm:$0xff]
    %v213 = vld [vmem:[#allocation2 + $0x268] sm:$0xff]
    %v214 = vld [vmem:[#allocation2 + $0x270] sm:$0xff]
    %v215 = vld [vmem:[#allocation2 + $0x278] sm:$0xff]
    %v216 = vld [vmem:[#allocation2 + $0x280] sm:$0xff]
    %v217 = vld [vmem:[#allocation2 + $0x288] sm:$0xff]
    %v218 = vld [vmem:[#allocation2 + $0x290] sm:$0xff]
    %v219 = vld [vmem:[#allocation2 + $0x298] sm:$0xff]
    %v220 = vld [vmem:[#allocation2 + $0x2a0] sm:$0xff]
    %v221 = vld [vmem:[#allocation2 + $0x2a8] sm:$0xff]
    %v222 = vld [vmem:[#allocation2 + $0x2b0] sm:$0xff]
    %v223 = vld [vmem:[#allocation2 + $0x2b8] sm:$0xff]
    %v224 = vld [vmem:[#allocation2 + $0x2c0] sm:$0xff]
    %v225 = vld [vmem:[#allocation2 + $0x2c8] sm:$0xff]
    %v226 = vld [vmem:[#allocation2 + $0x2d0] sm:$0xff]
    %v227 = vld [vmem:[#allocation2 + $0x2d8] sm:$0xff]
    %v228 = vld [vmem:[#allocation2 + $0x2e0] sm:$0xff]
    %v229 = vld [vmem:[#allocation2 + $0x2e8] sm:$0xff]
    %v230 = vld [vmem:[#allocation2 + $0x2f0] sm:$0xff]
    %v231 = vld [vmem:[#allocation2 + $0x2f8] sm:$0xff]
    %v232 = vld [vmem:[#allocation2 + $0x300] sm:$0xff]
    %v233 = vld [vmem:[#allocation2 + $0x308] sm:$0xff]
    %v234 = vld [vmem:[#allocation2 + $0x310] sm:$0xff]
    %v235 = vld [vmem:[#allocation2 + $0x318] sm:$0xff]
    %v236 = vld [vmem:[#allocation2 + $0x320] sm:$0xff]
    %v237 = vld [vmem:[#allocation2 + $0x328] sm:$0xff]
    %v238 = vld [vmem:[#allocation2 + $0x330] sm:$0xff]
    %v239 = vld [vmem:[#allocation2 + $0x338] sm:$0xff]
    %v240 = vld [vmem:[#allocation2 + $0x340] sm:$0xff]
    %v241 = vld [vmem:[#allocation2 + $0x348] sm:$0xff]
    %v242 = vld [vmem:[#allocation2 + $0x350] sm:$0xff]
    %v243 = vld [vmem:[#allocation2 + $0x358] sm:$0xff]
    %v244 = vld [vmem:[#allocation2 + $0x360] sm:$0xff]
    %v245 = vld [vmem:[#allocation2 + $0x368] sm:$0xff]
    %v246 = vld [vmem:[#allocation2 + $0x370] sm:$0xff]
    %v247 = vld [vmem:[#allocation2 + $0x378] sm:$0xff]
    %v248 = vld [vmem:[#allocation2 + $0x380] sm:$0xff]
    %v249 = vld [vmem:[#allocation2 + $0x388] sm:$0xff]
    %v250 = vld [vmem:[#allocation2 + $0x390] sm:$0xff]
    %v251 = vld [vmem:[#allocation2 + $0x398] sm:$0xff]
    %v252 = vld [vmem:[#allocation2 + $0x3a0] sm:$0xff]
    %v253 = vld [vmem:[#allocation2 + $0x3a8] sm:$0xff]
    %v254 = vld [vmem:[#allocation2 + $0x3b0] sm:$0xff]
    %v255 = vld [vmem:[#allocation2 + $0x3b8] sm:$0xff]
    %v256 = vld [vmem:[#allocation2 + $0x3c0] sm:$0xff]
    %v257 = vld [vmem:[#allocation2 + $0x3c8] sm:$0xff]
    %v258 = vld [vmem:[#allocation2 + $0x3d0] sm:$0xff]
    %v259 = vld [vmem:[#allocation2 + $0x3d8] sm:$0xff]
    %v260 = vld [vmem:[#allocation2 + $0x3e0] sm:$0xff]
    %v261 = vld [vmem:[#allocation2 + $0x3e8] sm:$0xff]
    %v262 = vld [vmem:[#allocation2 + $0x3f0] sm:$0xff]
    %v263 = vld [vmem:[#allocation2 + $0x3f8] sm:$0xff]
    %v264 = vld [vmem:[%s2] sm:$0xff]
    %v266 = vlaneseq
    %v267 = vshrl.u32 %v266, 7
    %v268 = vsub.s32 0, %v267
    %v269 = vrot.slane %v264, %v268
    %v270 = vlaneseq
    %v271 = vshrl.u32 %v270, 7
    %v272 = vsub.s32 1, %v271
    %v273 = vrot.slane %v264, %v272
    %v274 = vlaneseq
    %v275 = vshrl.u32 %v274, 7
    %v276 = vsub.s32 2, %v275
    %v277 = vrot.slane %v264, %v276
    %v278 = vlaneseq
    %v279 = vshrl.u32 %v278, 7
    %v280 = vsub.s32 3, %v279
    %v281 = vrot.slane %v264, %v280
    %v282 = vlaneseq
    %v283 = vshrl.u32 %v282, 7
    %v284 = vsub.s32 4, %v283
    %v285 = vrot.slane %v264, %v284
    %v286 = vlaneseq
    %v287 = vshrl.u32 %v286, 7
    %v288 = vsub.s32 5, %v287
    %v289 = vrot.slane %v264, %v288
    %v290 = vlaneseq
    %v291 = vshrl.u32 %v290, 7
    %v292 = vsub.s32 6, %v291
    %v293 = vrot.slane %v264, %v292
    %v294 = vlaneseq
    %v295 = vshrl.u32 %v294, 7
    %v296 = vsub.s32 7, %v295
    %v297 = vrot.slane %v264, %v296
    %v434 = vunpack.c.l.b16 %v136
    %v435 = vunpack.c.h.b16 %v136
    %v436 = vunpack.c.l.b16 %v137
    %v437 = vunpack.c.h.b16 %v137
    %v438 = vunpack.c.l.b16 %v138
    %v439 = vunpack.c.h.b16 %v138
    %v440 = vunpack.c.l.b16 %v139
    %v441 = vunpack.c.h.b16 %v139
    %v442 = vunpack.c.l.b16 %v140
    %v443 = vunpack.c.h.b16 %v140
    %v444 = vunpack.c.l.b16 %v141
    %v445 = vunpack.c.h.b16 %v141
    %v446 = vunpack.c.l.b16 %v142
    %v447 = vunpack.c.h.b16 %v142
    %v448 = vunpack.c.l.b16 %v143
    %v449 = vunpack.c.h.b16 %v143
    %v450 = vunpack.c.l.b16 %v144
    %v451 = vunpack.c.h.b16 %v144
    %v452 = vunpack.c.l.b16 %v145
    %v453 = vunpack.c.h.b16 %v145
    %v454 = vunpack.c.l.b16 %v146
    %v455 = vunpack.c.h.b16 %v146
    %v456 = vunpack.c.l.b16 %v147
    %v457 = vunpack.c.h.b16 %v147
    %v458 = vunpack.c.l.b16 %v148
    %v459 = vunpack.c.h.b16 %v148
    %v460 = vunpack.c.l.b16 %v149
    %v461 = vunpack.c.h.b16 %v149
    %v462 = vunpack.c.l.b16 %v150
    %v463 = vunpack.c.h.b16 %v150
    %v464 = vunpack.c.l.b16 %v151
    %v465 = vunpack.c.h.b16 %v151
    %v466 = vunpack.c.l.b16 %v152
    %v467 = vunpack.c.h.b16 %v152
    %v468 = vunpack.c.l.b16 %v153
    %v469 = vunpack.c.h.b16 %v153
    %v470 = vunpack.c.l.b16 %v154
    %v471 = vunpack.c.h.b16 %v154
    %v472 = vunpack.c.l.b16 %v155
    %v473 = vunpack.c.h.b16 %v155
    %v474 = vunpack.c.l.b16 %v156
    %v475 = vunpack.c.h.b16 %v156
    %v476 = vunpack.c.l.b16 %v157
    %v477 = vunpack.c.h.b16 %v157
    %v478 = vunpack.c.l.b16 %v158
    %v479 = vunpack.c.h.b16 %v158
    %v480 = vunpack.c.l.b16 %v159
    %v481 = vunpack.c.h.b16 %v159
    %v482 = vunpack.c.l.b16 %v160
    %v483 = vunpack.c.h.b16 %v160
    %v484 = vunpack.c.l.b16 %v161
    %v485 = vunpack.c.h.b16 %v161
    %v486 = vunpack.c.l.b16 %v162
    %v487 = vunpack.c.h.b16 %v162
    %v488 = vunpack.c.l.b16 %v163
    %v489 = vunpack.c.h.b16 %v163
    %v490 = vunpack.c.l.b16 %v164
    %v491 = vunpack.c.h.b16 %v164
    %v492 = vunpack.c.l.b16 %v165
    %v493 = vunpack.c.h.b16 %v165
    %v494 = vunpack.c.l.b16 %v166
    %v495 = vunpack.c.h.b16 %v166
    %v496 = vunpack.c.l.b16 %v167
    %v497 = vunpack.c.h.b16 %v167
    %v498 = vunpack.c.l.b16 %v168
    %v499 = vunpack.c.h.b16 %v168
    %v500 = vunpack.c.l.b16 %v169
    %v501 = vunpack.c.h.b16 %v169
    %v502 = vunpack.c.l.b16 %v170
    %v503 = vunpack.c.h.b16 %v170
    %v504 = vunpack.c.l.b16 %v171
    %v505 = vunpack.c.h.b16 %v171
    %v506 = vunpack.c.l.b16 %v172
    %v507 = vunpack.c.h.b16 %v172
    %v508 = vunpack.c.l.b16 %v173
    %v509 = vunpack.c.h.b16 %v173
    %v510 = vunpack.c.l.b16 %v174
    %v511 = vunpack.c.h.b16 %v174
    %v512 = vunpack.c.l.b16 %v175
    %v513 = vunpack.c.h.b16 %v175
    %v514 = vunpack.c.l.b16 %v176
    %v515 = vunpack.c.h.b16 %v176
    %v516 = vunpack.c.l.b16 %v177
    %v517 = vunpack.c.h.b16 %v177
    %v518 = vunpack.c.l.b16 %v178
    %v519 = vunpack.c.h.b16 %v178
    %v520 = vunpack.c.l.b16 %v179
    %v521 = vunpack.c.h.b16 %v179
    %v522 = vunpack.c.l.b16 %v180
    %v523 = vunpack.c.h.b16 %v180
    %v524 = vunpack.c.l.b16 %v181
    %v525 = vunpack.c.h.b16 %v181
    %v526 = vunpack.c.l.b16 %v182
    %v527 = vunpack.c.h.b16 %v182
    %v528 = vunpack.c.l.b16 %v183
    %v529 = vunpack.c.h.b16 %v183
    %v530 = vunpack.c.l.b16 %v184
    %v531 = vunpack.c.h.b16 %v184
    %v532 = vunpack.c.l.b16 %v185
    %v533 = vunpack.c.h.b16 %v185
    %v534 = vunpack.c.l.b16 %v186
    %v535 = vunpack.c.h.b16 %v186
    %v536 = vunpack.c.l.b16 %v187
    %v537 = vunpack.c.h.b16 %v187
    %v538 = vunpack.c.l.b16 %v188
    %v539 = vunpack.c.h.b16 %v188
    %v540 = vunpack.c.l.b16 %v189
    %v541 = vunpack.c.h.b16 %v189
    %v542 = vunpack.c.l.b16 %v190
    %v543 = vunpack.c.h.b16 %v190
    %v544 = vunpack.c.l.b16 %v191
    %v545 = vunpack.c.h.b16 %v191
    %v546 = vunpack.c.l.b16 %v192
    %v547 = vunpack.c.h.b16 %v192
    %v548 = vunpack.c.l.b16 %v193
    %v549 = vunpack.c.h.b16 %v193
    %v550 = vunpack.c.l.b16 %v194
    %v551 = vunpack.c.h.b16 %v194
    %v552 = vunpack.c.l.b16 %v195
    %v553 = vunpack.c.h.b16 %v195
    %v554 = vunpack.c.l.b16 %v196
    %v555 = vunpack.c.h.b16 %v196
    %v556 = vunpack.c.l.b16 %v197
    %v557 = vunpack.c.h.b16 %v197
    %v558 = vunpack.c.l.b16 %v198
    %v559 = vunpack.c.h.b16 %v198
    %v560 = vunpack.c.l.b16 %v199
    %v561 = vunpack.c.h.b16 %v199
    %v562 = vunpack.c.l.b16 %v200
    %v563 = vunpack.c.h.b16 %v200
    %v564 = vunpack.c.l.b16 %v201
    %v565 = vunpack.c.h.b16 %v201
    %v566 = vunpack.c.l.b16 %v202
    %v567 = vunpack.c.h.b16 %v202
    %v568 = vunpack.c.l.b16 %v203
    %v569 = vunpack.c.h.b16 %v203
    %v570 = vunpack.c.l.b16 %v204
    %v571 = vunpack.c.h.b16 %v204
    %v572 = vunpack.c.l.b16 %v205
    %v573 = vunpack.c.h.b16 %v205
    %v574 = vunpack.c.l.b16 %v206
    %v575 = vunpack.c.h.b16 %v206
    %v576 = vunpack.c.l.b16 %v207
    %v577 = vunpack.c.h.b16 %v207
    %v578 = vunpack.c.l.b16 %v208
    %v579 = vunpack.c.h.b16 %v208
    %v580 = vunpack.c.l.b16 %v209
    %v581 = vunpack.c.h.b16 %v209
    %v582 = vunpack.c.l.b16 %v210
    %v583 = vunpack.c.h.b16 %v210
    %v584 = vunpack.c.l.b16 %v211
    %v585 = vunpack.c.h.b16 %v211
    %v586 = vunpack.c.l.b16 %v212
    %v587 = vunpack.c.h.b16 %v212
    %v588 = vunpack.c.l.b16 %v213
    %v589 = vunpack.c.h.b16 %v213
    %v590 = vunpack.c.l.b16 %v214
    %v591 = vunpack.c.h.b16 %v214
    %v592 = vunpack.c.l.b16 %v215
    %v593 = vunpack.c.h.b16 %v215
    %v594 = vunpack.c.l.b16 %v216
    %v595 = vunpack.c.h.b16 %v216
    %v596 = vunpack.c.l.b16 %v217
    %v597 = vunpack.c.h.b16 %v217
    %v598 = vunpack.c.l.b16 %v218
    %v599 = vunpack.c.h.b16 %v218
    %v600 = vunpack.c.l.b16 %v219
    %v601 = vunpack.c.h.b16 %v219
    %v602 = vunpack.c.l.b16 %v220
    %v603 = vunpack.c.h.b16 %v220
    %v604 = vunpack.c.l.b16 %v221
    %v605 = vunpack.c.h.b16 %v221
    %v606 = vunpack.c.l.b16 %v222
    %v607 = vunpack.c.h.b16 %v222
    %v608 = vunpack.c.l.b16 %v223
    %v609 = vunpack.c.h.b16 %v223
    %v610 = vunpack.c.l.b16 %v224
    %v611 = vunpack.c.h.b16 %v224
    %v612 = vunpack.c.l.b16 %v225
    %v613 = vunpack.c.h.b16 %v225
    %v614 = vunpack.c.l.b16 %v226
    %v615 = vunpack.c.h.b16 %v226
    %v616 = vunpack.c.l.b16 %v227
    %v617 = vunpack.c.h.b16 %v227
    %v618 = vunpack.c.l.b16 %v228
    %v619 = vunpack.c.h.b16 %v228
    %v620 = vunpack.c.l.b16 %v229
    %v621 = vunpack.c.h.b16 %v229
    %v622 = vunpack.c.l.b16 %v230
    %v623 = vunpack.c.h.b16 %v230
    %v624 = vunpack.c.l.b16 %v231
    %v625 = vunpack.c.h.b16 %v231
    %v626 = vunpack.c.l.b16 %v232
    %v627 = vunpack.c.h.b16 %v232
    %v628 = vunpack.c.l.b16 %v233
    %v629 = vunpack.c.h.b16 %v233
    %v630 = vunpack.c.l.b16 %v234
    %v631 = vunpack.c.h.b16 %v234
    %v632 = vunpack.c.l.b16 %v235
    %v633 = vunpack.c.h.b16 %v235
    %v634 = vunpack.c.l.b16 %v236
    %v635 = vunpack.c.h.b16 %v236
    %v636 = vunpack.c.l.b16 %v237
    %v637 = vunpack.c.h.b16 %v237
    %v638 = vunpack.c.l.b16 %v238
    %v639 = vunpack.c.h.b16 %v238
    %v640 = vunpack.c.l.b16 %v239
    %v641 = vunpack.c.h.b16 %v239
    %v642 = vunpack.c.l.b16 %v240
    %v643 = vunpack.c.h.b16 %v240
    %v644 = vunpack.c.l.b16 %v241
    %v645 = vunpack.c.h.b16 %v241
    %v646 = vunpack.c.l.b16 %v242
    %v647 = vunpack.c.h.b16 %v242
    %v648 = vunpack.c.l.b16 %v243
    %v649 = vunpack.c.h.b16 %v243
    %v650 = vunpack.c.l.b16 %v244
    %v651 = vunpack.c.h.b16 %v244
    %v652 = vunpack.c.l.b16 %v245
    %v653 = vunpack.c.h.b16 %v245
    %v654 = vunpack.c.l.b16 %v246
    %v655 = vunpack.c.h.b16 %v246
    %v656 = vunpack.c.l.b16 %v247
    %v657 = vunpack.c.h.b16 %v247
    %v658 = vunpack.c.l.b16 %v248
    %v659 = vunpack.c.h.b16 %v248
    %v660 = vunpack.c.l.b16 %v249
    %v661 = vunpack.c.h.b16 %v249
    %v662 = vunpack.c.l.b16 %v250
    %v663 = vunpack.c.h.b16 %v250
    %v664 = vunpack.c.l.b16 %v251
    %v665 = vunpack.c.h.b16 %v251
    %v666 = vunpack.c.l.b16 %v252
    %v667 = vunpack.c.h.b16 %v252
    %v668 = vunpack.c.l.b16 %v253
    %v669 = vunpack.c.h.b16 %v253
    %v670 = vunpack.c.l.b16 %v254
    %v671 = vunpack.c.h.b16 %v254
    %v672 = vunpack.c.l.b16 %v255
    %v673 = vunpack.c.h.b16 %v255
    %v674 = vunpack.c.l.b16 %v256
    %v675 = vunpack.c.h.b16 %v256
    %v676 = vunpack.c.l.b16 %v257
    %v677 = vunpack.c.h.b16 %v257
    %v678 = vunpack.c.l.b16 %v258
    %v679 = vunpack.c.h.b16 %v258
    %v680 = vunpack.c.l.b16 %v259
    %v681 = vunpack.c.h.b16 %v259
    %v682 = vunpack.c.l.b16 %v260
    %v683 = vunpack.c.h.b16 %v260
    %v684 = vunpack.c.l.b16 %v261
    %v685 = vunpack.c.h.b16 %v261
    %v686 = vunpack.c.l.b16 %v262
    %v687 = vunpack.c.h.b16 %v262
    %v688 = vunpack.c.l.b16 %v263
    %v689 = vunpack.c.h.b16 %v263
    %v690 = vpack.c.b16 %v442, %v434
    %v691 = vpack.c.b16 %v443, %v435
    %v692 = vpack.c.b16 %v444, %v436
    %v693 = vpack.c.b16 %v445, %v437
    %v694 = vpack.c.b16 %v446, %v438
    %v695 = vpack.c.b16 %v447, %v439
    %v696 = vpack.c.b16 %v448, %v440
    %v697 = vpack.c.b16 %v449, %v441
    %v698 = vpack.c.b16 %v458, %v450
    %v699 = vpack.c.b16 %v459, %v451
    %v700 = vpack.c.b16 %v460, %v452
    %v701 = vpack.c.b16 %v461, %v453
    %v702 = vpack.c.b16 %v462, %v454
    %v703 = vpack.c.b16 %v463, %v455
    %v704 = vpack.c.b16 %v464, %v456
    %v705 = vpack.c.b16 %v465, %v457
    %v706 = vpack.c.b16 %v474, %v466
    %v707 = vpack.c.b16 %v475, %v467
    %v708 = vpack.c.b16 %v476, %v468
    %v709 = vpack.c.b16 %v477, %v469
    %v710 = vpack.c.b16 %v478, %v470
    %v711 = vpack.c.b16 %v479, %v471
    %v712 = vpack.c.b16 %v480, %v472
    %v713 = vpack.c.b16 %v481, %v473
    %v714 = vpack.c.b16 %v490, %v482
    %v715 = vpack.c.b16 %v491, %v483
    %v716 = vpack.c.b16 %v492, %v484
    %v717 = vpack.c.b16 %v493, %v485
    %v718 = vpack.c.b16 %v494, %v486
    %v719 = vpack.c.b16 %v495, %v487
    %v720 = vpack.c.b16 %v496, %v488
    %v721 = vpack.c.b16 %v497, %v489
    %v722 = vpack.c.b16 %v506, %v498
    %v723 = vpack.c.b16 %v507, %v499
    %v724 = vpack.c.b16 %v508, %v500
    %v725 = vpack.c.b16 %v509, %v501
    %v726 = vpack.c.b16 %v510, %v502
    %v727 = vpack.c.b16 %v511, %v503
    %v728 = vpack.c.b16 %v512, %v504
    %v729 = vpack.c.b16 %v513, %v505
    %v730 = vpack.c.b16 %v522, %v514
    %v731 = vpack.c.b16 %v523, %v515
    %v732 = vpack.c.b16 %v524, %v516
    %v733 = vpack.c.b16 %v525, %v517
    %v734 = vpack.c.b16 %v526, %v518
    %v735 = vpack.c.b16 %v527, %v519
    %v736 = vpack.c.b16 %v528, %v520
    %v737 = vpack.c.b16 %v529, %v521
    %v738 = vpack.c.b16 %v538, %v530
    %v739 = vpack.c.b16 %v539, %v531
    %v740 = vpack.c.b16 %v540, %v532
    %v741 = vpack.c.b16 %v541, %v533
    %v742 = vpack.c.b16 %v542, %v534
    %v743 = vpack.c.b16 %v543, %v535
    %v744 = vpack.c.b16 %v544, %v536
    %v745 = vpack.c.b16 %v545, %v537
    %v746 = vpack.c.b16 %v554, %v546
    %v747 = vpack.c.b16 %v555, %v547
    %v748 = vpack.c.b16 %v556, %v548
    %v749 = vpack.c.b16 %v557, %v549
    %v750 = vpack.c.b16 %v558, %v550
    %v751 = vpack.c.b16 %v559, %v551
    %v752 = vpack.c.b16 %v560, %v552
    %v753 = vpack.c.b16 %v561, %v553
    %v754 = vpack.c.b16 %v570, %v562
    %v755 = vpack.c.b16 %v571, %v563
    %v756 = vpack.c.b16 %v572, %v564
    %v757 = vpack.c.b16 %v573, %v565
    %v758 = vpack.c.b16 %v574, %v566
    %v759 = vpack.c.b16 %v575, %v567
    %v760 = vpack.c.b16 %v576, %v568
    %v761 = vpack.c.b16 %v577, %v569
    %v762 = vpack.c.b16 %v586, %v578
    %v763 = vpack.c.b16 %v587, %v579
    %v764 = vpack.c.b16 %v588, %v580
    %v765 = vpack.c.b16 %v589, %v581
    %v766 = vpack.c.b16 %v590, %v582
    %v767 = vpack.c.b16 %v591, %v583
    %v768 = vpack.c.b16 %v592, %v584
    %v769 = vpack.c.b16 %v593, %v585
    %v770 = vpack.c.b16 %v602, %v594
    %v771 = vpack.c.b16 %v603, %v595
    %v772 = vpack.c.b16 %v604, %v596
    %v773 = vpack.c.b16 %v605, %v597
    %v774 = vpack.c.b16 %v606, %v598
    %v775 = vpack.c.b16 %v607, %v599
    %v776 = vpack.c.b16 %v608, %v600
    %v777 = vpack.c.b16 %v609, %v601
    %v778 = vpack.c.b16 %v618, %v610
    %v779 = vpack.c.b16 %v619, %v611
    %v780 = vpack.c.b16 %v620, %v612
    %v781 = vpack.c.b16 %v621, %v613
    %v782 = vpack.c.b16 %v622, %v614
    %v783 = vpack.c.b16 %v623, %v615
    %v784 = vpack.c.b16 %v624, %v616
    %v785 = vpack.c.b16 %v625, %v617
    %v786 = vpack.c.b16 %v634, %v626
    %v787 = vpack.c.b16 %v635, %v627
    %v788 = vpack.c.b16 %v636, %v628
    %v789 = vpack.c.b16 %v637, %v629
    %v790 = vpack.c.b16 %v638, %v630
    %v791 = vpack.c.b16 %v639, %v631
    %v792 = vpack.c.b16 %v640, %v632
    %v793 = vpack.c.b16 %v641, %v633
    %v794 = vpack.c.b16 %v650, %v642
    %v795 = vpack.c.b16 %v651, %v643
    %v796 = vpack.c.b16 %v652, %v644
    %v797 = vpack.c.b16 %v653, %v645
    %v798 = vpack.c.b16 %v654, %v646
    %v799 = vpack.c.b16 %v655, %v647
    %v800 = vpack.c.b16 %v656, %v648
    %v801 = vpack.c.b16 %v657, %v649
    %v802 = vpack.c.b16 %v666, %v658
    %v803 = vpack.c.b16 %v667, %v659
    %v804 = vpack.c.b16 %v668, %v660
    %v805 = vpack.c.b16 %v669, %v661
    %v806 = vpack.c.b16 %v670, %v662
    %v807 = vpack.c.b16 %v671, %v663
    %v808 = vpack.c.b16 %v672, %v664
    %v809 = vpack.c.b16 %v673, %v665
    %v810 = vpack.c.b16 %v682, %v674
    %v811 = vpack.c.b16 %v683, %v675
    %v812 = vpack.c.b16 %v684, %v676
    %v813 = vpack.c.b16 %v685, %v677
    %v814 = vpack.c.b16 %v686, %v678
    %v815 = vpack.c.b16 %v687, %v679
    %v816 = vpack.c.b16 %v688, %v680
    %v817 = vpack.c.b16 %v689, %v681
    %946 = vmatprep.subr.bf16.mxu0 %v691
    %947 = vmatpush1.bf16.msra.mxu0 %v690
    %948 = vmatprep.subr.bf16.mxu0 %v699
    %949 = vmatpush1.bf16.msra.mxu0 %v698
    %950 = vmatprep.subr.bf16.mxu0 %v707
    %951 = vmatpush1.bf16.msra.mxu0 %v706
    %952 = vmatprep.subr.bf16.mxu0 %v715
    %953 = vmatpush1.bf16.msra.mxu0 %v714
    %954 = vmatprep.subr.bf16.mxu0 %v723
    %955 = vmatpush1.bf16.msra.mxu0 %v722
    %956 = vmatprep.subr.bf16.mxu0 %v731
    %957 = vmatpush1.bf16.msra.mxu0 %v730
    %958 = vmatprep.subr.bf16.mxu0 %v739
    %959 = vmatpush1.bf16.msra.mxu0 %v738
    %960 = vmatprep.subr.bf16.mxu0 %v747
    %961 = vmatpush1.bf16.msra.mxu0 %v746
    %962 = vmatprep.subr.bf16.mxu0 %v755
    %963 = vmatpush1.bf16.msra.mxu0 %v754
    %964 = vmatprep.subr.bf16.mxu0 %v763
    %965 = vmatpush1.bf16.msra.mxu0 %v762
    %966 = vmatprep.subr.bf16.mxu0 %v771
    %967 = vmatpush1.bf16.msra.mxu0 %v770
    %968 = vmatprep.subr.bf16.mxu0 %v779
    %969 = vmatpush1.bf16.msra.mxu0 %v778
    %970 = vmatprep.subr.bf16.mxu0 %v787
    %971 = vmatpush1.bf16.msra.mxu0 %v786
    %972 = vmatprep.subr.bf16.mxu0 %v795
    %973 = vmatpush1.bf16.msra.mxu0 %v794
    %974 = vmatprep.subr.bf16.mxu0 %v803
    %975 = vmatpush1.bf16.msra.mxu0 %v802
    %976 = vmatprep.subr.bf16.mxu0 %v811
    %977 = vmatpush1.bf16.msra.mxu0 %v810
    %978 = vmatprep.mubr.bf16.mxu0 %v135
    %979 = vmatmul.mubr.bf16.gmra.mrb[0].mxu0 %v134
    %v980 = vpop.f32.mrb[0].mxu0
    %v981 = vadd.f32 %v269, %v980
    %v982 = vpop.f32.mrb[0].mxu0
    %v983 = vadd.f32 %v273, %v982
    %v984 = vpop.f32.mrb[0].mxu0
    %v985 = vpop.f32.mrb[0].mxu0
    %986 = vdwg.mxu0
    %987 = vmatprep.subr.bf16.mxu0 %v693
    %988 = vmatpush1.bf16.msra.mxu0 %v692
    %989 = vmatprep.subr.bf16.mxu0 %v701
    %990 = vmatpush1.bf16.msra.mxu0 %v700
    %991 = vmatprep.subr.bf16.mxu0 %v709
    %992 = vmatpush1.bf16.msra.mxu0 %v708
    %993 = vmatprep.subr.bf16.mxu0 %v717
    %994 = vmatpush1.bf16.msra.mxu0 %v716
    %995 = vmatprep.subr.bf16.mxu0 %v725
    %996 = vmatpush1.bf16.msra.mxu0 %v724
    %997 = vmatprep.subr.bf16.mxu0 %v733
    %998 = vmatpush1.bf16.msra.mxu0 %v732
    %999 = vmatprep.subr.bf16.mxu0 %v741
    %1000 = vmatpush1.bf16.msra.mxu0 %v740
    %1001 = vmatprep.subr.bf16.mxu0 %v749
    %1002 = vmatpush1.bf16.msra.mxu0 %v748
    %1003 = vmatprep.subr.bf16.mxu0 %v757
    %1004 = vmatpush1.bf16.msra.mxu0 %v756
    %1005 = vmatprep.subr.bf16.mxu0 %v765
    %1006 = vmatpush1.bf16.msra.mxu0 %v764
    %1007 = vmatprep.subr.bf16.mxu0 %v773
    %1008 = vmatpush1.bf16.msra.mxu0 %v772
    %1009 = vmatprep.subr.bf16.mxu0 %v781
    %1010 = vmatpush1.bf16.msra.mxu0 %v780
    %1011 = vmatprep.subr.bf16.mxu0 %v789
    %1012 = vmatpush1.bf16.msra.mxu0 %v788
    %1013 = vmatprep.subr.bf16.mxu0 %v797
    %1014 = vmatpush1.bf16.msra.mxu0 %v796
    %1015 = vmatprep.subr.bf16.mxu0 %v805
    %1016 = vmatpush1.bf16.msra.mxu0 %v804
    %1017 = vmatprep.subr.bf16.mxu0 %v813
    %1018 = vmatpush1.bf16.msra.mxu0 %v812
    %1019 = vmatprep.mubr.bf16.mxu0 %v135
    %1020 = vmatmul.mubr.bf16.gmra.mrb[0].mxu0 %v134
    %v1021 = vpop.f32.mrb[0].mxu0
    %v1022 = vadd.f32 %v277, %v1021
    %v1023 = vpop.f32.mrb[0].mxu0
    %v1024 = vadd.f32 %v281, %v1023
    %v1025 = vpop.f32.mrb[0].mxu0
    %v1026 = vpop.f32.mrb[0].mxu0
    %1027 = vdwg.mxu0
    %1028 = vmatprep.subr.bf16.mxu0 %v695
    %1029 = vmatpush1.bf16.msra.mxu0 %v694
    %1030 = vmatprep.subr.bf16.mxu0 %v703
    %1031 = vmatpush1.bf16.msra.mxu0 %v702
    %1032 = vmatprep.subr.bf16.mxu0 %v711
    %1033 = vmatpush1.bf16.msra.mxu0 %v710
    %1034 = vmatprep.subr.bf16.mxu0 %v719
    %1035 = vmatpush1.bf16.msra.mxu0 %v718
    %1036 = vmatprep.subr.bf16.mxu0 %v727
    %1037 = vmatpush1.bf16.msra.mxu0 %v726
    %1038 = vmatprep.subr.bf16.mxu0 %v735
    %1039 = vmatpush1.bf16.msra.mxu0 %v734
    %1040 = vmatprep.subr.bf16.mxu0 %v743
    %1041 = vmatpush1.bf16.msra.mxu0 %v742
    %1042 = vmatprep.subr.bf16.mxu0 %v751
    %1043 = vmatpush1.bf16.msra.mxu0 %v750
    %1044 = vmatprep.subr.bf16.mxu0 %v759
    %1045 = vmatpush1.bf16.msra.mxu0 %v758
    %1046 = vmatprep.subr.bf16.mxu0 %v767
    %1047 = vmatpush1.bf16.msra.mxu0 %v766
    %1048 = vmatprep.subr.bf16.mxu0 %v775
    %1049 = vmatpush1.bf16.msra.mxu0 %v774
    %1050 = vmatprep.subr.bf16.mxu0 %v783
    %1051 = vmatpush1.bf16.msra.mxu0 %v782
    %1052 = vmatprep.subr.bf16.mxu0 %v791
    %1053 = vmatpush1.bf16.msra.mxu0 %v790
    %1054 = vmatprep.subr.bf16.mxu0 %v799
    %1055 = vmatpush1.bf16.msra.mxu0 %v798
    %1056 = vmatprep.subr.bf16.mxu0 %v807
    %1057 = vmatpush1.bf16.msra.mxu0 %v806
    %1058 = vmatprep.subr.bf16.mxu0 %v815
    %1059 = vmatpush1.bf16.msra.mxu0 %v814
    %1060 = vmatprep.mubr.bf16.mxu0 %v135
    %1061 = vmatmul.mubr.bf16.gmra.mrb[0].mxu0 %v134
    %v1062 = vpop.f32.mrb[0].mxu0
    %v1063 = vadd.f32 %v285, %v1062
    %v1064 = vpop.f32.mrb[0].mxu0
    %v1065 = vadd.f32 %v289, %v1064
    %v1066 = vpop.f32.mrb[0].mxu0
    %v1067 = vpop.f32.mrb[0].mxu0
    %1068 = vdwg.mxu0
    %1069 = vmatprep.subr.bf16.mxu0 %v697
    %1070 = vmatpush1.bf16.msra.mxu0 %v696
    %1071 = vmatprep.subr.bf16.mxu0 %v705
    %1072 = vmatpush1.bf16.msra.mxu0 %v704
    %1073 = vmatprep.subr.bf16.mxu0 %v713
    %1074 = vmatpush1.bf16.msra.mxu0 %v712
    %1075 = vmatprep.subr.bf16.mxu0 %v721
    %1076 = vmatpush1.bf16.msra.mxu0 %v720
    %1077 = vmatprep.subr.bf16.mxu0 %v729
    %1078 = vmatpush1.bf16.msra.mxu0 %v728
    %1079 = vmatprep.subr.bf16.mxu0 %v737
    %1080 = vmatpush1.bf16.msra.mxu0 %v736
    %1081 = vmatprep.subr.bf16.mxu0 %v745
    %1082 = vmatpush1.bf16.msra.mxu0 %v744
    %1083 = vmatprep.subr.bf16.mxu0 %v753
    %1084 = vmatpush1.bf16.msra.mxu0 %v752
    %1085 = vmatprep.subr.bf16.mxu0 %v761
    %1086 = vmatpush1.bf16.msra.mxu0 %v760
    %1087 = vmatprep.subr.bf16.mxu0 %v769
    %1088 = vmatpush1.bf16.msra.mxu0 %v768
    %1089 = vmatprep.subr.bf16.mxu0 %v777
    %1090 = vmatpush1.bf16.msra.mxu0 %v776
    %1091 = vmatprep.subr.bf16.mxu0 %v785
    %1092 = vmatpush1.bf16.msra.mxu0 %v784
    %1093 = vmatprep.subr.bf16.mxu0 %v793
    %1094 = vmatpush1.bf16.msra.mxu0 %v792
    %1095 = vmatprep.subr.bf16.mxu0 %v801
    %1096 = vmatpush1.bf16.msra.mxu0 %v800
    %1097 = vmatprep.subr.bf16.mxu0 %v809
    %1098 = vmatpush1.bf16.msra.mxu0 %v808
    %1099 = vmatprep.subr.bf16.mxu0 %v817
    %1100 = vmatpush1.bf16.msra.mxu0 %v816
    %1101 = vmatprep.mubr.bf16.mxu0 %v135
    %1102 = vmatmul.mubr.bf16.gmra.mrb[0].mxu0 %v134
    %v1103 = vpop.f32.mrb[0].mxu0
    %v1104 = vadd.f32 %v293, %v1103
    %v1105 = vpop.f32.mrb[0].mxu0
    %v1106 = vadd.f32 %v297, %v1105
    %v1107 = vpop.f32.mrb[0].mxu0
    %v1108 = vpop.f32.mrb[0].mxu0
    %1109 = vdwg.mxu0
    %v1110 = vmax.f32 %v981, 0.0
    %v1111 = vmax.f32 %v983, 0.0
    %v1112 = vmax.f32 %v1022, 0.0
    %v1113 = vmax.f32 %v1024, 0.0
    %v1114 = vmax.f32 %v1063, 0.0
    %v1115 = vmax.f32 %v1065, 0.0
    %v1116 = vmax.f32 %v1104, 0.0
    %v1117 = vmax.f32 %v1106, 0.0
    %v1118 = vpack.c.bf16 %v1110, %v1110
    %v1119 = vpack.c.bf16 %v1111, %v1111
    %v1120 = vpack.c.bf16 %v1112, %v1112
    %v1121 = vpack.c.bf16 %v1113, %v1113
    %v1122 = vpack.c.bf16 %v1114, %v1114
    %v1123 = vpack.c.bf16 %v1115, %v1115
    %v1124 = vpack.c.bf16 %v1116, %v1116
    %v1125 = vpack.c.bf16 %v1117, %v1117
    %v1126 = vld [vmem:[#allocation4] sm:$0xff]
    %v1127 = vld [vmem:[#allocation4 + $0x8] sm:$0xff]
    %v1128 = vld [vmem:[#allocation4 + $0x10] sm:$0xff]
    %v1129 = vld [vmem:[#allocation4 + $0x18] sm:$0xff]
    %v1130 = vld [vmem:[#allocation4 + $0x20] sm:$0xff]
    %v1131 = vld [vmem:[#allocation4 + $0x28] sm:$0xff]
    %v1132 = vld [vmem:[#allocation4 + $0x30] sm:$0xff]
    %v1133 = vld [vmem:[#allocation4 + $0x38] sm:$0xff]
    %v1134 = vld [vmem:[#allocation4 + $0x40] sm:$0xff]
    %v1135 = vld [vmem:[#allocation4 + $0x48] sm:$0xff]
    %v1136 = vld [vmem:[#allocation4 + $0x50] sm:$0xff]
    %v1137 = vld [vmem:[#allocation4 + $0x58] sm:$0xff]
    %v1138 = vld [vmem:[#allocation4 + $0x60] sm:$0xff]
    %v1139 = vld [vmem:[#allocation4 + $0x68] sm:$0xff]
    %v1140 = vld [vmem:[#allocation4 + $0x70] sm:$0xff]
    %v1141 = vld [vmem:[#allocation4 + $0x78] sm:$0xff]
    %v1142 = vld [vmem:[#allocation4 + $0x80] sm:$0xff]
    %v1143 = vld [vmem:[#allocation4 + $0x88] sm:$0xff]
    %v1144 = vld [vmem:[#allocation4 + $0x90] sm:$0xff]
    %v1145 = vld [vmem:[#allocation4 + $0x98] sm:$0xff]
    %v1146 = vld [vmem:[#allocation4 + $0xa0] sm:$0xff]
    %v1147 = vld [vmem:[#allocation4 + $0xa8] sm:$0xff]
    %v1148 = vld [vmem:[#allocation4 + $0xb0] sm:$0xff]
    %v1149 = vld [vmem:[#allocation4 + $0xb8] sm:$0xff]
    %v1150 = vld [vmem:[#allocation4 + $0xc0] sm:$0xff]
    %v1151 = vld [vmem:[#allocation4 + $0xc8] sm:$0xff]
    %v1152 = vld [vmem:[#allocation4 + $0xd0] sm:$0xff]
    %v1153 = vld [vmem:[#allocation4 + $0xd8] sm:$0xff]
    %v1154 = vld [vmem:[#allocation4 + $0xe0] sm:$0xff]
    %v1155 = vld [vmem:[#allocation4 + $0xe8] sm:$0xff]
    %v1156 = vld [vmem:[#allocation4 + $0xf0] sm:$0xff]
    %v1157 = vld [vmem:[#allocation4 + $0xf8] sm:$0xff]
    %v1158 = vld [vmem:[#allocation4 + $0x100] sm:$0xff]
    %v1159 = vld [vmem:[#allocation4 + $0x108] sm:$0xff]
    %v1160 = vld [vmem:[#allocation4 + $0x110] sm:$0xff]
    %v1161 = vld [vmem:[#allocation4 + $0x118] sm:$0xff]
    %v1162 = vld [vmem:[#allocation4 + $0x120] sm:$0xff]
    %v1163 = vld [vmem:[#allocation4 + $0x128] sm:$0xff]
    %v1164 = vld [vmem:[#allocation4 + $0x130] sm:$0xff]
    %v1165 = vld [vmem:[#allocation4 + $0x138] sm:$0xff]
    %v1166 = vld [vmem:[#allocation4 + $0x140] sm:$0xff]
    %v1167 = vld [vmem:[#allocation4 + $0x148] sm:$0xff]
    %v1168 = vld [vmem:[#allocation4 + $0x150] sm:$0xff]
    %v1169 = vld [vmem:[#allocation4 + $0x158] sm:$0xff]
    %v1170 = vld [vmem:[#allocation4 + $0x160] sm:$0xff]
    %v1171 = vld [vmem:[#allocation4 + $0x168] sm:$0xff]
    %v1172 = vld [vmem:[#allocation4 + $0x170] sm:$0xff]
    %v1173 = vld [vmem:[#allocation4 + $0x178] sm:$0xff]
    %v1174 = vld [vmem:[#allocation4 + $0x180] sm:$0xff]
    %v1175 = vld [vmem:[#allocation4 + $0x188] sm:$0xff]
    %v1176 = vld [vmem:[#allocation4 + $0x190] sm:$0xff]
    %v1177 = vld [vmem:[#allocation4 + $0x198] sm:$0xff]
    %v1178 = vld [vmem:[#allocation4 + $0x1a0] sm:$0xff]
    %v1179 = vld [vmem:[#allocation4 + $0x1a8] sm:$0xff]
    %v1180 = vld [vmem:[#allocation4 + $0x1b0] sm:$0xff]
    %v1181 = vld [vmem:[#allocation4 + $0x1b8] sm:$0xff]
    %v1182 = vld [vmem:[#allocation4 + $0x1c0] sm:$0xff]
    %v1183 = vld [vmem:[#allocation4 + $0x1c8] sm:$0xff]
    %v1184 = vld [vmem:[#allocation4 + $0x1d0] sm:$0xff]
    %v1185 = vld [vmem:[#allocation4 + $0x1d8] sm:$0xff]
    %v1186 = vld [vmem:[#allocation4 + $0x1e0] sm:$0xff]
    %v1187 = vld [vmem:[#allocation4 + $0x1e8] sm:$0xff]
    %v1188 = vld [vmem:[#allocation4 + $0x1f0] sm:$0xff]
    %v1189 = vld [vmem:[#allocation4 + $0x1f8] sm:$0xff]
    %v1190 = vld [vmem:[#allocation4 + $0x200] sm:$0xff]
    %v1191 = vld [vmem:[#allocation4 + $0x208] sm:$0xff]
    %v1192 = vld [vmem:[#allocation4 + $0x210] sm:$0xff]
    %v1193 = vld [vmem:[#allocation4 + $0x218] sm:$0xff]
    %v1194 = vld [vmem:[#allocation4 + $0x220] sm:$0xff]
    %v1195 = vld [vmem:[#allocation4 + $0x228] sm:$0xff]
    %v1196 = vld [vmem:[#allocation4 + $0x230] sm:$0xff]
    %v1197 = vld [vmem:[#allocation4 + $0x238] sm:$0xff]
    %v1198 = vld [vmem:[#allocation4 + $0x240] sm:$0xff]
    %v1199 = vld [vmem:[#allocation4 + $0x248] sm:$0xff]
    %v1200 = vld [vmem:[#allocation4 + $0x250] sm:$0xff]
    %v1201 = vld [vmem:[#allocation4 + $0x258] sm:$0xff]
    %v1202 = vld [vmem:[#allocation4 + $0x260] sm:$0xff]
    %v1203 = vld [vmem:[#allocation4 + $0x268] sm:$0xff]
    %v1204 = vld [vmem:[#allocation4 + $0x270] sm:$0xff]
    %v1205 = vld [vmem:[#allocation4 + $0x278] sm:$0xff]
    %v1206 = vld [vmem:[#allocation4 + $0x280] sm:$0xff]
    %v1207 = vld [vmem:[#allocation4 + $0x288] sm:$0xff]
    %v1208 = vld [vmem:[#allocation4 + $0x290] sm:$0xff]
    %v1209 = vld [vmem:[#allocation4 + $0x298] sm:$0xff]
    %v1210 = vld [vmem:[#allocation4 + $0x2a0] sm:$0xff]
    %v1211 = vld [vmem:[#allocation4 + $0x2a8] sm:$0xff]
    %v1212 = vld [vmem:[#allocation4 + $0x2b0] sm:$0xff]
    %v1213 = vld [vmem:[#allocation4 + $0x2b8] sm:$0xff]
    %v1214 = vld [vmem:[#allocation4 + $0x2c0] sm:$0xff]
    %v1215 = vld [vmem:[#allocation4 + $0x2c8] sm:$0xff]
    %v1216 = vld [vmem:[#allocation4 + $0x2d0] sm:$0xff]
    %v1217 = vld [vmem:[#allocation4 + $0x2d8] sm:$0xff]
    %v1218 = vld [vmem:[#allocation4 + $0x2e0] sm:$0xff]
    %v1219 = vld [vmem:[#allocation4 + $0x2e8] sm:$0xff]
    %v1220 = vld [vmem:[#allocation4 + $0x2f0] sm:$0xff]
    %v1221 = vld [vmem:[#allocation4 + $0x2f8] sm:$0xff]
    %v1222 = vld [vmem:[#allocation4 + $0x300] sm:$0xff]
    %v1223 = vld [vmem:[#allocation4 + $0x308] sm:$0xff]
    %v1224 = vld [vmem:[#allocation4 + $0x310] sm:$0xff]
    %v1225 = vld [vmem:[#allocation4 + $0x318] sm:$0xff]
    %v1226 = vld [vmem:[#allocation4 + $0x320] sm:$0xff]
    %v1227 = vld [vmem:[#allocation4 + $0x328] sm:$0xff]
    %v1228 = vld [vmem:[#allocation4 + $0x330] sm:$0xff]
    %v1229 = vld [vmem:[#allocation4 + $0x338] sm:$0xff]
    %v1230 = vld [vmem:[#allocation4 + $0x340] sm:$0xff]
    %v1231 = vld [vmem:[#allocation4 + $0x348] sm:$0xff]
    %v1232 = vld [vmem:[#allocation4 + $0x350] sm:$0xff]
    %v1233 = vld [vmem:[#allocation4 + $0x358] sm:$0xff]
    %v1234 = vld [vmem:[#allocation4 + $0x360] sm:$0xff]
    %v1235 = vld [vmem:[#allocation4 + $0x368] sm:$0xff]
    %v1236 = vld [vmem:[#allocation4 + $0x370] sm:$0xff]
    %v1237 = vld [vmem:[#allocation4 + $0x378] sm:$0xff]
    %v1238 = vld [vmem:[#allocation4 + $0x380] sm:$0xff]
    %v1239 = vld [vmem:[#allocation4 + $0x388] sm:$0xff]
    %v1240 = vld [vmem:[#allocation4 + $0x390] sm:$0xff]
    %v1241 = vld [vmem:[#allocation4 + $0x398] sm:$0xff]
    %v1242 = vld [vmem:[#allocation4 + $0x3a0] sm:$0xff]
    %v1243 = vld [vmem:[#allocation4 + $0x3a8] sm:$0xff]
    %v1244 = vld [vmem:[#allocation4 + $0x3b0] sm:$0xff]
    %v1245 = vld [vmem:[#allocation4 + $0x3b8] sm:$0xff]
    %v1246 = vld [vmem:[#allocation4 + $0x3c0] sm:$0xff]
    %v1247 = vld [vmem:[#allocation4 + $0x3c8] sm:$0xff]
    %v1248 = vld [vmem:[#allocation4 + $0x3d0] sm:$0xff]
    %v1249 = vld [vmem:[#allocation4 + $0x3d8] sm:$0xff]
    %v1250 = vld [vmem:[#allocation4 + $0x3e0] sm:$0xff]
    %v1251 = vld [vmem:[#allocation4 + $0x3e8] sm:$0xff]
    %v1252 = vld [vmem:[#allocation4 + $0x3f0] sm:$0xff]
    %v1253 = vld [vmem:[#allocation4 + $0x3f8] sm:$0xff]
    %v1254 = vld [vmem:[#allocation4 + $0x400] sm:$0xff]
    %v1255 = vld [vmem:[#allocation4 + $0x408] sm:$0xff]
    %v1256 = vld [vmem:[#allocation4 + $0x410] sm:$0xff]
    %v1257 = vld [vmem:[#allocation4 + $0x418] sm:$0xff]
    %v1258 = vld [vmem:[#allocation4 + $0x420] sm:$0xff]
    %v1259 = vld [vmem:[#allocation4 + $0x428] sm:$0xff]
    %v1260 = vld [vmem:[#allocation4 + $0x430] sm:$0xff]
    %v1261 = vld [vmem:[#allocation4 + $0x438] sm:$0xff]
    %v1262 = vld [vmem:[#allocation4 + $0x440] sm:$0xff]
    %v1263 = vld [vmem:[#allocation4 + $0x448] sm:$0xff]
    %v1264 = vld [vmem:[#allocation4 + $0x450] sm:$0xff]
    %v1265 = vld [vmem:[#allocation4 + $0x458] sm:$0xff]
    %v1266 = vld [vmem:[#allocation4 + $0x460] sm:$0xff]
    %v1267 = vld [vmem:[#allocation4 + $0x468] sm:$0xff]
    %v1268 = vld [vmem:[#allocation4 + $0x470] sm:$0xff]
    %v1269 = vld [vmem:[#allocation4 + $0x478] sm:$0xff]
    %v1270 = vld [vmem:[#allocation4 + $0x480] sm:$0xff]
    %v1271 = vld [vmem:[#allocation4 + $0x488] sm:$0xff]
    %v1272 = vld [vmem:[#allocation4 + $0x490] sm:$0xff]
    %v1273 = vld [vmem:[#allocation4 + $0x498] sm:$0xff]
    %v1274 = vld [vmem:[#allocation4 + $0x4a0] sm:$0xff]
    %v1275 = vld [vmem:[#allocation4 + $0x4a8] sm:$0xff]
    %v1276 = vld [vmem:[#allocation4 + $0x4b0] sm:$0xff]
    %v1277 = vld [vmem:[#allocation4 + $0x4b8] sm:$0xff]
    %v1278 = vld [vmem:[#allocation4 + $0x4c0] sm:$0xff]
    %v1279 = vld [vmem:[#allocation4 + $0x4c8] sm:$0xff]
    %v1280 = vld [vmem:[#allocation4 + $0x4d0] sm:$0xff]
    %v1281 = vld [vmem:[#allocation4 + $0x4d8] sm:$0xff]
    %v1282 = vld [vmem:[#allocation4 + $0x4e0] sm:$0xff]
    %v1283 = vld [vmem:[#allocation4 + $0x4e8] sm:$0xff]
    %v1284 = vld [vmem:[#allocation4 + $0x4f0] sm:$0xff]
    %v1285 = vld [vmem:[#allocation4 + $0x4f8] sm:$0xff]
    %v1286 = vld [vmem:[#allocation4 + $0x500] sm:$0xff]
    %v1287 = vld [vmem:[#allocation4 + $0x508] sm:$0xff]
    %v1288 = vld [vmem:[#allocation4 + $0x510] sm:$0xff]
    %v1289 = vld [vmem:[#allocation4 + $0x518] sm:$0xff]
    %v1290 = vld [vmem:[#allocation4 + $0x520] sm:$0xff]
    %v1291 = vld [vmem:[#allocation4 + $0x528] sm:$0xff]
    %v1292 = vld [vmem:[#allocation4 + $0x530] sm:$0xff]
    %v1293 = vld [vmem:[#allocation4 + $0x538] sm:$0xff]
    %v1294 = vld [vmem:[#allocation4 + $0x540] sm:$0xff]
    %v1295 = vld [vmem:[#allocation4 + $0x548] sm:$0xff]
    %v1296 = vld [vmem:[#allocation4 + $0x550] sm:$0xff]
    %v1297 = vld [vmem:[#allocation4 + $0x558] sm:$0xff]
    %v1298 = vld [vmem:[#allocation4 + $0x560] sm:$0xff]
    %v1299 = vld [vmem:[#allocation4 + $0x568] sm:$0xff]
    %v1300 = vld [vmem:[#allocation4 + $0x570] sm:$0xff]
    %v1301 = vld [vmem:[#allocation4 + $0x578] sm:$0xff]
    %v1302 = vld [vmem:[#allocation4 + $0x580] sm:$0xff]
    %v1303 = vld [vmem:[#allocation4 + $0x588] sm:$0xff]
    %v1304 = vld [vmem:[#allocation4 + $0x590] sm:$0xff]
    %v1305 = vld [vmem:[#allocation4 + $0x598] sm:$0xff]
    %v1306 = vld [vmem:[#allocation4 + $0x5a0] sm:$0xff]
    %v1307 = vld [vmem:[#allocation4 + $0x5a8] sm:$0xff]
    %v1308 = vld [vmem:[#allocation4 + $0x5b0] sm:$0xff]
    %v1309 = vld [vmem:[#allocation4 + $0x5b8] sm:$0xff]
    %v1310 = vld [vmem:[#allocation4 + $0x5c0] sm:$0xff]
    %v1311 = vld [vmem:[#allocation4 + $0x5c8] sm:$0xff]
    %v1312 = vld [vmem:[#allocation4 + $0x5d0] sm:$0xff]
    %v1313 = vld [vmem:[#allocation4 + $0x5d8] sm:$0xff]
    %v1314 = vld [vmem:[#allocation4 + $0x5e0] sm:$0xff]
    %v1315 = vld [vmem:[#allocation4 + $0x5e8] sm:$0xff]
    %v1316 = vld [vmem:[#allocation4 + $0x5f0] sm:$0xff]
    %v1317 = vld [vmem:[#allocation4 + $0x5f8] sm:$0xff]
    %v1318 = vld [vmem:[#allocation4 + $0x600] sm:$0xff]
    %v1319 = vld [vmem:[#allocation4 + $0x608] sm:$0xff]
    %v1320 = vld [vmem:[#allocation4 + $0x610] sm:$0xff]
    %v1321 = vld [vmem:[#allocation4 + $0x618] sm:$0xff]
    %v1322 = vld [vmem:[#allocation4 + $0x620] sm:$0xff]
    %v1323 = vld [vmem:[#allocation4 + $0x628] sm:$0xff]
    %v1324 = vld [vmem:[#allocation4 + $0x630] sm:$0xff]
    %v1325 = vld [vmem:[#allocation4 + $0x638] sm:$0xff]
    %v1326 = vld [vmem:[#allocation4 + $0x640] sm:$0xff]
    %v1327 = vld [vmem:[#allocation4 + $0x648] sm:$0xff]
    %v1328 = vld [vmem:[#allocation4 + $0x650] sm:$0xff]
    %v1329 = vld [vmem:[#allocation4 + $0x658] sm:$0xff]
    %v1330 = vld [vmem:[#allocation4 + $0x660] sm:$0xff]
    %v1331 = vld [vmem:[#allocation4 + $0x668] sm:$0xff]
    %v1332 = vld [vmem:[#allocation4 + $0x670] sm:$0xff]
    %v1333 = vld [vmem:[#allocation4 + $0x678] sm:$0xff]
    %v1334 = vld [vmem:[#allocation4 + $0x680] sm:$0xff]
    %v1335 = vld [vmem:[#allocation4 + $0x688] sm:$0xff]
    %v1336 = vld [vmem:[#allocation4 + $0x690] sm:$0xff]
    %v1337 = vld [vmem:[#allocation4 + $0x698] sm:$0xff]
    %v1338 = vld [vmem:[#allocation4 + $0x6a0] sm:$0xff]
    %v1339 = vld [vmem:[#allocation4 + $0x6a8] sm:$0xff]
    %v1340 = vld [vmem:[#allocation4 + $0x6b0] sm:$0xff]
    %v1341 = vld [vmem:[#allocation4 + $0x6b8] sm:$0xff]
    %v1342 = vld [vmem:[#allocation4 + $0x6c0] sm:$0xff]
    %v1343 = vld [vmem:[#allocation4 + $0x6c8] sm:$0xff]
    %v1344 = vld [vmem:[#allocation4 + $0x6d0] sm:$0xff]
    %v1345 = vld [vmem:[#allocation4 + $0x6d8] sm:$0xff]
    %v1346 = vld [vmem:[#allocation4 + $0x6e0] sm:$0xff]
    %v1347 = vld [vmem:[#allocation4 + $0x6e8] sm:$0xff]
    %v1348 = vld [vmem:[#allocation4 + $0x6f0] sm:$0xff]
    %v1349 = vld [vmem:[#allocation4 + $0x6f8] sm:$0xff]
    %v1350 = vld [vmem:[#allocation4 + $0x700] sm:$0xff]
    %v1351 = vld [vmem:[#allocation4 + $0x708] sm:$0xff]
    %v1352 = vld [vmem:[#allocation4 + $0x710] sm:$0xff]
    %v1353 = vld [vmem:[#allocation4 + $0x718] sm:$0xff]
    %v1354 = vld [vmem:[#allocation4 + $0x720] sm:$0xff]
    %v1355 = vld [vmem:[#allocation4 + $0x728] sm:$0xff]
    %v1356 = vld [vmem:[#allocation4 + $0x730] sm:$0xff]
    %v1357 = vld [vmem:[#allocation4 + $0x738] sm:$0xff]
    %v1358 = vld [vmem:[#allocation4 + $0x740] sm:$0xff]
    %v1359 = vld [vmem:[#allocation4 + $0x748] sm:$0xff]
    %v1360 = vld [vmem:[#allocation4 + $0x750] sm:$0xff]
    %v1361 = vld [vmem:[#allocation4 + $0x758] sm:$0xff]
    %v1362 = vld [vmem:[#allocation4 + $0x760] sm:$0xff]
    %v1363 = vld [vmem:[#allocation4 + $0x768] sm:$0xff]
    %v1364 = vld [vmem:[#allocation4 + $0x770] sm:$0xff]
    %v1365 = vld [vmem:[#allocation4 + $0x778] sm:$0xff]
    %v1366 = vld [vmem:[#allocation4 + $0x780] sm:$0xff]
    %v1367 = vld [vmem:[#allocation4 + $0x788] sm:$0xff]
    %v1368 = vld [vmem:[#allocation4 + $0x790] sm:$0xff]
    %v1369 = vld [vmem:[#allocation4 + $0x798] sm:$0xff]
    %v1370 = vld [vmem:[#allocation4 + $0x7a0] sm:$0xff]
    %v1371 = vld [vmem:[#allocation4 + $0x7a8] sm:$0xff]
    %v1372 = vld [vmem:[#allocation4 + $0x7b0] sm:$0xff]
    %v1373 = vld [vmem:[#allocation4 + $0x7b8] sm:$0xff]
    %v1374 = vld [vmem:[#allocation4 + $0x7c0] sm:$0xff]
    %v1375 = vld [vmem:[#allocation4 + $0x7c8] sm:$0xff]
    %v1376 = vld [vmem:[#allocation4 + $0x7d0] sm:$0xff]
    %v1377 = vld [vmem:[#allocation4 + $0x7d8] sm:$0xff]
    %v1378 = vld [vmem:[#allocation4 + $0x7e0] sm:$0xff]
    %v1379 = vld [vmem:[#allocation4 + $0x7e8] sm:$0xff]
    %v1380 = vld [vmem:[#allocation4 + $0x7f0] sm:$0xff]
    %v1381 = vld [vmem:[#allocation4 + $0x7f8] sm:$0xff]
    %v1382 = vld [vmem:[%s4] sm:$0xf]
    %v1384 = vlaneseq
    %v1385 = vshrl.u32 %v1384, 7
    %v1386 = vsub.s32 0, %v1385
    %v1387 = vrot.slane %v1382, %v1386
    %v1388 = vlaneseq
    %v1389 = vshrl.u32 %v1388, 7
    %v1390 = vsub.s32 1, %v1389
    %v1391 = vrot.slane %v1382, %v1390
    %v1392 = vlaneseq
    %v1393 = vshrl.u32 %v1392, 7
    %v1394 = vsub.s32 2, %v1393
    %v1395 = vrot.slane %v1382, %v1394
    %v1396 = vlaneseq
    %v1397 = vshrl.u32 %v1396, 7
    %v1398 = vsub.s32 3, %v1397
    %v1399 = vrot.slane %v1382, %v1398
    %v1660 = vunpack.c.l.b16 %v1126
    %v1661 = vunpack.c.h.b16 %v1126
    %v1662 = vunpack.c.l.b16 %v1127
    %v1663 = vunpack.c.h.b16 %v1127
    %v1664 = vunpack.c.l.b16 %v1128
    %v1665 = vunpack.c.h.b16 %v1128
    %v1666 = vunpack.c.l.b16 %v1129
    %v1667 = vunpack.c.h.b16 %v1129
    %v1668 = vunpack.c.l.b16 %v1130
    %v1669 = vunpack.c.h.b16 %v1130
    %v1670 = vunpack.c.l.b16 %v1131
    %v1671 = vunpack.c.h.b16 %v1131
    %v1672 = vunpack.c.l.b16 %v1132
    %v1673 = vunpack.c.h.b16 %v1132
    %v1674 = vunpack.c.l.b16 %v1133
    %v1675 = vunpack.c.h.b16 %v1133
    %v1676 = vunpack.c.l.b16 %v1134
    %v1677 = vunpack.c.h.b16 %v1134
    %v1678 = vunpack.c.l.b16 %v1135
    %v1679 = vunpack.c.h.b16 %v1135
    %v1680 = vunpack.c.l.b16 %v1136
    %v1681 = vunpack.c.h.b16 %v1136
    %v1682 = vunpack.c.l.b16 %v1137
    %v1683 = vunpack.c.h.b16 %v1137
    %v1684 = vunpack.c.l.b16 %v1138
    %v1685 = vunpack.c.h.b16 %v1138
    %v1686 = vunpack.c.l.b16 %v1139
    %v1687 = vunpack.c.h.b16 %v1139
    %v1688 = vunpack.c.l.b16 %v1140
    %v1689 = vunpack.c.h.b16 %v1140
    %v1690 = vunpack.c.l.b16 %v1141
    %v1691 = vunpack.c.h.b16 %v1141
    %v1692 = vunpack.c.l.b16 %v1142
    %v1693 = vunpack.c.h.b16 %v1142
    %v1694 = vunpack.c.l.b16 %v1143
    %v1695 = vunpack.c.h.b16 %v1143
    %v1696 = vunpack.c.l.b16 %v1144
    %v1697 = vunpack.c.h.b16 %v1144
    %v1698 = vunpack.c.l.b16 %v1145
    %v1699 = vunpack.c.h.b16 %v1145
    %v1700 = vunpack.c.l.b16 %v1146
    %v1701 = vunpack.c.h.b16 %v1146
    %v1702 = vunpack.c.l.b16 %v1147
    %v1703 = vunpack.c.h.b16 %v1147
    %v1704 = vunpack.c.l.b16 %v1148
    %v1705 = vunpack.c.h.b16 %v1148
    %v1706 = vunpack.c.l.b16 %v1149
    %v1707 = vunpack.c.h.b16 %v1149
    %v1708 = vunpack.c.l.b16 %v1150
    %v1709 = vunpack.c.h.b16 %v1150
    %v1710 = vunpack.c.l.b16 %v1151
    %v1711 = vunpack.c.h.b16 %v1151
    %v1712 = vunpack.c.l.b16 %v1152
    %v1713 = vunpack.c.h.b16 %v1152
    %v1714 = vunpack.c.l.b16 %v1153
    %v1715 = vunpack.c.h.b16 %v1153
    %v1716 = vunpack.c.l.b16 %v1154
    %v1717 = vunpack.c.h.b16 %v1154
    %v1718 = vunpack.c.l.b16 %v1155
    %v1719 = vunpack.c.h.b16 %v1155
    %v1720 = vunpack.c.l.b16 %v1156
    %v1721 = vunpack.c.h.b16 %v1156
    %v1722 = vunpack.c.l.b16 %v1157
    %v1723 = vunpack.c.h.b16 %v1157
    %v1724 = vunpack.c.l.b16 %v1158
    %v1725 = vunpack.c.h.b16 %v1158
    %v1726 = vunpack.c.l.b16 %v1159
    %v1727 = vunpack.c.h.b16 %v1159
    %v1728 = vunpack.c.l.b16 %v1160
    %v1729 = vunpack.c.h.b16 %v1160
    %v1730 = vunpack.c.l.b16 %v1161
    %v1731 = vunpack.c.h.b16 %v1161
    %v1732 = vunpack.c.l.b16 %v1162
    %v1733 = vunpack.c.h.b16 %v1162
    %v1734 = vunpack.c.l.b16 %v1163
    %v1735 = vunpack.c.h.b16 %v1163
    %v1736 = vunpack.c.l.b16 %v1164
    %v1737 = vunpack.c.h.b16 %v1164
    %v1738 = vunpack.c.l.b16 %v1165
    %v1739 = vunpack.c.h.b16 %v1165
    %v1740 = vunpack.c.l.b16 %v1166
    %v1741 = vunpack.c.h.b16 %v1166
    %v1742 = vunpack.c.l.b16 %v1167
    %v1743 = vunpack.c.h.b16 %v1167
    %v1744 = vunpack.c.l.b16 %v1168
    %v1745 = vunpack.c.h.b16 %v1168
    %v1746 = vunpack.c.l.b16 %v1169
    %v1747 = vunpack.c.h.b16 %v1169
    %v1748 = vunpack.c.l.b16 %v1170
    %v1749 = vunpack.c.h.b16 %v1170
    %v1750 = vunpack.c.l.b16 %v1171
    %v1751 = vunpack.c.h.b16 %v1171
    %v1752 = vunpack.c.l.b16 %v1172
    %v1753 = vunpack.c.h.b16 %v1172
    %v1754 = vunpack.c.l.b16 %v1173
    %v1755 = vunpack.c.h.b16 %v1173
    %v1756 = vunpack.c.l.b16 %v1174
    %v1757 = vunpack.c.h.b16 %v1174
    %v1758 = vunpack.c.l.b16 %v1175
    %v1759 = vunpack.c.h.b16 %v1175
    %v1760 = vunpack.c.l.b16 %v1176
    %v1761 = vunpack.c.h.b16 %v1176
    %v1762 = vunpack.c.l.b16 %v1177
    %v1763 = vunpack.c.h.b16 %v1177
    %v1764 = vunpack.c.l.b16 %v1178
    %v1765 = vunpack.c.h.b16 %v1178
    %v1766 = vunpack.c.l.b16 %v1179
    %v1767 = vunpack.c.h.b16 %v1179
    %v1768 = vunpack.c.l.b16 %v1180
    %v1769 = vunpack.c.h.b16 %v1180
    %v1770 = vunpack.c.l.b16 %v1181
    %v1771 = vunpack.c.h.b16 %v1181
    %v1772 = vunpack.c.l.b16 %v1182
    %v1773 = vunpack.c.h.b16 %v1182
    %v1774 = vunpack.c.l.b16 %v1183
    %v1775 = vunpack.c.h.b16 %v1183
    %v1776 = vunpack.c.l.b16 %v1184
    %v1777 = vunpack.c.h.b16 %v1184
    %v1778 = vunpack.c.l.b16 %v1185
    %v1779 = vunpack.c.h.b16 %v1185
    %v1780 = vunpack.c.l.b16 %v1186
    %v1781 = vunpack.c.h.b16 %v1186
    %v1782 = vunpack.c.l.b16 %v1187
    %v1783 = vunpack.c.h.b16 %v1187
    %v1784 = vunpack.c.l.b16 %v1188
    %v1785 = vunpack.c.h.b16 %v1188
    %v1786 = vunpack.c.l.b16 %v1189
    %v1787 = vunpack.c.h.b16 %v1189
    %v1788 = vunpack.c.l.b16 %v1190
    %v1789 = vunpack.c.h.b16 %v1190
    %v1790 = vunpack.c.l.b16 %v1191
    %v1791 = vunpack.c.h.b16 %v1191
    %v1792 = vunpack.c.l.b16 %v1192
    %v1793 = vunpack.c.h.b16 %v1192
    %v1794 = vunpack.c.l.b16 %v1193
    %v1795 = vunpack.c.h.b16 %v1193
    %v1796 = vunpack.c.l.b16 %v1194
    %v1797 = vunpack.c.h.b16 %v1194
    %v1798 = vunpack.c.l.b16 %v1195
    %v1799 = vunpack.c.h.b16 %v1195
    %v1800 = vunpack.c.l.b16 %v1196
    %v1801 = vunpack.c.h.b16 %v1196
    %v1802 = vunpack.c.l.b16 %v1197
    %v1803 = vunpack.c.h.b16 %v1197
    %v1804 = vunpack.c.l.b16 %v1198
    %v1805 = vunpack.c.h.b16 %v1198
    %v1806 = vunpack.c.l.b16 %v1199
    %v1807 = vunpack.c.h.b16 %v1199
    %v1808 = vunpack.c.l.b16 %v1200
    %v1809 = vunpack.c.h.b16 %v1200
    %v1810 = vunpack.c.l.b16 %v1201
    %v1811 = vunpack.c.h.b16 %v1201
    %v1812 = vunpack.c.l.b16 %v1202
    %v1813 = vunpack.c.h.b16 %v1202
    %v1814 = vunpack.c.l.b16 %v1203
    %v1815 = vunpack.c.h.b16 %v1203
    %v1816 = vunpack.c.l.b16 %v1204
    %v1817 = vunpack.c.h.b16 %v1204
    %v1818 = vunpack.c.l.b16 %v1205
    %v1819 = vunpack.c.h.b16 %v1205
    %v1820 = vunpack.c.l.b16 %v1206
    %v1821 = vunpack.c.h.b16 %v1206
    %v1822 = vunpack.c.l.b16 %v1207
    %v1823 = vunpack.c.h.b16 %v1207
    %v1824 = vunpack.c.l.b16 %v1208
    %v1825 = vunpack.c.h.b16 %v1208
    %v1826 = vunpack.c.l.b16 %v1209
    %v1827 = vunpack.c.h.b16 %v1209
    %v1828 = vunpack.c.l.b16 %v1210
    %v1829 = vunpack.c.h.b16 %v1210
    %v1830 = vunpack.c.l.b16 %v1211
    %v1831 = vunpack.c.h.b16 %v1211
    %v1832 = vunpack.c.l.b16 %v1212
    %v1833 = vunpack.c.h.b16 %v1212
    %v1834 = vunpack.c.l.b16 %v1213
    %v1835 = vunpack.c.h.b16 %v1213
    %v1836 = vunpack.c.l.b16 %v1214
    %v1837 = vunpack.c.h.b16 %v1214
    %v1838 = vunpack.c.l.b16 %v1215
    %v1839 = vunpack.c.h.b16 %v1215
    %v1840 = vunpack.c.l.b16 %v1216
    %v1841 = vunpack.c.h.b16 %v1216
    %v1842 = vunpack.c.l.b16 %v1217
    %v1843 = vunpack.c.h.b16 %v1217
    %v1844 = vunpack.c.l.b16 %v1218
    %v1845 = vunpack.c.h.b16 %v1218
    %v1846 = vunpack.c.l.b16 %v1219
    %v1847 = vunpack.c.h.b16 %v1219
    %v1848 = vunpack.c.l.b16 %v1220
    %v1849 = vunpack.c.h.b16 %v1220
    %v1850 = vunpack.c.l.b16 %v1221
    %v1851 = vunpack.c.h.b16 %v1221
    %v1852 = vunpack.c.l.b16 %v1222
    %v1853 = vunpack.c.h.b16 %v1222
    %v1854 = vunpack.c.l.b16 %v1223
    %v1855 = vunpack.c.h.b16 %v1223
    %v1856 = vunpack.c.l.b16 %v1224
    %v1857 = vunpack.c.h.b16 %v1224
    %v1858 = vunpack.c.l.b16 %v1225
    %v1859 = vunpack.c.h.b16 %v1225
    %v1860 = vunpack.c.l.b16 %v1226
    %v1861 = vunpack.c.h.b16 %v1226
    %v1862 = vunpack.c.l.b16 %v1227
    %v1863 = vunpack.c.h.b16 %v1227
    %v1864 = vunpack.c.l.b16 %v1228
    %v1865 = vunpack.c.h.b16 %v1228
    %v1866 = vunpack.c.l.b16 %v1229
    %v1867 = vunpack.c.h.b16 %v1229
    %v1868 = vunpack.c.l.b16 %v1230
    %v1869 = vunpack.c.h.b16 %v1230
    %v1870 = vunpack.c.l.b16 %v1231
    %v1871 = vunpack.c.h.b16 %v1231
    %v1872 = vunpack.c.l.b16 %v1232
    %v1873 = vunpack.c.h.b16 %v1232
    %v1874 = vunpack.c.l.b16 %v1233
    %v1875 = vunpack.c.h.b16 %v1233
    %v1876 = vunpack.c.l.b16 %v1234
    %v1877 = vunpack.c.h.b16 %v1234
    %v1878 = vunpack.c.l.b16 %v1235
    %v1879 = vunpack.c.h.b16 %v1235
    %v1880 = vunpack.c.l.b16 %v1236
    %v1881 = vunpack.c.h.b16 %v1236
    %v1882 = vunpack.c.l.b16 %v1237
    %v1883 = vunpack.c.h.b16 %v1237
    %v1884 = vunpack.c.l.b16 %v1238
    %v1885 = vunpack.c.h.b16 %v1238
    %v1886 = vunpack.c.l.b16 %v1239
    %v1887 = vunpack.c.h.b16 %v1239
    %v1888 = vunpack.c.l.b16 %v1240
    %v1889 = vunpack.c.h.b16 %v1240
    %v1890 = vunpack.c.l.b16 %v1241
    %v1891 = vunpack.c.h.b16 %v1241
    %v1892 = vunpack.c.l.b16 %v1242
    %v1893 = vunpack.c.h.b16 %v1242
    %v1894 = vunpack.c.l.b16 %v1243
    %v1895 = vunpack.c.h.b16 %v1243
    %v1896 = vunpack.c.l.b16 %v1244
    %v1897 = vunpack.c.h.b16 %v1244
    %v1898 = vunpack.c.l.b16 %v1245
    %v1899 = vunpack.c.h.b16 %v1245
    %v1900 = vunpack.c.l.b16 %v1246
    %v1901 = vunpack.c.h.b16 %v1246
    %v1902 = vunpack.c.l.b16 %v1247
    %v1903 = vunpack.c.h.b16 %v1247
    %v1904 = vunpack.c.l.b16 %v1248
    %v1905 = vunpack.c.h.b16 %v1248
    %v1906 = vunpack.c.l.b16 %v1249
    %v1907 = vunpack.c.h.b16 %v1249
    %v1908 = vunpack.c.l.b16 %v1250
    %v1909 = vunpack.c.h.b16 %v1250
    %v1910 = vunpack.c.l.b16 %v1251
    %v1911 = vunpack.c.h.b16 %v1251
    %v1912 = vunpack.c.l.b16 %v1252
    %v1913 = vunpack.c.h.b16 %v1252
    %v1914 = vunpack.c.l.b16 %v1253
    %v1915 = vunpack.c.h.b16 %v1253
    %v1916 = vunpack.c.l.b16 %v1254
    %v1917 = vunpack.c.h.b16 %v1254
    %v1918 = vunpack.c.l.b16 %v1255
    %v1919 = vunpack.c.h.b16 %v1255
    %v1920 = vunpack.c.l.b16 %v1256
    %v1921 = vunpack.c.h.b16 %v1256
    %v1922 = vunpack.c.l.b16 %v1257
    %v1923 = vunpack.c.h.b16 %v1257
    %v1924 = vunpack.c.l.b16 %v1258
    %v1925 = vunpack.c.h.b16 %v1258
    %v1926 = vunpack.c.l.b16 %v1259
    %v1927 = vunpack.c.h.b16 %v1259
    %v1928 = vunpack.c.l.b16 %v1260
    %v1929 = vunpack.c.h.b16 %v1260
    %v1930 = vunpack.c.l.b16 %v1261
    %v1931 = vunpack.c.h.b16 %v1261
    %v1932 = vunpack.c.l.b16 %v1262
    %v1933 = vunpack.c.h.b16 %v1262
    %v1934 = vunpack.c.l.b16 %v1263
    %v1935 = vunpack.c.h.b16 %v1263
    %v1936 = vunpack.c.l.b16 %v1264
    %v1937 = vunpack.c.h.b16 %v1264
    %v1938 = vunpack.c.l.b16 %v1265
    %v1939 = vunpack.c.h.b16 %v1265
    %v1940 = vunpack.c.l.b16 %v1266
    %v1941 = vunpack.c.h.b16 %v1266
    %v1942 = vunpack.c.l.b16 %v1267
    %v1943 = vunpack.c.h.b16 %v1267
    %v1944 = vunpack.c.l.b16 %v1268
    %v1945 = vunpack.c.h.b16 %v1268
    %v1946 = vunpack.c.l.b16 %v1269
    %v1947 = vunpack.c.h.b16 %v1269
    %v1948 = vunpack.c.l.b16 %v1270
    %v1949 = vunpack.c.h.b16 %v1270
    %v1950 = vunpack.c.l.b16 %v1271
    %v1951 = vunpack.c.h.b16 %v1271
    %v1952 = vunpack.c.l.b16 %v1272
    %v1953 = vunpack.c.h.b16 %v1272
    %v1954 = vunpack.c.l.b16 %v1273
    %v1955 = vunpack.c.h.b16 %v1273
    %v1956 = vunpack.c.l.b16 %v1274
    %v1957 = vunpack.c.h.b16 %v1274
    %v1958 = vunpack.c.l.b16 %v1275
    %v1959 = vunpack.c.h.b16 %v1275
    %v1960 = vunpack.c.l.b16 %v1276
    %v1961 = vunpack.c.h.b16 %v1276
    %v1962 = vunpack.c.l.b16 %v1277
    %v1963 = vunpack.c.h.b16 %v1277
    %v1964 = vunpack.c.l.b16 %v1278
    %v1965 = vunpack.c.h.b16 %v1278
    %v1966 = vunpack.c.l.b16 %v1279
    %v1967 = vunpack.c.h.b16 %v1279
    %v1968 = vunpack.c.l.b16 %v1280
    %v1969 = vunpack.c.h.b16 %v1280
    %v1970 = vunpack.c.l.b16 %v1281
    %v1971 = vunpack.c.h.b16 %v1281
    %v1972 = vunpack.c.l.b16 %v1282
    %v1973 = vunpack.c.h.b16 %v1282
    %v1974 = vunpack.c.l.b16 %v1283
    %v1975 = vunpack.c.h.b16 %v1283
    %v1976 = vunpack.c.l.b16 %v1284
    %v1977 = vunpack.c.h.b16 %v1284
    %v1978 = vunpack.c.l.b16 %v1285
    %v1979 = vunpack.c.h.b16 %v1285
    %v1980 = vunpack.c.l.b16 %v1286
    %v1981 = vunpack.c.h.b16 %v1286
    %v1982 = vunpack.c.l.b16 %v1287
    %v1983 = vunpack.c.h.b16 %v1287
    %v1984 = vunpack.c.l.b16 %v1288
    %v1985 = vunpack.c.h.b16 %v1288
    %v1986 = vunpack.c.l.b16 %v1289
    %v1987 = vunpack.c.h.b16 %v1289
    %v1988 = vunpack.c.l.b16 %v1290
    %v1989 = vunpack.c.h.b16 %v1290
    %v1990 = vunpack.c.l.b16 %v1291
    %v1991 = vunpack.c.h.b16 %v1291
    %v1992 = vunpack.c.l.b16 %v1292
    %v1993 = vunpack.c.h.b16 %v1292
    %v1994 = vunpack.c.l.b16 %v1293
    %v1995 = vunpack.c.h.b16 %v1293
    %v1996 = vunpack.c.l.b16 %v1294
    %v1997 = vunpack.c.h.b16 %v1294
    %v1998 = vunpack.c.l.b16 %v1295
    %v1999 = vunpack.c.h.b16 %v1295
    %v2000 = vunpack.c.l.b16 %v1296
    %v2001 = vunpack.c.h.b16 %v1296
    %v2002 = vunpack.c.l.b16 %v1297
    %v2003 = vunpack.c.h.b16 %v1297
    %v2004 = vunpack.c.l.b16 %v1298
    %v2005 = vunpack.c.h.b16 %v1298
    %v2006 = vunpack.c.l.b16 %v1299
    %v2007 = vunpack.c.h.b16 %v1299
    %v2008 = vunpack.c.l.b16 %v1300
    %v2009 = vunpack.c.h.b16 %v1300
    %v2010 = vunpack.c.l.b16 %v1301
    %v2011 = vunpack.c.h.b16 %v1301
    %v2012 = vunpack.c.l.b16 %v1302
    %v2013 = vunpack.c.h.b16 %v1302
    %v2014 = vunpack.c.l.b16 %v1303
    %v2015 = vunpack.c.h.b16 %v1303
    %v2016 = vunpack.c.l.b16 %v1304
    %v2017 = vunpack.c.h.b16 %v1304
    %v2018 = vunpack.c.l.b16 %v1305
    %v2019 = vunpack.c.h.b16 %v1305
    %v2020 = vunpack.c.l.b16 %v1306
    %v2021 = vunpack.c.h.b16 %v1306
    %v2022 = vunpack.c.l.b16 %v1307
    %v2023 = vunpack.c.h.b16 %v1307
    %v2024 = vunpack.c.l.b16 %v1308
    %v2025 = vunpack.c.h.b16 %v1308
    %v2026 = vunpack.c.l.b16 %v1309
    %v2027 = vunpack.c.h.b16 %v1309
    %v2028 = vunpack.c.l.b16 %v1310
    %v2029 = vunpack.c.h.b16 %v1310
    %v2030 = vunpack.c.l.b16 %v1311
    %v2031 = vunpack.c.h.b16 %v1311
    %v2032 = vunpack.c.l.b16 %v1312
    %v2033 = vunpack.c.h.b16 %v1312
    %v2034 = vunpack.c.l.b16 %v1313
    %v2035 = vunpack.c.h.b16 %v1313
    %v2036 = vunpack.c.l.b16 %v1314
    %v2037 = vunpack.c.h.b16 %v1314
    %v2038 = vunpack.c.l.b16 %v1315
    %v2039 = vunpack.c.h.b16 %v1315
    %v2040 = vunpack.c.l.b16 %v1316
    %v2041 = vunpack.c.h.b16 %v1316
    %v2042 = vunpack.c.l.b16 %v1317
    %v2043 = vunpack.c.h.b16 %v1317
    %v2044 = vunpack.c.l.b16 %v1318
    %v2045 = vunpack.c.h.b16 %v1318
    %v2046 = vunpack.c.l.b16 %v1319
    %v2047 = vunpack.c.h.b16 %v1319
    %v2048 = vunpack.c.l.b16 %v1320
    %v2049 = vunpack.c.h.b16 %v1320
    %v2050 = vunpack.c.l.b16 %v1321
    %v2051 = vunpack.c.h.b16 %v1321
    %v2052 = vunpack.c.l.b16 %v1322
    %v2053 = vunpack.c.h.b16 %v1322
    %v2054 = vunpack.c.l.b16 %v1323
    %v2055 = vunpack.c.h.b16 %v1323
    %v2056 = vunpack.c.l.b16 %v1324
    %v2057 = vunpack.c.h.b16 %v1324
    %v2058 = vunpack.c.l.b16 %v1325
    %v2059 = vunpack.c.h.b16 %v1325
    %v2060 = vunpack.c.l.b16 %v1326
    %v2061 = vunpack.c.h.b16 %v1326
    %v2062 = vunpack.c.l.b16 %v1327
    %v2063 = vunpack.c.h.b16 %v1327
    %v2064 = vunpack.c.l.b16 %v1328
    %v2065 = vunpack.c.h.b16 %v1328
    %v2066 = vunpack.c.l.b16 %v1329
    %v2067 = vunpack.c.h.b16 %v1329
    %v2068 = vunpack.c.l.b16 %v1330
    %v2069 = vunpack.c.h.b16 %v1330
    %v2070 = vunpack.c.l.b16 %v1331
    %v2071 = vunpack.c.h.b16 %v1331
    %v2072 = vunpack.c.l.b16 %v1332
    %v2073 = vunpack.c.h.b16 %v1332
    %v2074 = vunpack.c.l.b16 %v1333
    %v2075 = vunpack.c.h.b16 %v1333
    %v2076 = vunpack.c.l.b16 %v1334
    %v2077 = vunpack.c.h.b16 %v1334
    %v2078 = vunpack.c.l.b16 %v1335
    %v2079 = vunpack.c.h.b16 %v1335
    %v2080 = vunpack.c.l.b16 %v1336
    %v2081 = vunpack.c.h.b16 %v1336
    %v2082 = vunpack.c.l.b16 %v1337
    %v2083 = vunpack.c.h.b16 %v1337
    %v2084 = vunpack.c.l.b16 %v1338
    %v2085 = vunpack.c.h.b16 %v1338
    %v2086 = vunpack.c.l.b16 %v1339
    %v2087 = vunpack.c.h.b16 %v1339
    %v2088 = vunpack.c.l.b16 %v1340
    %v2089 = vunpack.c.h.b16 %v1340
    %v2090 = vunpack.c.l.b16 %v1341
    %v2091 = vunpack.c.h.b16 %v1341
    %v2092 = vunpack.c.l.b16 %v1342
    %v2093 = vunpack.c.h.b16 %v1342
    %v2094 = vunpack.c.l.b16 %v1343
    %v2095 = vunpack.c.h.b16 %v1343
    %v2096 = vunpack.c.l.b16 %v1344
    %v2097 = vunpack.c.h.b16 %v1344
    %v2098 = vunpack.c.l.b16 %v1345
    %v2099 = vunpack.c.h.b16 %v1345
    %v2100 = vunpack.c.l.b16 %v1346
    %v2101 = vunpack.c.h.b16 %v1346
    %v2102 = vunpack.c.l.b16 %v1347
    %v2103 = vunpack.c.h.b16 %v1347
    %v2104 = vunpack.c.l.b16 %v1348
    %v2105 = vunpack.c.h.b16 %v1348
    %v2106 = vunpack.c.l.b16 %v1349
    %v2107 = vunpack.c.h.b16 %v1349
    %v2108 = vunpack.c.l.b16 %v1350
    %v2109 = vunpack.c.h.b16 %v1350
    %v2110 = vunpack.c.l.b16 %v1351
    %v2111 = vunpack.c.h.b16 %v1351
    %v2112 = vunpack.c.l.b16 %v1352
    %v2113 = vunpack.c.h.b16 %v1352
    %v2114 = vunpack.c.l.b16 %v1353
    %v2115 = vunpack.c.h.b16 %v1353
    %v2116 = vunpack.c.l.b16 %v1354
    %v2117 = vunpack.c.h.b16 %v1354
    %v2118 = vunpack.c.l.b16 %v1355
    %v2119 = vunpack.c.h.b16 %v1355
    %v2120 = vunpack.c.l.b16 %v1356
    %v2121 = vunpack.c.h.b16 %v1356
    %v2122 = vunpack.c.l.b16 %v1357
    %v2123 = vunpack.c.h.b16 %v1357
    %v2124 = vunpack.c.l.b16 %v1358
    %v2125 = vunpack.c.h.b16 %v1358
    %v2126 = vunpack.c.l.b16 %v1359
    %v2127 = vunpack.c.h.b16 %v1359
    %v2128 = vunpack.c.l.b16 %v1360
    %v2129 = vunpack.c.h.b16 %v1360
    %v2130 = vunpack.c.l.b16 %v1361
    %v2131 = vunpack.c.h.b16 %v1361
    %v2132 = vunpack.c.l.b16 %v1362
    %v2133 = vunpack.c.h.b16 %v1362
    %v2134 = vunpack.c.l.b16 %v1363
    %v2135 = vunpack.c.h.b16 %v1363
    %v2136 = vunpack.c.l.b16 %v1364
    %v2137 = vunpack.c.h.b16 %v1364
    %v2138 = vunpack.c.l.b16 %v1365
    %v2139 = vunpack.c.h.b16 %v1365
    %v2140 = vunpack.c.l.b16 %v1366
    %v2141 = vunpack.c.h.b16 %v1366
    %v2142 = vunpack.c.l.b16 %v1367
    %v2143 = vunpack.c.h.b16 %v1367
    %v2144 = vunpack.c.l.b16 %v1368
    %v2145 = vunpack.c.h.b16 %v1368
    %v2146 = vunpack.c.l.b16 %v1369
    %v2147 = vunpack.c.h.b16 %v1369
    %v2148 = vunpack.c.l.b16 %v1370
    %v2149 = vunpack.c.h.b16 %v1370
    %v2150 = vunpack.c.l.b16 %v1371
    %v2151 = vunpack.c.h.b16 %v1371
    %v2152 = vunpack.c.l.b16 %v1372
    %v2153 = vunpack.c.h.b16 %v1372
    %v2154 = vunpack.c.l.b16 %v1373
    %v2155 = vunpack.c.h.b16 %v1373
    %v2156 = vunpack.c.l.b16 %v1374
    %v2157 = vunpack.c.h.b16 %v1374
    %v2158 = vunpack.c.l.b16 %v1375
    %v2159 = vunpack.c.h.b16 %v1375
    %v2160 = vunpack.c.l.b16 %v1376
    %v2161 = vunpack.c.h.b16 %v1376
    %v2162 = vunpack.c.l.b16 %v1377
    %v2163 = vunpack.c.h.b16 %v1377
    %v2164 = vunpack.c.l.b16 %v1378
    %v2165 = vunpack.c.h.b16 %v1378
    %v2166 = vunpack.c.l.b16 %v1379
    %v2167 = vunpack.c.h.b16 %v1379
    %v2168 = vunpack.c.l.b16 %v1380
    %v2169 = vunpack.c.h.b16 %v1380
    %v2170 = vunpack.c.l.b16 %v1381
    %v2171 = vunpack.c.h.b16 %v1381
    %v2172 = vpack.c.b16 %v1664, %v1660
    %v2173 = vpack.c.b16 %v1665, %v1661
    %v2174 = vpack.c.b16 %v1666, %v1662
    %v2175 = vpack.c.b16 %v1667, %v1663
    %v2176 = vpack.c.b16 %v1672, %v1668
    %v2177 = vpack.c.b16 %v1673, %v1669
    %v2178 = vpack.c.b16 %v1674, %v1670
    %v2179 = vpack.c.b16 %v1675, %v1671
    %v2180 = vpack.c.b16 %v1680, %v1676
    %v2181 = vpack.c.b16 %v1681, %v1677
    %v2182 = vpack.c.b16 %v1682, %v1678
    %v2183 = vpack.c.b16 %v1683, %v1679
    %v2184 = vpack.c.b16 %v1688, %v1684
    %v2185 = vpack.c.b16 %v1689, %v1685
    %v2186 = vpack.c.b16 %v1690, %v1686
    %v2187 = vpack.c.b16 %v1691, %v1687
    %v2188 = vpack.c.b16 %v1696, %v1692
    %v2189 = vpack.c.b16 %v1697, %v1693
    %v2190 = vpack.c.b16 %v1698, %v1694
    %v2191 = vpack.c.b16 %v1699, %v1695
    %v2192 = vpack.c.b16 %v1704, %v1700
    %v2193 = vpack.c.b16 %v1705, %v1701
    %v2194 = vpack.c.b16 %v1706, %v1702
    %v2195 = vpack.c.b16 %v1707, %v1703
    %v2196 = vpack.c.b16 %v1712, %v1708
    %v2197 = vpack.c.b16 %v1713, %v1709
    %v2198 = vpack.c.b16 %v1714, %v1710
    %v2199 = vpack.c.b16 %v1715, %v1711
    %v2200 = vpack.c.b16 %v1720, %v1716
    %v2201 = vpack.c.b16 %v1721, %v1717
    %v2202 = vpack.c.b16 %v1722, %v1718
    %v2203 = vpack.c.b16 %v1723, %v1719
    %v2204 = vpack.c.b16 %v1728, %v1724
    %v2205 = vpack.c.b16 %v1729, %v1725
    %v2206 = vpack.c.b16 %v1730, %v1726
    %v2207 = vpack.c.b16 %v1731, %v1727
    %v2208 = vpack.c.b16 %v1736, %v1732
    %v2209 = vpack.c.b16 %v1737, %v1733
    %v2210 = vpack.c.b16 %v1738, %v1734
    %v2211 = vpack.c.b16 %v1739, %v1735
    %v2212 = vpack.c.b16 %v1744, %v1740
    %v2213 = vpack.c.b16 %v1745, %v1741
    %v2214 = vpack.c.b16 %v1746, %v1742
    %v2215 = vpack.c.b16 %v1747, %v1743
    %v2216 = vpack.c.b16 %v1752, %v1748
    %v2217 = vpack.c.b16 %v1753, %v1749
    %v2218 = vpack.c.b16 %v1754, %v1750
    %v2219 = vpack.c.b16 %v1755, %v1751
    %v2220 = vpack.c.b16 %v1760, %v1756
    %v2221 = vpack.c.b16 %v1761, %v1757
    %v2222 = vpack.c.b16 %v1762, %v1758
    %v2223 = vpack.c.b16 %v1763, %v1759
    %v2224 = vpack.c.b16 %v1768, %v1764
    %v2225 = vpack.c.b16 %v1769, %v1765
    %v2226 = vpack.c.b16 %v1770, %v1766
    %v2227 = vpack.c.b16 %v1771, %v1767
    %v2228 = vpack.c.b16 %v1776, %v1772
    %v2229 = vpack.c.b16 %v1777, %v1773
    %v2230 = vpack.c.b16 %v1778, %v1774
    %v2231 = vpack.c.b16 %v1779, %v1775
    %v2232 = vpack.c.b16 %v1784, %v1780
    %v2233 = vpack.c.b16 %v1785, %v1781
    %v2234 = vpack.c.b16 %v1786, %v1782
    %v2235 = vpack.c.b16 %v1787, %v1783
    %v2236 = vpack.c.b16 %v1792, %v1788
    %v2237 = vpack.c.b16 %v1793, %v1789
    %v2238 = vpack.c.b16 %v1794, %v1790
    %v2239 = vpack.c.b16 %v1795, %v1791
    %v2240 = vpack.c.b16 %v1800, %v1796
    %v2241 = vpack.c.b16 %v1801, %v1797
    %v2242 = vpack.c.b16 %v1802, %v1798
    %v2243 = vpack.c.b16 %v1803, %v1799
    %v2244 = vpack.c.b16 %v1808, %v1804
    %v2245 = vpack.c.b16 %v1809, %v1805
    %v2246 = vpack.c.b16 %v1810, %v1806
    %v2247 = vpack.c.b16 %v1811, %v1807
    %v2248 = vpack.c.b16 %v1816, %v1812
    %v2249 = vpack.c.b16 %v1817, %v1813
    %v2250 = vpack.c.b16 %v1818, %v1814
    %v2251 = vpack.c.b16 %v1819, %v1815
    %v2252 = vpack.c.b16 %v1824, %v1820
    %v2253 = vpack.c.b16 %v1825, %v1821
    %v2254 = vpack.c.b16 %v1826, %v1822
    %v2255 = vpack.c.b16 %v1827, %v1823
    %v2256 = vpack.c.b16 %v1832, %v1828
    %v2257 = vpack.c.b16 %v1833, %v1829
    %v2258 = vpack.c.b16 %v1834, %v1830
    %v2259 = vpack.c.b16 %v1835, %v1831
    %v2260 = vpack.c.b16 %v1840, %v1836
    %v2261 = vpack.c.b16 %v1841, %v1837
    %v2262 = vpack.c.b16 %v1842, %v1838
    %v2263 = vpack.c.b16 %v1843, %v1839
    %v2264 = vpack.c.b16 %v1848, %v1844
    %v2265 = vpack.c.b16 %v1849, %v1845
    %v2266 = vpack.c.b16 %v1850, %v1846
    %v2267 = vpack.c.b16 %v1851, %v1847
    %v2268 = vpack.c.b16 %v1856, %v1852
    %v2269 = vpack.c.b16 %v1857, %v1853
    %v2270 = vpack.c.b16 %v1858, %v1854
    %v2271 = vpack.c.b16 %v1859, %v1855
    %v2272 = vpack.c.b16 %v1864, %v1860
    %v2273 = vpack.c.b16 %v1865, %v1861
    %v2274 = vpack.c.b16 %v1866, %v1862
    %v2275 = vpack.c.b16 %v1867, %v1863
    %v2276 = vpack.c.b16 %v1872, %v1868
    %v2277 = vpack.c.b16 %v1873, %v1869
    %v2278 = vpack.c.b16 %v1874, %v1870
    %v2279 = vpack.c.b16 %v1875, %v1871
    %v2280 = vpack.c.b16 %v1880, %v1876
    %v2281 = vpack.c.b16 %v1881, %v1877
    %v2282 = vpack.c.b16 %v1882, %v1878
    %v2283 = vpack.c.b16 %v1883, %v1879
    %v2284 = vpack.c.b16 %v1888, %v1884
    %v2285 = vpack.c.b16 %v1889, %v1885
    %v2286 = vpack.c.b16 %v1890, %v1886
    %v2287 = vpack.c.b16 %v1891, %v1887
    %v2288 = vpack.c.b16 %v1896, %v1892
    %v2289 = vpack.c.b16 %v1897, %v1893
    %v2290 = vpack.c.b16 %v1898, %v1894
    %v2291 = vpack.c.b16 %v1899, %v1895
    %v2292 = vpack.c.b16 %v1904, %v1900
    %v2293 = vpack.c.b16 %v1905, %v1901
    %v2294 = vpack.c.b16 %v1906, %v1902
    %v2295 = vpack.c.b16 %v1907, %v1903
    %v2296 = vpack.c.b16 %v1912, %v1908
    %v2297 = vpack.c.b16 %v1913, %v1909
    %v2298 = vpack.c.b16 %v1914, %v1910
    %v2299 = vpack.c.b16 %v1915, %v1911
    %v2300 = vpack.c.b16 %v1920, %v1916
    %v2301 = vpack.c.b16 %v1921, %v1917
    %v2302 = vpack.c.b16 %v1922, %v1918
    %v2303 = vpack.c.b16 %v1923, %v1919
    %v2304 = vpack.c.b16 %v1928, %v1924
    %v2305 = vpack.c.b16 %v1929, %v1925
    %v2306 = vpack.c.b16 %v1930, %v1926
    %v2307 = vpack.c.b16 %v1931, %v1927
    %v2308 = vpack.c.b16 %v1936, %v1932
    %v2309 = vpack.c.b16 %v1937, %v1933
    %v2310 = vpack.c.b16 %v1938, %v1934
    %v2311 = vpack.c.b16 %v1939, %v1935
    %v2312 = vpack.c.b16 %v1944, %v1940
    %v2313 = vpack.c.b16 %v1945, %v1941
    %v2314 = vpack.c.b16 %v1946, %v1942
    %v2315 = vpack.c.b16 %v1947, %v1943
    %v2316 = vpack.c.b16 %v1952, %v1948
    %v2317 = vpack.c.b16 %v1953, %v1949
    %v2318 = vpack.c.b16 %v1954, %v1950
    %v2319 = vpack.c.b16 %v1955, %v1951
    %v2320 = vpack.c.b16 %v1960, %v1956
    %v2321 = vpack.c.b16 %v1961, %v1957
    %v2322 = vpack.c.b16 %v1962, %v1958
    %v2323 = vpack.c.b16 %v1963, %v1959
    %v2324 = vpack.c.b16 %v1968, %v1964
    %v2325 = vpack.c.b16 %v1969, %v1965
    %v2326 = vpack.c.b16 %v1970, %v1966
    %v2327 = vpack.c.b16 %v1971, %v1967
    %v2328 = vpack.c.b16 %v1976, %v1972
    %v2329 = vpack.c.b16 %v1977, %v1973
    %v2330 = vpack.c.b16 %v1978, %v1974
    %v2331 = vpack.c.b16 %v1979, %v1975
    %v2332 = vpack.c.b16 %v1984, %v1980
    %v2333 = vpack.c.b16 %v1985, %v1981
    %v2334 = vpack.c.b16 %v1986, %v1982
    %v2335 = vpack.c.b16 %v1987, %v1983
    %v2336 = vpack.c.b16 %v1992, %v1988
    %v2337 = vpack.c.b16 %v1993, %v1989
    %v2338 = vpack.c.b16 %v1994, %v1990
    %v2339 = vpack.c.b16 %v1995, %v1991
    %v2340 = vpack.c.b16 %v2000, %v1996
    %v2341 = vpack.c.b16 %v2001, %v1997
    %v2342 = vpack.c.b16 %v2002, %v1998
    %v2343 = vpack.c.b16 %v2003, %v1999
    %v2344 = vpack.c.b16 %v2008, %v2004
    %v2345 = vpack.c.b16 %v2009, %v2005
    %v2346 = vpack.c.b16 %v2010, %v2006
    %v2347 = vpack.c.b16 %v2011, %v2007
    %v2348 = vpack.c.b16 %v2016, %v2012
    %v2349 = vpack.c.b16 %v2017, %v2013
    %v2350 = vpack.c.b16 %v2018, %v2014
    %v2351 = vpack.c.b16 %v2019, %v2015
    %v2352 = vpack.c.b16 %v2024, %v2020
    %v2353 = vpack.c.b16 %v2025, %v2021
    %v2354 = vpack.c.b16 %v2026, %v2022
    %v2355 = vpack.c.b16 %v2027, %v2023
    %v2356 = vpack.c.b16 %v2032, %v2028
    %v2357 = vpack.c.b16 %v2033, %v2029
    %v2358 = vpack.c.b16 %v2034, %v2030
    %v2359 = vpack.c.b16 %v2035, %v2031
    %v2360 = vpack.c.b16 %v2040, %v2036
    %v2361 = vpack.c.b16 %v2041, %v2037
    %v2362 = vpack.c.b16 %v2042, %v2038
    %v2363 = vpack.c.b16 %v2043, %v2039
    %v2364 = vpack.c.b16 %v2048, %v2044
    %v2365 = vpack.c.b16 %v2049, %v2045
    %v2366 = vpack.c.b16 %v2050, %v2046
    %v2367 = vpack.c.b16 %v2051, %v2047
    %v2368 = vpack.c.b16 %v2056, %v2052
    %v2369 = vpack.c.b16 %v2057, %v2053
    %v2370 = vpack.c.b16 %v2058, %v2054
    %v2371 = vpack.c.b16 %v2059, %v2055
    %v2372 = vpack.c.b16 %v2064, %v2060
    %v2373 = vpack.c.b16 %v2065, %v2061
    %v2374 = vpack.c.b16 %v2066, %v2062
    %v2375 = vpack.c.b16 %v2067, %v2063
    %v2376 = vpack.c.b16 %v2072, %v2068
    %v2377 = vpack.c.b16 %v2073, %v2069
    %v2378 = vpack.c.b16 %v2074, %v2070
    %v2379 = vpack.c.b16 %v2075, %v2071
    %v2380 = vpack.c.b16 %v2080, %v2076
    %v2381 = vpack.c.b16 %v2081, %v2077
    %v2382 = vpack.c.b16 %v2082, %v2078
    %v2383 = vpack.c.b16 %v2083, %v2079
    %v2384 = vpack.c.b16 %v2088, %v2084
    %v2385 = vpack.c.b16 %v2089, %v2085
    %v2386 = vpack.c.b16 %v2090, %v2086
    %v2387 = vpack.c.b16 %v2091, %v2087
    %v2388 = vpack.c.b16 %v2096, %v2092
    %v2389 = vpack.c.b16 %v2097, %v2093
    %v2390 = vpack.c.b16 %v2098, %v2094
    %v2391 = vpack.c.b16 %v2099, %v2095
    %v2392 = vpack.c.b16 %v2104, %v2100
    %v2393 = vpack.c.b16 %v2105, %v2101
    %v2394 = vpack.c.b16 %v2106, %v2102
    %v2395 = vpack.c.b16 %v2107, %v2103
    %v2396 = vpack.c.b16 %v2112, %v2108
    %v2397 = vpack.c.b16 %v2113, %v2109
    %v2398 = vpack.c.b16 %v2114, %v2110
    %v2399 = vpack.c.b16 %v2115, %v2111
    %v2400 = vpack.c.b16 %v2120, %v2116
    %v2401 = vpack.c.b16 %v2121, %v2117
    %v2402 = vpack.c.b16 %v2122, %v2118
    %v2403 = vpack.c.b16 %v2123, %v2119
    %v2404 = vpack.c.b16 %v2128, %v2124
    %v2405 = vpack.c.b16 %v2129, %v2125
    %v2406 = vpack.c.b16 %v2130, %v2126
    %v2407 = vpack.c.b16 %v2131, %v2127
    %v2408 = vpack.c.b16 %v2136, %v2132
    %v2409 = vpack.c.b16 %v2137, %v2133
    %v2410 = vpack.c.b16 %v2138, %v2134
    %v2411 = vpack.c.b16 %v2139, %v2135
    %v2412 = vpack.c.b16 %v2144, %v2140
    %v2413 = vpack.c.b16 %v2145, %v2141
    %v2414 = vpack.c.b16 %v2146, %v2142
    %v2415 = vpack.c.b16 %v2147, %v2143
    %v2416 = vpack.c.b16 %v2152, %v2148
    %v2417 = vpack.c.b16 %v2153, %v2149
    %v2418 = vpack.c.b16 %v2154, %v2150
    %v2419 = vpack.c.b16 %v2155, %v2151
    %v2420 = vpack.c.b16 %v2160, %v2156
    %v2421 = vpack.c.b16 %v2161, %v2157
    %v2422 = vpack.c.b16 %v2162, %v2158
    %v2423 = vpack.c.b16 %v2163, %v2159
    %v2424 = vpack.c.b16 %v2168, %v2164
    %v2425 = vpack.c.b16 %v2169, %v2165
    %v2426 = vpack.c.b16 %v2170, %v2166
    %v2427 = vpack.c.b16 %v2171, %v2167
    %2684 = vmatprep.subr.bf16.mxu0 %v2173
    %2685 = vmatpush1.bf16.msra.mxu0 %v2172
    %2686 = vmatprep.subr.bf16.mxu0 %v2177
    %2687 = vmatpush1.bf16.msra.mxu0 %v2176
    %2688 = vmatprep.subr.bf16.mxu0 %v2181
    %2689 = vmatpush1.bf16.msra.mxu0 %v2180
    %2690 = vmatprep.subr.bf16.mxu0 %v2185
    %2691 = vmatpush1.bf16.msra.mxu0 %v2184
    %2692 = vmatprep.subr.bf16.mxu0 %v2189
    %2693 = vmatpush1.bf16.msra.mxu0 %v2188
    %2694 = vmatprep.subr.bf16.mxu0 %v2193
    %2695 = vmatpush1.bf16.msra.mxu0 %v2192
    %2696 = vmatprep.subr.bf16.mxu0 %v2197
    %2697 = vmatpush1.bf16.msra.mxu0 %v2196
    %2698 = vmatprep.subr.bf16.mxu0 %v2201
    %2699 = vmatpush1.bf16.msra.mxu0 %v2200
    %2700 = vmatprep.subr.bf16.mxu0 %v2205
    %2701 = vmatpush1.bf16.msra.mxu0 %v2204
    %2702 = vmatprep.subr.bf16.mxu0 %v2209
    %2703 = vmatpush1.bf16.msra.mxu0 %v2208
    %2704 = vmatprep.subr.bf16.mxu0 %v2213
    %2705 = vmatpush1.bf16.msra.mxu0 %v2212
    %2706 = vmatprep.subr.bf16.mxu0 %v2217
    %2707 = vmatpush1.bf16.msra.mxu0 %v2216
    %2708 = vmatprep.subr.bf16.mxu0 %v2221
    %2709 = vmatpush1.bf16.msra.mxu0 %v2220
    %2710 = vmatprep.subr.bf16.mxu0 %v2225
    %2711 = vmatpush1.bf16.msra.mxu0 %v2224
    %2712 = vmatprep.subr.bf16.mxu0 %v2229
    %2713 = vmatpush1.bf16.msra.mxu0 %v2228
    %2714 = vmatprep.subr.bf16.mxu0 %v2233
    %2715 = vmatpush1.bf16.msra.mxu0 %v2232
    %2716 = vmatprep.mubr.bf16.mxu0 %v1119
    %2717 = vmatmul.mubr.bf16.gmra.mrb[0].mxu0 %v1118
    %v2718 = vpop.f32.mrb[0].mxu0
    %v2719 = vadd.f32 %v1387, %v2718
    %v2720 = vpop.f32.mrb[0].mxu0
    %v2721 = vadd.f32 %v1391, %v2720
    %v2722 = vpop.f32.mrb[0].mxu0
    %v2723 = vpop.f32.mrb[0].mxu0
    %2724 = vdwg.mxu0
    %2725 = vmatprep.subr.bf16.mxu0 %v2237
    %2726 = vmatpush1.bf16.msra.mxu0 %v2236
    %2727 = vmatprep.subr.bf16.mxu0 %v2241
    %2728 = vmatpush1.bf16.msra.mxu0 %v2240
    %2729 = vmatprep.subr.bf16.mxu0 %v2245
    %2730 = vmatpush1.bf16.msra.mxu0 %v2244
    %2731 = vmatprep.subr.bf16.mxu0 %v2249
    %2732 = vmatpush1.bf16.msra.mxu0 %v2248
    %2733 = vmatprep.subr.bf16.mxu0 %v2253
    %2734 = vmatpush1.bf16.msra.mxu0 %v2252
    %2735 = vmatprep.subr.bf16.mxu0 %v2257
    %2736 = vmatpush1.bf16.msra.mxu0 %v2256
    %2737 = vmatprep.subr.bf16.mxu0 %v2261
    %2738 = vmatpush1.bf16.msra.mxu0 %v2260
    %2739 = vmatprep.subr.bf16.mxu0 %v2265
    %2740 = vmatpush1.bf16.msra.mxu0 %v2264
    %2741 = vmatprep.subr.bf16.mxu0 %v2269
    %2742 = vmatpush1.bf16.msra.mxu0 %v2268
    %2743 = vmatprep.subr.bf16.mxu0 %v2273
    %2744 = vmatpush1.bf16.msra.mxu0 %v2272
    %2745 = vmatprep.subr.bf16.mxu0 %v2277
    %2746 = vmatpush1.bf16.msra.mxu0 %v2276
    %2747 = vmatprep.subr.bf16.mxu0 %v2281
    %2748 = vmatpush1.bf16.msra.mxu0 %v2280
    %2749 = vmatprep.subr.bf16.mxu0 %v2285
    %2750 = vmatpush1.bf16.msra.mxu0 %v2284
    %2751 = vmatprep.subr.bf16.mxu0 %v2289
    %2752 = vmatpush1.bf16.msra.mxu0 %v2288
    %2753 = vmatprep.subr.bf16.mxu0 %v2293
    %2754 = vmatpush1.bf16.msra.mxu0 %v2292
    %2755 = vmatprep.subr.bf16.mxu0 %v2297
    %2756 = vmatpush1.bf16.msra.mxu0 %v2296
    %2757 = vmatprep.mubr.bf16.mxu0 %v1121
    %2758 = vmatmul.mubr.bf16.gmra.mrb[0].mxu0 %v1120
    %v2759 = vpop.f32.mrb[0].mxu0
    %v2760 = vadd.f32 %v2719, %v2759
    %v2761 = vpop.f32.mrb[0].mxu0
    %v2762 = vadd.f32 %v2721, %v2761
    %v2763 = vpop.f32.mrb[0].mxu0
    %v2764 = vpop.f32.mrb[0].mxu0
    %2765 = vdwg.mxu0
    %2766 = vmatprep.subr.bf16.mxu0 %v2301
    %2767 = vmatpush1.bf16.msra.mxu0 %v2300
    %2768 = vmatprep.subr.bf16.mxu0 %v2305
    %2769 = vmatpush1.bf16.msra.mxu0 %v2304
    %2770 = vmatprep.subr.bf16.mxu0 %v2309
    %2771 = vmatpush1.bf16.msra.mxu0 %v2308
    %2772 = vmatprep.subr.bf16.mxu0 %v2313
    %2773 = vmatpush1.bf16.msra.mxu0 %v2312
    %2774 = vmatprep.subr.bf16.mxu0 %v2317
    %2775 = vmatpush1.bf16.msra.mxu0 %v2316
    %2776 = vmatprep.subr.bf16.mxu0 %v2321
    %2777 = vmatpush1.bf16.msra.mxu0 %v2320
    %2778 = vmatprep.subr.bf16.mxu0 %v2325
    %2779 = vmatpush1.bf16.msra.mxu0 %v2324
    %2780 = vmatprep.subr.bf16.mxu0 %v2329
    %2781 = vmatpush1.bf16.msra.mxu0 %v2328
    %2782 = vmatprep.subr.bf16.mxu0 %v2333
    %2783 = vmatpush1.bf16.msra.mxu0 %v2332
    %2784 = vmatprep.subr.bf16.mxu0 %v2337
    %2785 = vmatpush1.bf16.msra.mxu0 %v2336
    %2786 = vmatprep.subr.bf16.mxu0 %v2341
    %2787 = vmatpush1.bf16.msra.mxu0 %v2340
    %2788 = vmatprep.subr.bf16.mxu0 %v2345
    %2789 = vmatpush1.bf16.msra.mxu0 %v2344
    %2790 = vmatprep.subr.bf16.mxu0 %v2349
    %2791 = vmatpush1.bf16.msra.mxu0 %v2348
    %2792 = vmatprep.subr.bf16.mxu0 %v2353
    %2793 = vmatpush1.bf16.msra.mxu0 %v2352
    %2794 = vmatprep.subr.bf16.mxu0 %v2357
    %2795 = vmatpush1.bf16.msra.mxu0 %v2356
    %2796 = vmatprep.subr.bf16.mxu0 %v2361
    %2797 = vmatpush1.bf16.msra.mxu0 %v2360
    %2798 = vmatprep.mubr.bf16.mxu0 %v1123
    %2799 = vmatmul.mubr.bf16.gmra.mrb[0].mxu0 %v1122
    %v2800 = vpop.f32.mrb[0].mxu0
    %v2801 = vadd.f32 %v2760, %v2800
    %v2802 = vpop.f32.mrb[0].mxu0
    %v2803 = vadd.f32 %v2762, %v2802
    %v2804 = vpop.f32.mrb[0].mxu0
    %v2805 = vpop.f32.mrb[0].mxu0
    %2806 = vdwg.mxu0
    %2807 = vmatprep.subr.bf16.mxu0 %v2365
    %2808 = vmatpush1.bf16.msra.mxu0 %v2364
    %2809 = vmatprep.subr.bf16.mxu0 %v2369
    %2810 = vmatpush1.bf16.msra.mxu0 %v2368
    %2811 = vmatprep.subr.bf16.mxu0 %v2373
    %2812 = vmatpush1.bf16.msra.mxu0 %v2372
    %2813 = vmatprep.subr.bf16.mxu0 %v2377
    %2814 = vmatpush1.bf16.msra.mxu0 %v2376
    %2815 = vmatprep.subr.bf16.mxu0 %v2381
    %2816 = vmatpush1.bf16.msra.mxu0 %v2380
    %2817 = vmatprep.subr.bf16.mxu0 %v2385
    %2818 = vmatpush1.bf16.msra.mxu0 %v2384
    %2819 = vmatprep.subr.bf16.mxu0 %v2389
    %2820 = vmatpush1.bf16.msra.mxu0 %v2388
    %2821 = vmatprep.subr.bf16.mxu0 %v2393
    %2822 = vmatpush1.bf16.msra.mxu0 %v2392
    %2823 = vmatprep.subr.bf16.mxu0 %v2397
    %2824 = vmatpush1.bf16.msra.mxu0 %v2396
    %2825 = vmatprep.subr.bf16.mxu0 %v2401
    %2826 = vmatpush1.bf16.msra.mxu0 %v2400
    %2827 = vmatprep.subr.bf16.mxu0 %v2405
    %2828 = vmatpush1.bf16.msra.mxu0 %v2404
    %2829 = vmatprep.subr.bf16.mxu0 %v2409
    %2830 = vmatpush1.bf16.msra.mxu0 %v2408
    %2831 = vmatprep.subr.bf16.mxu0 %v2413
    %2832 = vmatpush1.bf16.msra.mxu0 %v2412
    %2833 = vmatprep.subr.bf16.mxu0 %v2417
    %2834 = vmatpush1.bf16.msra.mxu0 %v2416
    %2835 = vmatprep.subr.bf16.mxu0 %v2421
    %2836 = vmatpush1.bf16.msra.mxu0 %v2420
    %2837 = vmatprep.subr.bf16.mxu0 %v2425
    %2838 = vmatpush1.bf16.msra.mxu0 %v2424
    %2839 = vmatprep.mubr.bf16.mxu0 %v1125
    %2840 = vmatmul.mubr.bf16.gmra.mrb[0].mxu0 %v1124
    %v2841 = vpop.f32.mrb[0].mxu0
    %v2842 = vadd.f32 %v2801, %v2841
    %v2843 = vpop.f32.mrb[0].mxu0
    %v2844 = vadd.f32 %v2803, %v2843
    %v2845 = vpop.f32.mrb[0].mxu0
    %v2846 = vpop.f32.mrb[0].mxu0
    %2847 = vdwg.mxu0
    %2848 = vmatprep.subr.bf16.mxu0 %v2175
    %2849 = vmatpush1.bf16.msra.mxu0 %v2174
    %2850 = vmatprep.subr.bf16.mxu0 %v2179
    %2851 = vmatpush1.bf16.msra.mxu0 %v2178
    %2852 = vmatprep.subr.bf16.mxu0 %v2183
    %2853 = vmatpush1.bf16.msra.mxu0 %v2182
    %2854 = vmatprep.subr.bf16.mxu0 %v2187
    %2855 = vmatpush1.bf16.msra.mxu0 %v2186
    %2856 = vmatprep.subr.bf16.mxu0 %v2191
    %2857 = vmatpush1.bf16.msra.mxu0 %v2190
    %2858 = vmatprep.subr.bf16.mxu0 %v2195
    %2859 = vmatpush1.bf16.msra.mxu0 %v2194
    %2860 = vmatprep.subr.bf16.mxu0 %v2199
    %2861 = vmatpush1.bf16.msra.mxu0 %v2198
    %2862 = vmatprep.subr.bf16.mxu0 %v2203
    %2863 = vmatpush1.bf16.msra.mxu0 %v2202
    %2864 = vmatprep.subr.bf16.mxu0 %v2207
    %2865 = vmatpush1.bf16.msra.mxu0 %v2206
    %2866 = vmatprep.subr.bf16.mxu0 %v2211
    %2867 = vmatpush1.bf16.msra.mxu0 %v2210
    %2868 = vmatprep.subr.bf16.mxu0 %v2215
    %2869 = vmatpush1.bf16.msra.mxu0 %v2214
    %2870 = vmatprep.subr.bf16.mxu0 %v2219
    %2871 = vmatpush1.bf16.msra.mxu0 %v2218
    %2872 = vmatprep.subr.bf16.mxu0 %v2223
    %2873 = vmatpush1.bf16.msra.mxu0 %v2222
    %2874 = vmatprep.subr.bf16.mxu0 %v2227
    %2875 = vmatpush1.bf16.msra.mxu0 %v2226
    %2876 = vmatprep.subr.bf16.mxu0 %v2231
    %2877 = vmatpush1.bf16.msra.mxu0 %v2230
    %2878 = vmatprep.subr.bf16.mxu0 %v2235
    %2879 = vmatpush1.bf16.msra.mxu0 %v2234
    %2880 = vmatprep.mubr.bf16.mxu0 %v1119
    %2881 = vmatmul.mubr.bf16.gmra.mrb[0].mxu0 %v1118
    %v2882 = vpop.f32.mrb[0].mxu0
    %v2883 = vadd.f32 %v1395, %v2882
    %v2884 = vpop.f32.mrb[0].mxu0
    %v2885 = vadd.f32 %v1399, %v2884
    %v2886 = vpop.f32.mrb[0].mxu0
    %v2887 = vpop.f32.mrb[0].mxu0
    %2888 = vdwg.mxu0
    %2889 = vmatprep.subr.bf16.mxu0 %v2239
    %2890 = vmatpush1.bf16.msra.mxu0 %v2238
    %2891 = vmatprep.subr.bf16.mxu0 %v2243
    %2892 = vmatpush1.bf16.msra.mxu0 %v2242
    %2893 = vmatprep.subr.bf16.mxu0 %v2247
    %2894 = vmatpush1.bf16.msra.mxu0 %v2246
    %2895 = vmatprep.subr.bf16.mxu0 %v2251
    %2896 = vmatpush1.bf16.msra.mxu0 %v2250
    %2897 = vmatprep.subr.bf16.mxu0 %v2255
    %2898 = vmatpush1.bf16.msra.mxu0 %v2254
    %2899 = vmatprep.subr.bf16.mxu0 %v2259
    %2900 = vmatpush1.bf16.msra.mxu0 %v2258
    %2901 = vmatprep.subr.bf16.mxu0 %v2263
    %2902 = vmatpush1.bf16.msra.mxu0 %v2262
    %2903 = vmatprep.subr.bf16.mxu0 %v2267
    %2904 = vmatpush1.bf16.msra.mxu0 %v2266
    %2905 = vmatprep.subr.bf16.mxu0 %v2271
    %2906 = vmatpush1.bf16.msra.mxu0 %v2270
    %2907 = vmatprep.subr.bf16.mxu0 %v2275
    %2908 = vmatpush1.bf16.msra.mxu0 %v2274
    %2909 = vmatprep.subr.bf16.mxu0 %v2279
    %2910 = vmatpush1.bf16.msra.mxu0 %v2278
    %2911 = vmatprep.subr.bf16.mxu0 %v2283
    %2912 = vmatpush1.bf16.msra.mxu0 %v2282
    %2913 = vmatprep.subr.bf16.mxu0 %v2287
    %2914 = vmatpush1.bf16.msra.mxu0 %v2286
    %2915 = vmatprep.subr.bf16.mxu0 %v2291
    %2916 = vmatpush1.bf16.msra.mxu0 %v2290
    %2917 = vmatprep.subr.bf16.mxu0 %v2295
    %2918 = vmatpush1.bf16.msra.mxu0 %v2294
    %2919 = vmatprep.subr.bf16.mxu0 %v2299
    %2920 = vmatpush1.bf16.msra.mxu0 %v2298
    %2921 = vmatprep.mubr.bf16.mxu0 %v1121
    %2922 = vmatmul.mubr.bf16.gmra.mrb[0].mxu0 %v1120
    %v2923 = vpop.f32.mrb[0].mxu0
    %v2924 = vadd.f32 %v2883, %v2923
    %v2925 = vpop.f32.mrb[0].mxu0
    %v2926 = vadd.f32 %v2885, %v2925
    %v2927 = vpop.f32.mrb[0].mxu0
    %v2928 = vpop.f32.mrb[0].mxu0
    %2929 = vdwg.mxu0
    %2930 = vmatprep.subr.bf16.mxu0 %v2303
    %2931 = vmatpush1.bf16.msra.mxu0 %v2302
    %2932 = vmatprep.subr.bf16.mxu0 %v2307
    %2933 = vmatpush1.bf16.msra.mxu0 %v2306
    %2934 = vmatprep.subr.bf16.mxu0 %v2311
    %2935 = vmatpush1.bf16.msra.mxu0 %v2310
    %2936 = vmatprep.subr.bf16.mxu0 %v2315
    %2937 = vmatpush1.bf16.msra.mxu0 %v2314
    %2938 = vmatprep.subr.bf16.mxu0 %v2319
    %2939 = vmatpush1.bf16.msra.mxu0 %v2318
    %2940 = vmatprep.subr.bf16.mxu0 %v2323
    %2941 = vmatpush1.bf16.msra.mxu0 %v2322
    %2942 = vmatprep.subr.bf16.mxu0 %v2327
    %2943 = vmatpush1.bf16.msra.mxu0 %v2326
    %2944 = vmatprep.subr.bf16.mxu0 %v2331
    %2945 = vmatpush1.bf16.msra.mxu0 %v2330
    %2946 = vmatprep.subr.bf16.mxu0 %v2335
    %2947 = vmatpush1.bf16.msra.mxu0 %v2334
    %2948 = vmatprep.subr.bf16.mxu0 %v2339
    %2949 = vmatpush1.bf16.msra.mxu0 %v2338
    %2950 = vmatprep.subr.bf16.mxu0 %v2343
    %2951 = vmatpush1.bf16.msra.mxu0 %v2342
    %2952 = vmatprep.subr.bf16.mxu0 %v2347
    %2953 = vmatpush1.bf16.msra.mxu0 %v2346
    %2954 = vmatprep.subr.bf16.mxu0 %v2351
    %2955 = vmatpush1.bf16.msra.mxu0 %v2350
    %2956 = vmatprep.subr.bf16.mxu0 %v2355
    %2957 = vmatpush1.bf16.msra.mxu0 %v2354
    %2958 = vmatprep.subr.bf16.mxu0 %v2359
    %2959 = vmatpush1.bf16.msra.mxu0 %v2358
    %2960 = vmatprep.subr.bf16.mxu0 %v2363
    %2961 = vmatpush1.bf16.msra.mxu0 %v2362
    %2962 = vmatprep.mubr.bf16.mxu0 %v1123
    %2963 = vmatmul.mubr.bf16.gmra.mrb[0].mxu0 %v1122
    %v2964 = vpop.f32.mrb[0].mxu0
    %v2965 = vadd.f32 %v2924, %v2964
    %v2966 = vpop.f32.mrb[0].mxu0
    %v2967 = vadd.f32 %v2926, %v2966
    %v2968 = vpop.f32.mrb[0].mxu0
    %v2969 = vpop.f32.mrb[0].mxu0
    %2970 = vdwg.mxu0
    %2971 = vmatprep.subr.bf16.mxu0 %v2367
    %2972 = vmatpush1.bf16.msra.mxu0 %v2366
    %2973 = vmatprep.subr.bf16.mxu0 %v2371
    %2974 = vmatpush1.bf16.msra.mxu0 %v2370
    %2975 = vmatprep.subr.bf16.mxu0 %v2375
    %2976 = vmatpush1.bf16.msra.mxu0 %v2374
    %2977 = vmatprep.subr.bf16.mxu0 %v2379
    %2978 = vmatpush1.bf16.msra.mxu0 %v2378
    %2979 = vmatprep.subr.bf16.mxu0 %v2383
    %2980 = vmatpush1.bf16.msra.mxu0 %v2382
    %2981 = vmatprep.subr.bf16.mxu0 %v2387
    %2982 = vmatpush1.bf16.msra.mxu0 %v2386
    %2983 = vmatprep.subr.bf16.mxu0 %v2391
    %2984 = vmatpush1.bf16.msra.mxu0 %v2390
    %2985 = vmatprep.subr.bf16.mxu0 %v2395
    %2986 = vmatpush1.bf16.msra.mxu0 %v2394
    %2987 = vmatprep.subr.bf16.mxu0 %v2399
    %2988 = vmatpush1.bf16.msra.mxu0 %v2398
    %2989 = vmatprep.subr.bf16.mxu0 %v2403
    %2990 = vmatpush1.bf16.msra.mxu0 %v2402
    %2991 = vmatprep.subr.bf16.mxu0 %v2407
    %2992 = vmatpush1.bf16.msra.mxu0 %v2406
    %2993 = vmatprep.subr.bf16.mxu0 %v2411
    %2994 = vmatpush1.bf16.msra.mxu0 %v2410
    %2995 = vmatprep.subr.bf16.mxu0 %v2415
    %2996 = vmatpush1.bf16.msra.mxu0 %v2414
    %2997 = vmatprep.subr.bf16.mxu0 %v2419
    %2998 = vmatpush1.bf16.msra.mxu0 %v2418
    %2999 = vmatprep.subr.bf16.mxu0 %v2423
    %3000 = vmatpush1.bf16.msra.mxu0 %v2422
    %3001 = vmatprep.subr.bf16.mxu0 %v2427
    %3002 = vmatpush1.bf16.msra.mxu0 %v2426
    %3003 = vmatprep.mubr.bf16.mxu0 %v1125
    %3004 = vmatmul.mubr.bf16.gmra.mrb[0].mxu0 %v1124
    %v3005 = vpop.f32.mrb[0].mxu0
    %v3006 = vadd.f32 %v2965, %v3005
    %v3007 = vpop.f32.mrb[0].mxu0
    %v3008 = vadd.f32 %v2967, %v3007
    %v3009 = vpop.f32.mrb[0].mxu0
    %v3010 = vpop.f32.mrb[0].mxu0
    %3011 = vdwg.mxu0
    %v3012 = vmax.f32 %v2842, 0.0
    %v3013 = vmax.f32 %v2844, 0.0
    %v3014 = vmax.f32 %v3006, 0.0
    %v3015 = vmax.f32 %v3008, 0.0
    %v3016 = vpack.c.bf16 %v3012, %v3012
    %v3017 = vpack.c.bf16 %v3013, %v3013
    %v3018 = vpack.c.bf16 %v3014, %v3014
    %v3019 = vpack.c.bf16 %v3015, %v3015
    %v3020 = vld [vmem:[#allocation6] sm:$0xff]
    %v3021 = vld [vmem:[#allocation6 + $0x8] sm:$0xff]
    %v3022 = vld [vmem:[#allocation6 + $0x10] sm:$0xff]
    %v3023 = vld [vmem:[#allocation6 + $0x18] sm:$0xff]
    %v3024 = vld [vmem:[#allocation6 + $0x20] sm:$0xff]
    %v3025 = vld [vmem:[#allocation6 + $0x28] sm:$0xff]
    %v3026 = vld [vmem:[#allocation6 + $0x30] sm:$0xff]
    %v3027 = vld [vmem:[#allocation6 + $0x38] sm:$0xff]
    %v3028 = vld [vmem:[#allocation6 + $0x40] sm:$0xff]
    %v3029 = vld [vmem:[#allocation6 + $0x48] sm:$0xff]
    %v3030 = vld [vmem:[#allocation6 + $0x50] sm:$0xff]
    %v3031 = vld [vmem:[#allocation6 + $0x58] sm:$0xff]
    %v3032 = vld [vmem:[#allocation6 + $0x60] sm:$0xff]
    %v3033 = vld [vmem:[#allocation6 + $0x68] sm:$0xff]
    %v3034 = vld [vmem:[#allocation6 + $0x70] sm:$0xff]
    %v3035 = vld [vmem:[#allocation6 + $0x78] sm:$0xff]
    %v3036 = vld [vmem:[#allocation6 + $0x80] sm:$0xff]
    %v3037 = vld [vmem:[#allocation6 + $0x88] sm:$0xff]
    %v3038 = vld [vmem:[#allocation6 + $0x90] sm:$0xff]
    %v3039 = vld [vmem:[#allocation6 + $0x98] sm:$0xff]
    %v3040 = vld [vmem:[#allocation6 + $0xa0] sm:$0xff]
    %v3041 = vld [vmem:[#allocation6 + $0xa8] sm:$0xff]
    %v3042 = vld [vmem:[#allocation6 + $0xb0] sm:$0xff]
    %v3043 = vld [vmem:[#allocation6 + $0xb8] sm:$0xff]
    %v3044 = vld [vmem:[#allocation6 + $0xc0] sm:$0xff]
    %v3045 = vld [vmem:[#allocation6 + $0xc8] sm:$0xff]
    %v3046 = vld [vmem:[#allocation6 + $0xd0] sm:$0xff]
    %v3047 = vld [vmem:[#allocation6 + $0xd8] sm:$0xff]
    %v3048 = vld [vmem:[#allocation6 + $0xe0] sm:$0xff]
    %v3049 = vld [vmem:[#allocation6 + $0xe8] sm:$0xff]
    %v3050 = vld [vmem:[#allocation6 + $0xf0] sm:$0xff]
    %v3051 = vld [vmem:[#allocation6 + $0xf8] sm:$0xff]
    %v3052 = vld [vmem:[#allocation6 + $0x100] sm:$0xff]
    %v3053 = vld [vmem:[#allocation6 + $0x108] sm:$0xff]
    %v3054 = vld [vmem:[#allocation6 + $0x110] sm:$0xff]
    %v3055 = vld [vmem:[#allocation6 + $0x118] sm:$0xff]
    %v3056 = vld [vmem:[#allocation6 + $0x120] sm:$0xff]
    %v3057 = vld [vmem:[#allocation6 + $0x128] sm:$0xff]
    %v3058 = vld [vmem:[#allocation6 + $0x130] sm:$0xff]
    %v3059 = vld [vmem:[#allocation6 + $0x138] sm:$0xff]
    %v3060 = vld [vmem:[#allocation6 + $0x140] sm:$0xff]
    %v3061 = vld [vmem:[#allocation6 + $0x148] sm:$0xff]
    %v3062 = vld [vmem:[#allocation6 + $0x150] sm:$0xff]
    %v3063 = vld [vmem:[#allocation6 + $0x158] sm:$0xff]
    %v3064 = vld [vmem:[#allocation6 + $0x160] sm:$0xff]
    %v3065 = vld [vmem:[#allocation6 + $0x168] sm:$0xff]
    %v3066 = vld [vmem:[#allocation6 + $0x170] sm:$0xff]
    %v3067 = vld [vmem:[#allocation6 + $0x178] sm:$0xff]
    %v3068 = vld [vmem:[#allocation6 + $0x180] sm:$0xff]
    %v3069 = vld [vmem:[#allocation6 + $0x188] sm:$0xff]
    %v3070 = vld [vmem:[#allocation6 + $0x190] sm:$0xff]
    %v3071 = vld [vmem:[#allocation6 + $0x198] sm:$0xff]
    %v3072 = vld [vmem:[#allocation6 + $0x1a0] sm:$0xff]
    %v3073 = vld [vmem:[#allocation6 + $0x1a8] sm:$0xff]
    %v3074 = vld [vmem:[#allocation6 + $0x1b0] sm:$0xff]
    %v3075 = vld [vmem:[#allocation6 + $0x1b8] sm:$0xff]
    %v3076 = vld [vmem:[#allocation6 + $0x1c0] sm:$0xff]
    %v3077 = vld [vmem:[#allocation6 + $0x1c8] sm:$0xff]
    %v3078 = vld [vmem:[#allocation6 + $0x1d0] sm:$0xff]
    %v3079 = vld [vmem:[#allocation6 + $0x1d8] sm:$0xff]
    %v3080 = vld [vmem:[#allocation6 + $0x1e0] sm:$0xff]
    %v3081 = vld [vmem:[#allocation6 + $0x1e8] sm:$0xff]
    %v3082 = vld [vmem:[#allocation6 + $0x1f0] sm:$0xff]
    %v3083 = vld [vmem:[#allocation6 + $0x1f8] sm:$0xff]
    %v3084 = vld [vmem:[%s6] sm:$0x3]
    %v3086 = vlaneseq
    %v3087 = vshrl.u32 %v3086, 7
    %v3088 = vsub.s32 0, %v3087
    %v3089 = vrot.slane %v3084, %v3088
    %v3090 = vlaneseq
    %v3091 = vshrl.u32 %v3090, 7
    %v3092 = vsub.s32 1, %v3091
    %v3093 = vrot.slane %v3084, %v3092
    %v3160 = vunpack.c.l.b16 %v3020
    %v3161 = vunpack.c.h.b16 %v3020
    %v3162 = vunpack.c.l.b16 %v3021
    %v3163 = vunpack.c.h.b16 %v3021
    %v3164 = vunpack.c.l.b16 %v3022
    %v3165 = vunpack.c.h.b16 %v3022
    %v3166 = vunpack.c.l.b16 %v3023
    %v3167 = vunpack.c.h.b16 %v3023
    %v3168 = vunpack.c.l.b16 %v3024
    %v3169 = vunpack.c.h.b16 %v3024
    %v3170 = vunpack.c.l.b16 %v3025
    %v3171 = vunpack.c.h.b16 %v3025
    %v3172 = vunpack.c.l.b16 %v3026
    %v3173 = vunpack.c.h.b16 %v3026
    %v3174 = vunpack.c.l.b16 %v3027
    %v3175 = vunpack.c.h.b16 %v3027
    %v3176 = vunpack.c.l.b16 %v3028
    %v3177 = vunpack.c.h.b16 %v3028
    %v3178 = vunpack.c.l.b16 %v3029
    %v3179 = vunpack.c.h.b16 %v3029
    %v3180 = vunpack.c.l.b16 %v3030
    %v3181 = vunpack.c.h.b16 %v3030
    %v3182 = vunpack.c.l.b16 %v3031
    %v3183 = vunpack.c.h.b16 %v3031
    %v3184 = vunpack.c.l.b16 %v3032
    %v3185 = vunpack.c.h.b16 %v3032
    %v3186 = vunpack.c.l.b16 %v3033
    %v3187 = vunpack.c.h.b16 %v3033
    %v3188 = vunpack.c.l.b16 %v3034
    %v3189 = vunpack.c.h.b16 %v3034
    %v3190 = vunpack.c.l.b16 %v3035
    %v3191 = vunpack.c.h.b16 %v3035
    %v3192 = vunpack.c.l.b16 %v3036
    %v3193 = vunpack.c.h.b16 %v3036
    %v3194 = vunpack.c.l.b16 %v3037
    %v3195 = vunpack.c.h.b16 %v3037
    %v3196 = vunpack.c.l.b16 %v3038
    %v3197 = vunpack.c.h.b16 %v3038
    %v3198 = vunpack.c.l.b16 %v3039
    %v3199 = vunpack.c.h.b16 %v3039
    %v3200 = vunpack.c.l.b16 %v3040
    %v3201 = vunpack.c.h.b16 %v3040
    %v3202 = vunpack.c.l.b16 %v3041
    %v3203 = vunpack.c.h.b16 %v3041
    %v3204 = vunpack.c.l.b16 %v3042
    %v3205 = vunpack.c.h.b16 %v3042
    %v3206 = vunpack.c.l.b16 %v3043
    %v3207 = vunpack.c.h.b16 %v3043
    %v3208 = vunpack.c.l.b16 %v3044
    %v3209 = vunpack.c.h.b16 %v3044
    %v3210 = vunpack.c.l.b16 %v3045
    %v3211 = vunpack.c.h.b16 %v3045
    %v3212 = vunpack.c.l.b16 %v3046
    %v3213 = vunpack.c.h.b16 %v3046
    %v3214 = vunpack.c.l.b16 %v3047
    %v3215 = vunpack.c.h.b16 %v3047
    %v3216 = vunpack.c.l.b16 %v3048
    %v3217 = vunpack.c.h.b16 %v3048
    %v3218 = vunpack.c.l.b16 %v3049
    %v3219 = vunpack.c.h.b16 %v3049
    %v3220 = vunpack.c.l.b16 %v3050
    %v3221 = vunpack.c.h.b16 %v3050
    %v3222 = vunpack.c.l.b16 %v3051
    %v3223 = vunpack.c.h.b16 %v3051
    %v3224 = vunpack.c.l.b16 %v3052
    %v3225 = vunpack.c.h.b16 %v3052
    %v3226 = vunpack.c.l.b16 %v3053
    %v3227 = vunpack.c.h.b16 %v3053
    %v3228 = vunpack.c.l.b16 %v3054
    %v3229 = vunpack.c.h.b16 %v3054
    %v3230 = vunpack.c.l.b16 %v3055
    %v3231 = vunpack.c.h.b16 %v3055
    %v3232 = vunpack.c.l.b16 %v3056
    %v3233 = vunpack.c.h.b16 %v3056
    %v3234 = vunpack.c.l.b16 %v3057
    %v3235 = vunpack.c.h.b16 %v3057
    %v3236 = vunpack.c.l.b16 %v3058
    %v3237 = vunpack.c.h.b16 %v3058
    %v3238 = vunpack.c.l.b16 %v3059
    %v3239 = vunpack.c.h.b16 %v3059
    %v3240 = vunpack.c.l.b16 %v3060
    %v3241 = vunpack.c.h.b16 %v3060
    %v3242 = vunpack.c.l.b16 %v3061
    %v3243 = vunpack.c.h.b16 %v3061
    %v3244 = vunpack.c.l.b16 %v3062
    %v3245 = vunpack.c.h.b16 %v3062
    %v3246 = vunpack.c.l.b16 %v3063
    %v3247 = vunpack.c.h.b16 %v3063
    %v3248 = vunpack.c.l.b16 %v3064
    %v3249 = vunpack.c.h.b16 %v3064
    %v3250 = vunpack.c.l.b16 %v3065
    %v3251 = vunpack.c.h.b16 %v3065
    %v3252 = vunpack.c.l.b16 %v3066
    %v3253 = vunpack.c.h.b16 %v3066
    %v3254 = vunpack.c.l.b16 %v3067
    %v3255 = vunpack.c.h.b16 %v3067
    %v3256 = vunpack.c.l.b16 %v3068
    %v3257 = vunpack.c.h.b16 %v3068
    %v3258 = vunpack.c.l.b16 %v3069
    %v3259 = vunpack.c.h.b16 %v3069
    %v3260 = vunpack.c.l.b16 %v3070
    %v3261 = vunpack.c.h.b16 %v3070
    %v3262 = vunpack.c.l.b16 %v3071
    %v3263 = vunpack.c.h.b16 %v3071
    %v3264 = vunpack.c.l.b16 %v3072
    %v3265 = vunpack.c.h.b16 %v3072
    %v3266 = vunpack.c.l.b16 %v3073
    %v3267 = vunpack.c.h.b16 %v3073
    %v3268 = vunpack.c.l.b16 %v3074
    %v3269 = vunpack.c.h.b16 %v3074
    %v3270 = vunpack.c.l.b16 %v3075
    %v3271 = vunpack.c.h.b16 %v3075
    %v3272 = vunpack.c.l.b16 %v3076
    %v3273 = vunpack.c.h.b16 %v3076
    %v3274 = vunpack.c.l.b16 %v3077
    %v3275 = vunpack.c.h.b16 %v3077
    %v3276 = vunpack.c.l.b16 %v3078
    %v3277 = vunpack.c.h.b16 %v3078
    %v3278 = vunpack.c.l.b16 %v3079
    %v3279 = vunpack.c.h.b16 %v3079
    %v3280 = vunpack.c.l.b16 %v3080
    %v3281 = vunpack.c.h.b16 %v3080
    %v3282 = vunpack.c.l.b16 %v3081
    %v3283 = vunpack.c.h.b16 %v3081
    %v3284 = vunpack.c.l.b16 %v3082
    %v3285 = vunpack.c.h.b16 %v3082
    %v3286 = vunpack.c.l.b16 %v3083
    %v3287 = vunpack.c.h.b16 %v3083
    %v3288 = vpack.c.b16 %v3162, %v3160
    %v3289 = vpack.c.b16 %v3163, %v3161
    %v3290 = vpack.c.b16 %v3166, %v3164
    %v3291 = vpack.c.b16 %v3167, %v3165
    %v3292 = vpack.c.b16 %v3170, %v3168
    %v3293 = vpack.c.b16 %v3171, %v3169
    %v3294 = vpack.c.b16 %v3174, %v3172
    %v3295 = vpack.c.b16 %v3175, %v3173
    %v3296 = vpack.c.b16 %v3178, %v3176
    %v3297 = vpack.c.b16 %v3179, %v3177
    %v3298 = vpack.c.b16 %v3182, %v3180
    %v3299 = vpack.c.b16 %v3183, %v3181
    %v3300 = vpack.c.b16 %v3186, %v3184
    %v3301 = vpack.c.b16 %v3187, %v3185
    %v3302 = vpack.c.b16 %v3190, %v3188
    %v3303 = vpack.c.b16 %v3191, %v3189
    %v3304 = vpack.c.b16 %v3194, %v3192
    %v3305 = vpack.c.b16 %v3195, %v3193
    %v3306 = vpack.c.b16 %v3198, %v3196
    %v3307 = vpack.c.b16 %v3199, %v3197
    %v3308 = vpack.c.b16 %v3202, %v3200
    %v3309 = vpack.c.b16 %v3203, %v3201
    %v3310 = vpack.c.b16 %v3206, %v3204
    %v3311 = vpack.c.b16 %v3207, %v3205
    %v3312 = vpack.c.b16 %v3210, %v3208
    %v3313 = vpack.c.b16 %v3211, %v3209
    %v3314 = vpack.c.b16 %v3214, %v3212
    %v3315 = vpack.c.b16 %v3215, %v3213
    %v3316 = vpack.c.b16 %v3218, %v3216
    %v3317 = vpack.c.b16 %v3219, %v3217
    %v3318 = vpack.c.b16 %v3222, %v3220
    %v3319 = vpack.c.b16 %v3223, %v3221
    %v3320 = vpack.c.b16 %v3226, %v3224
    %v3321 = vpack.c.b16 %v3227, %v3225
    %v3322 = vpack.c.b16 %v3230, %v3228
    %v3323 = vpack.c.b16 %v3231, %v3229
    %v3324 = vpack.c.b16 %v3234, %v3232
    %v3325 = vpack.c.b16 %v3235, %v3233
    %v3326 = vpack.c.b16 %v3238, %v3236
    %v3327 = vpack.c.b16 %v3239, %v3237
    %v3328 = vpack.c.b16 %v3242, %v3240
    %v3329 = vpack.c.b16 %v3243, %v3241
    %v3330 = vpack.c.b16 %v3246, %v3244
    %v3331 = vpack.c.b16 %v3247, %v3245
    %v3332 = vpack.c.b16 %v3250, %v3248
    %v3333 = vpack.c.b16 %v3251, %v3249
    %v3334 = vpack.c.b16 %v3254, %v3252
    %v3335 = vpack.c.b16 %v3255, %v3253
    %v3336 = vpack.c.b16 %v3258, %v3256
    %v3337 = vpack.c.b16 %v3259, %v3257
    %v3338 = vpack.c.b16 %v3262, %v3260
    %v3339 = vpack.c.b16 %v3263, %v3261
    %v3340 = vpack.c.b16 %v3266, %v3264
    %v3341 = vpack.c.b16 %v3267, %v3265
    %v3342 = vpack.c.b16 %v3270, %v3268
    %v3343 = vpack.c.b16 %v3271, %v3269
    %v3344 = vpack.c.b16 %v3274, %v3272
    %v3345 = vpack.c.b16 %v3275, %v3273
    %v3346 = vpack.c.b16 %v3278, %v3276
    %v3347 = vpack.c.b16 %v3279, %v3277
    %v3348 = vpack.c.b16 %v3282, %v3280
    %v3349 = vpack.c.b16 %v3283, %v3281
    %v3350 = vpack.c.b16 %v3286, %v3284
    %v3351 = vpack.c.b16 %v3287, %v3285
    %3416 = vmatprep.subr.bf16.mxu0 %v3289
    %3417 = vmatpush1.bf16.msra.mxu0 %v3288
    %3418 = vmatprep.subr.bf16.mxu0 %v3291
    %3419 = vmatpush1.bf16.msra.mxu0 %v3290
    %3420 = vmatprep.subr.bf16.mxu0 %v3293
    %3421 = vmatpush1.bf16.msra.mxu0 %v3292
    %3422 = vmatprep.subr.bf16.mxu0 %v3295
    %3423 = vmatpush1.bf16.msra.mxu0 %v3294
    %3424 = vmatprep.subr.bf16.mxu0 %v3297
    %3425 = vmatpush1.bf16.msra.mxu0 %v3296
    %3426 = vmatprep.subr.bf16.mxu0 %v3299
    %3427 = vmatpush1.bf16.msra.mxu0 %v3298
    %3428 = vmatprep.subr.bf16.mxu0 %v3301
    %3429 = vmatpush1.bf16.msra.mxu0 %v3300
    %3430 = vmatprep.subr.bf16.mxu0 %v3303
    %3431 = vmatpush1.bf16.msra.mxu0 %v3302
    %3432 = vmatprep.subr.bf16.mxu0 %v3305
    %3433 = vmatpush1.bf16.msra.mxu0 %v3304
    %3434 = vmatprep.subr.bf16.mxu0 %v3307
    %3435 = vmatpush1.bf16.msra.mxu0 %v3306
    %3436 = vmatprep.subr.bf16.mxu0 %v3309
    %3437 = vmatpush1.bf16.msra.mxu0 %v3308
    %3438 = vmatprep.subr.bf16.mxu0 %v3311
    %3439 = vmatpush1.bf16.msra.mxu0 %v3310
    %3440 = vmatprep.subr.bf16.mxu0 %v3313
    %3441 = vmatpush1.bf16.msra.mxu0 %v3312
    %3442 = vmatprep.subr.bf16.mxu0 %v3315
    %3443 = vmatpush1.bf16.msra.mxu0 %v3314
    %3444 = vmatprep.subr.bf16.mxu0 %v3317
    %3445 = vmatpush1.bf16.msra.mxu0 %v3316
    %3446 = vmatprep.subr.bf16.mxu0 %v3319
    %3447 = vmatpush1.bf16.msra.mxu0 %v3318
    %3448 = vmatprep.mubr.bf16.mxu0 %v3017
    %3449 = vmatmul.mubr.bf16.gmra.mrb[0].mxu0 %v3016
    %v3450 = vpop.f32.mrb[0].mxu0
    %v3451 = vadd.f32 %v3089, %v3450
    %v3452 = vpop.f32.mrb[0].mxu0
    %v3453 = vadd.f32 %v3093, %v3452
    %v3454 = vpop.f32.mrb[0].mxu0
    %v3455 = vpop.f32.mrb[0].mxu0
    %3456 = vdwg.mxu0
    %3457 = vmatprep.subr.bf16.mxu0 %v3321
    %3458 = vmatpush1.bf16.msra.mxu0 %v3320
    %3459 = vmatprep.subr.bf16.mxu0 %v3323
    %3460 = vmatpush1.bf16.msra.mxu0 %v3322
    %3461 = vmatprep.subr.bf16.mxu0 %v3325
    %3462 = vmatpush1.bf16.msra.mxu0 %v3324
    %3463 = vmatprep.subr.bf16.mxu0 %v3327
    %3464 = vmatpush1.bf16.msra.mxu0 %v3326
    %3465 = vmatprep.subr.bf16.mxu0 %v3329
    %3466 = vmatpush1.bf16.msra.mxu0 %v3328
    %3467 = vmatprep.subr.bf16.mxu0 %v3331
    %3468 = vmatpush1.bf16.msra.mxu0 %v3330
    %3469 = vmatprep.subr.bf16.mxu0 %v3333
    %3470 = vmatpush1.bf16.msra.mxu0 %v3332
    %3471 = vmatprep.subr.bf16.mxu0 %v3335
    %3472 = vmatpush1.bf16.msra.mxu0 %v3334
    %3473 = vmatprep.subr.bf16.mxu0 %v3337
    %3474 = vmatpush1.bf16.msra.mxu0 %v3336
    %3475 = vmatprep.subr.bf16.mxu0 %v3339
    %3476 = vmatpush1.bf16.msra.mxu0 %v3338
    %3477 = vmatprep.subr.bf16.mxu0 %v3341
    %3478 = vmatpush1.bf16.msra.mxu0 %v3340
    %3479 = vmatprep.subr.bf16.mxu0 %v3343
    %3480 = vmatpush1.bf16.msra.mxu0 %v3342
    %3481 = vmatprep.subr.bf16.mxu0 %v3345
    %3482 = vmatpush1.bf16.msra.mxu0 %v3344
    %3483 = vmatprep.subr.bf16.mxu0 %v3347
    %3484 = vmatpush1.bf16.msra.mxu0 %v3346
    %3485 = vmatprep.subr.bf16.mxu0 %v3349
    %3486 = vmatpush1.bf16.msra.mxu0 %v3348
    %3487 = vmatprep.subr.bf16.mxu0 %v3351
    %3488 = vmatpush1.bf16.msra.mxu0 %v3350
    %3489 = vmatprep.mubr.bf16.mxu0 %v3019
    %3490 = vmatmul.mubr.bf16.gmra.mrb[0].mxu0 %v3018
    %v3491 = vpop.f32.mrb[0].mxu0
    %v3492 = vadd.f32 %v3451, %v3491
    %v3493 = vpop.f32.mrb[0].mxu0
    %v3494 = vadd.f32 %v3453, %v3493
    %v3495 = vpop.f32.mrb[0].mxu0
    %v3496 = vpop.f32.mrb[0].mxu0
    %3497 = vdwg.mxu0
    %3498 = vst [vmem:[%s14] sm:$0xff] %v3492
    %3499 = vst [vmem:[%s14 + $0x8] sm:$0xff] %v3494
    %v3500 = vmul.f32 %v3494, 0.5
    %v3501 = vmul.f32 %v3500, 1.442695
    %v3502 = vpow.pop %v3501
    %v3503 = vld [vmem:[%s7] sm:$0xff]
    %v3504 = vmul.f32 %v3502, %v3503
    %v3505 = vadd.f32 %v3492, %v3504
    %v3506 = vpack.c.bf16 %v3505, %v3505
    %v3507 = vld [vmem:[#allocation7] sm:$0xff]
    %v3508 = vld [vmem:[#allocation7 + $0x8] sm:$0xff]
    %v3509 = vld [vmem:[#allocation7 + $0x10] sm:$0xff]
    %v3510 = vld [vmem:[#allocation7 + $0x18] sm:$0xff]
    %v3511 = vld [vmem:[#allocation7 + $0x20] sm:$0xff]
    %v3512 = vld [vmem:[#allocation7 + $0x28] sm:$0xff]
    %v3513 = vld [vmem:[#allocation7 + $0x30] sm:$0xff]
    %v3514 = vld [vmem:[#allocation7 + $0x38] sm:$0xff]
    %v3515 = vld [vmem:[#allocation7 + $0x40] sm:$0xff]
    %v3516 = vld [vmem:[#allocation7 + $0x48] sm:$0xff]
    %v3517 = vld [vmem:[#allocation7 + $0x50] sm:$0xff]
    %v3518 = vld [vmem:[#allocation7 + $0x58] sm:$0xff]
    %v3519 = vld [vmem:[#allocation7 + $0x60] sm:$0xff]
    %v3520 = vld [vmem:[#allocation7 + $0x68] sm:$0xff]
    %v3521 = vld [vmem:[#allocation7 + $0x70] sm:$0xff]
    %v3522 = vld [vmem:[#allocation7 + $0x78] sm:$0xff]
    %v3523 = vld [vmem:[#allocation7 + $0x80] sm:$0xff]
    %v3524 = vld [vmem:[#allocation7 + $0x88] sm:$0xff]
    %v3525 = vld [vmem:[#allocation7 + $0x90] sm:$0xff]
    %v3526 = vld [vmem:[#allocation7 + $0x98] sm:$0xff]
    %v3527 = vld [vmem:[#allocation7 + $0xa0] sm:$0xff]
    %v3528 = vld [vmem:[#allocation7 + $0xa8] sm:$0xff]
    %v3529 = vld [vmem:[#allocation7 + $0xb0] sm:$0xff]
    %v3530 = vld [vmem:[#allocation7 + $0xb8] sm:$0xff]
    %v3531 = vld [vmem:[#allocation7 + $0xc0] sm:$0xff]
    %v3532 = vld [vmem:[#allocation7 + $0xc8] sm:$0xff]
    %v3533 = vld [vmem:[#allocation7 + $0xd0] sm:$0xff]
    %v3534 = vld [vmem:[#allocation7 + $0xd8] sm:$0xff]
    %v3535 = vld [vmem:[#allocation7 + $0xe0] sm:$0xff]
    %v3536 = vld [vmem:[#allocation7 + $0xe8] sm:$0xff]
    %v3537 = vld [vmem:[#allocation7 + $0xf0] sm:$0xff]
    %v3538 = vld [vmem:[#allocation7 + $0xf8] sm:$0xff]
    %v3539 = vld [vmem:[%s9] sm:$0xf]
    %v3541 = vlaneseq
    %v3542 = vshrl.u32 %v3541, 7
    %v3543 = vsub.s32 0, %v3542
    %v3544 = vrot.slane %v3539, %v3543
    %v3545 = vlaneseq
    %v3546 = vshrl.u32 %v3545, 7
    %v3547 = vsub.s32 1, %v3546
    %v3548 = vrot.slane %v3539, %v3547
    %v3549 = vlaneseq
    %v3550 = vshrl.u32 %v3549, 7
    %v3551 = vsub.s32 2, %v3550
    %v3552 = vrot.slane %v3539, %v3551
    %v3553 = vlaneseq
    %v3554 = vshrl.u32 %v3553, 7
    %v3555 = vsub.s32 3, %v3554
    %v3556 = vrot.slane %v3539, %v3555
    %v3593 = vunpack.c.l.b16 %v3507
    %v3594 = vunpack.c.h.b16 %v3507
    %v3595 = vunpack.c.l.b16 %v3508
    %v3596 = vunpack.c.h.b16 %v3508
    %v3597 = vunpack.c.l.b16 %v3509
    %v3598 = vunpack.c.h.b16 %v3509
    %v3599 = vunpack.c.l.b16 %v3510
    %v3600 = vunpack.c.h.b16 %v3510
    %v3601 = vunpack.c.l.b16 %v3511
    %v3602 = vunpack.c.h.b16 %v3511
    %v3603 = vunpack.c.l.b16 %v3512
    %v3604 = vunpack.c.h.b16 %v3512
    %v3605 = vunpack.c.l.b16 %v3513
    %v3606 = vunpack.c.h.b16 %v3513
    %v3607 = vunpack.c.l.b16 %v3514
    %v3608 = vunpack.c.h.b16 %v3514
    %v3609 = vunpack.c.l.b16 %v3515
    %v3610 = vunpack.c.h.b16 %v3515
    %v3611 = vunpack.c.l.b16 %v3516
    %v3612 = vunpack.c.h.b16 %v3516
    %v3613 = vunpack.c.l.b16 %v3517
    %v3614 = vunpack.c.h.b16 %v3517
    %v3615 = vunpack.c.l.b16 %v3518
    %v3616 = vunpack.c.h.b16 %v3518
    %v3617 = vunpack.c.l.b16 %v3519
    %v3618 = vunpack.c.h.b16 %v3519
    %v3619 = vunpack.c.l.b16 %v3520
    %v3620 = vunpack.c.h.b16 %v3520
    %v3621 = vunpack.c.l.b16 %v3521
    %v3622 = vunpack.c.h.b16 %v3521
    %v3623 = vunpack.c.l.b16 %v3522
    %v3624 = vunpack.c.h.b16 %v3522
    %v3625 = vunpack.c.l.b16 %v3523
    %v3626 = vunpack.c.h.b16 %v3523
    %v3627 = vunpack.c.l.b16 %v3524
    %v3628 = vunpack.c.h.b16 %v3524
    %v3629 = vunpack.c.l.b16 %v3525
    %v3630 = vunpack.c.h.b16 %v3525
    %v3631 = vunpack.c.l.b16 %v3526
    %v3632 = vunpack.c.h.b16 %v3526
    %v3633 = vunpack.c.l.b16 %v3527
    %v3634 = vunpack.c.h.b16 %v3527
    %v3635 = vunpack.c.l.b16 %v3528
    %v3636 = vunpack.c.h.b16 %v3528
    %v3637 = vunpack.c.l.b16 %v3529
    %v3638 = vunpack.c.h.b16 %v3529
    %v3639 = vunpack.c.l.b16 %v3530
    %v3640 = vunpack.c.h.b16 %v3530
    %v3641 = vunpack.c.l.b16 %v3531
    %v3642 = vunpack.c.h.b16 %v3531
    %v3643 = vunpack.c.l.b16 %v3532
    %v3644 = vunpack.c.h.b16 %v3532
    %v3645 = vunpack.c.l.b16 %v3533
    %v3646 = vunpack.c.h.b16 %v3533
    %v3647 = vunpack.c.l.b16 %v3534
    %v3648 = vunpack.c.h.b16 %v3534
    %v3649 = vunpack.c.l.b16 %v3535
    %v3650 = vunpack.c.h.b16 %v3535
    %v3651 = vunpack.c.l.b16 %v3536
    %v3652 = vunpack.c.h.b16 %v3536
    %v3653 = vunpack.c.l.b16 %v3537
    %v3654 = vunpack.c.h.b16 %v3537
    %v3655 = vunpack.c.l.b16 %v3538
    %v3656 = vunpack.c.h.b16 %v3538
    %v3657 = vpack.c.b16 %v3597, %v3593
    %v3658 = vpack.c.b16 %v3598, %v3594
    %v3659 = vpack.c.b16 %v3599, %v3595
    %v3660 = vpack.c.b16 %v3600, %v3596
    %v3661 = vpack.c.b16 %v3605, %v3601
    %v3662 = vpack.c.b16 %v3606, %v3602
    %v3663 = vpack.c.b16 %v3607, %v3603
    %v3664 = vpack.c.b16 %v3608, %v3604
    %v3665 = vpack.c.b16 %v3613, %v3609
    %v3666 = vpack.c.b16 %v3614, %v3610
    %v3667 = vpack.c.b16 %v3615, %v3611
    %v3668 = vpack.c.b16 %v3616, %v3612
    %v3669 = vpack.c.b16 %v3621, %v3617
    %v3670 = vpack.c.b16 %v3622, %v3618
    %v3671 = vpack.c.b16 %v3623, %v3619
    %v3672 = vpack.c.b16 %v3624, %v3620
    %v3673 = vpack.c.b16 %v3629, %v3625
    %v3674 = vpack.c.b16 %v3630, %v3626
    %v3675 = vpack.c.b16 %v3631, %v3627
    %v3676 = vpack.c.b16 %v3632, %v3628
    %v3677 = vpack.c.b16 %v3637, %v3633
    %v3678 = vpack.c.b16 %v3638, %v3634
    %v3679 = vpack.c.b16 %v3639, %v3635
    %v3680 = vpack.c.b16 %v3640, %v3636
    %v3681 = vpack.c.b16 %v3645, %v3641
    %v3682 = vpack.c.b16 %v3646, %v3642
    %v3683 = vpack.c.b16 %v3647, %v3643
    %v3684 = vpack.c.b16 %v3648, %v3644
    %v3685 = vpack.c.b16 %v3653, %v3649
    %v3686 = vpack.c.b16 %v3654, %v3650
    %v3687 = vpack.c.b16 %v3655, %v3651
    %v3688 = vpack.c.b16 %v3656, %v3652
    %3721 = vmatprep.subr.bf16.mxu0 %v3658
    %3722 = vmatpush1.bf16.msra.mxu0 %v3657
    %3723 = vmatprep.subr.bf16.mxu0 %v3662
    %3724 = vmatpush1.bf16.msra.mxu0 %v3661
    %3725 = vmatprep.subr.bf16.mxu0 %v3666
    %3726 = vmatpush1.bf16.msra.mxu0 %v3665
    %3727 = vmatprep.subr.bf16.mxu0 %v3670
    %3728 = vmatpush1.bf16.msra.mxu0 %v3669
    %3729 = vmatprep.subr.bf16.mxu0 %v3674
    %3730 = vmatpush1.bf16.msra.mxu0 %v3673
    %3731 = vmatprep.subr.bf16.mxu0 %v3678
    %3732 = vmatpush1.bf16.msra.mxu0 %v3677
    %3733 = vmatprep.subr.bf16.mxu0 %v3682
    %3734 = vmatpush1.bf16.msra.mxu0 %v3681
    %3735 = vmatprep.subr.bf16.mxu0 %v3686
    %3736 = vmatpush1.bf16.msra.mxu0 %v3685
    %3737 = vmatprep.subr.bf16.mxu0 0
    %3738 = vmatpush1.bf16.msra.mxu0 0
    %3739 = vmatprep.subr.bf16.mxu0 0
    %3740 = vmatpush1.bf16.msra.mxu0 0
    %3741 = vmatprep.subr.bf16.mxu0 0
    %3742 = vmatpush1.bf16.msra.mxu0 0
    %3743 = vmatprep.subr.bf16.mxu0 0
    %3744 = vmatpush1.bf16.msra.mxu0 0
    %3745 = vmatprep.subr.bf16.mxu0 0
    %3746 = vmatpush1.bf16.msra.mxu0 0
    %3747 = vmatprep.subr.bf16.mxu0 0
    %3748 = vmatpush1.bf16.msra.mxu0 0
    %3749 = vmatprep.subr.bf16.mxu0 0
    %3750 = vmatpush1.bf16.msra.mxu0 0
    %3751 = vmatprep.subr.bf16.mxu0 0
    %3752 = vmatpush1.bf16.msra.mxu0 0
    %3753 = vmatprep.mubr.bf16.mxu0 0
    %3754 = vmatmul.mubr.bf16.gmra.mrb[0].mxu0 %v3506
    %v3755 = vpop.f32.mrb[0].mxu0
    %v3756 = vadd.f32 %v3544, %v3755
    %v3757 = vpop.f32.mrb[0].mxu0
    %v3758 = vadd.f32 %v3548, %v3757
    %v3759 = vpop.f32.mrb[0].mxu0
    %v3760 = vpop.f32.mrb[0].mxu0
    %3761 = vdwg.mxu0
    %3762 = vmatprep.subr.bf16.mxu0 %v3660
    %3763 = vmatpush1.bf16.msra.mxu0 %v3659
    %3764 = vmatprep.subr.bf16.mxu0 %v3664
    %3765 = vmatpush1.bf16.msra.mxu0 %v3663
    %3766 = vmatprep.subr.bf16.mxu0 %v3668
    %3767 = vmatpush1.bf16.msra.mxu0 %v3667
    %3768 = vmatprep.subr.bf16.mxu0 %v3672
    %3769 = vmatpush1.bf16.msra.mxu0 %v3671
    %3770 = vmatprep.subr.bf16.mxu0 %v3676
    %3771 = vmatpush1.bf16.msra.mxu0 %v3675
    %3772 = vmatprep.subr.bf16.mxu0 %v3680
    %3773 = vmatpush1.bf16.msra.mxu0 %v3679
    %3774 = vmatprep.subr.bf16.mxu0 %v3684
    %3775 = vmatpush1.bf16.msra.mxu0 %v3683
    %3776 = vmatprep.subr.bf16.mxu0 %v3688
    %3777 = vmatpush1.bf16.msra.mxu0 %v3687
    %3778 = vmatprep.subr.bf16.mxu0 0
    %3779 = vmatpush1.bf16.msra.mxu0 0
    %3780 = vmatprep.subr.bf16.mxu0 0
    %3781 = vmatpush1.bf16.msra.mxu0 0
    %3782 = vmatprep.subr.bf16.mxu0 0
    %3783 = vmatpush1.bf16.msra.mxu0 0
    %3784 = vmatprep.subr.bf16.mxu0 0
    %3785 = vmatpush1.bf16.msra.mxu0 0
    %3786 = vmatprep.subr.bf16.mxu0 0
    %3787 = vmatpush1.bf16.msra.mxu0 0
    %3788 = vmatprep.subr.bf16.mxu0 0
    %3789 = vmatpush1.bf16.msra.mxu0 0
    %3790 = vmatprep.subr.bf16.mxu0 0
    %3791 = vmatpush1.bf16.msra.mxu0 0
    %3792 = vmatprep.subr.bf16.mxu0 0
    %3793 = vmatpush1.bf16.msra.mxu0 0
    %3794 = vmatprep.mubr.bf16.mxu0 0
    %3795 = vmatmul.mubr.bf16.gmra.mrb[0].mxu0 %v3506
    %v3796 = vpop.f32.mrb[0].mxu0
    %v3797 = vadd.f32 %v3552, %v3796
    %v3798 = vpop.f32.mrb[0].mxu0
    %v3799 = vadd.f32 %v3556, %v3798
    %v3800 = vpop.f32.mrb[0].mxu0
    %v3801 = vpop.f32.mrb[0].mxu0
    %3802 = vdwg.mxu0
    %v3803 = vmax.f32 %v3756, 0.0
    %v3804 = vmax.f32 %v3758, 0.0
    %v3805 = vmax.f32 %v3797, 0.0
    %v3806 = vmax.f32 %v3799, 0.0
    %v3807 = vpack.c.bf16 %v3803, %v3803
    %v3808 = vpack.c.bf16 %v3804, %v3804
    %v3809 = vpack.c.bf16 %v3805, %v3805
    %v3810 = vpack.c.bf16 %v3806, %v3806
    %v3811 = vld [vmem:[#allocation9] sm:$0xff]
    %v3812 = vld [vmem:[#allocation9 + $0x8] sm:$0xff]
    %v3813 = vld [vmem:[#allocation9 + $0x10] sm:$0xff]
    %v3814 = vld [vmem:[#allocation9 + $0x18] sm:$0xff]
    %v3815 = vld [vmem:[#allocation9 + $0x20] sm:$0xff]
    %v3816 = vld [vmem:[#allocation9 + $0x28] sm:$0xff]
    %v3817 = vld [vmem:[#allocation9 + $0x30] sm:$0xff]
    %v3818 = vld [vmem:[#allocation9 + $0x38] sm:$0xff]
    %v3819 = vld [vmem:[#allocation9 + $0x40] sm:$0xff]
    %v3820 = vld [vmem:[#allocation9 + $0x48] sm:$0xff]
    %v3821 = vld [vmem:[#allocation9 + $0x50] sm:$0xff]
    %v3822 = vld [vmem:[#allocation9 + $0x58] sm:$0xff]
    %v3823 = vld [vmem:[#allocation9 + $0x60] sm:$0xff]
    %v3824 = vld [vmem:[#allocation9 + $0x68] sm:$0xff]
    %v3825 = vld [vmem:[#allocation9 + $0x70] sm:$0xff]
    %v3826 = vld [vmem:[#allocation9 + $0x78] sm:$0xff]
    %v3827 = vld [vmem:[#allocation9 + $0x80] sm:$0xff]
    %v3828 = vld [vmem:[#allocation9 + $0x88] sm:$0xff]
    %v3829 = vld [vmem:[#allocation9 + $0x90] sm:$0xff]
    %v3830 = vld [vmem:[#allocation9 + $0x98] sm:$0xff]
    %v3831 = vld [vmem:[#allocation9 + $0xa0] sm:$0xff]
    %v3832 = vld [vmem:[#allocation9 + $0xa8] sm:$0xff]
    %v3833 = vld [vmem:[#allocation9 + $0xb0] sm:$0xff]
    %v3834 = vld [vmem:[#allocation9 + $0xb8] sm:$0xff]
    %v3835 = vld [vmem:[#allocation9 + $0xc0] sm:$0xff]
    %v3836 = vld [vmem:[#allocation9 + $0xc8] sm:$0xff]
    %v3837 = vld [vmem:[#allocation9 + $0xd0] sm:$0xff]
    %v3838 = vld [vmem:[#allocation9 + $0xd8] sm:$0xff]
    %v3839 = vld [vmem:[#allocation9 + $0xe0] sm:$0xff]
    %v3840 = vld [vmem:[#allocation9 + $0xe8] sm:$0xff]
    %v3841 = vld [vmem:[#allocation9 + $0xf0] sm:$0xff]
    %v3842 = vld [vmem:[#allocation9 + $0xf8] sm:$0xff]
    %v3843 = vld [vmem:[#allocation9 + $0x100] sm:$0xff]
    %v3844 = vld [vmem:[#allocation9 + $0x108] sm:$0xff]
    %v3845 = vld [vmem:[#allocation9 + $0x110] sm:$0xff]
    %v3846 = vld [vmem:[#allocation9 + $0x118] sm:$0xff]
    %v3847 = vld [vmem:[#allocation9 + $0x120] sm:$0xff]
    %v3848 = vld [vmem:[#allocation9 + $0x128] sm:$0xff]
    %v3849 = vld [vmem:[#allocation9 + $0x130] sm:$0xff]
    %v3850 = vld [vmem:[#allocation9 + $0x138] sm:$0xff]
    %v3851 = vld [vmem:[#allocation9 + $0x140] sm:$0xff]
    %v3852 = vld [vmem:[#allocation9 + $0x148] sm:$0xff]
    %v3853 = vld [vmem:[#allocation9 + $0x150] sm:$0xff]
    %v3854 = vld [vmem:[#allocation9 + $0x158] sm:$0xff]
    %v3855 = vld [vmem:[#allocation9 + $0x160] sm:$0xff]
    %v3856 = vld [vmem:[#allocation9 + $0x168] sm:$0xff]
    %v3857 = vld [vmem:[#allocation9 + $0x170] sm:$0xff]
    %v3858 = vld [vmem:[#allocation9 + $0x178] sm:$0xff]
    %v3859 = vld [vmem:[#allocation9 + $0x180] sm:$0xff]
    %v3860 = vld [vmem:[#allocation9 + $0x188] sm:$0xff]
    %v3861 = vld [vmem:[#allocation9 + $0x190] sm:$0xff]
    %v3862 = vld [vmem:[#allocation9 + $0x198] sm:$0xff]
    %v3863 = vld [vmem:[#allocation9 + $0x1a0] sm:$0xff]
    %v3864 = vld [vmem:[#allocation9 + $0x1a8] sm:$0xff]
    %v3865 = vld [vmem:[#allocation9 + $0x1b0] sm:$0xff]
    %v3866 = vld [vmem:[#allocation9 + $0x1b8] sm:$0xff]
    %v3867 = vld [vmem:[#allocation9 + $0x1c0] sm:$0xff]
    %v3868 = vld [vmem:[#allocation9 + $0x1c8] sm:$0xff]
    %v3869 = vld [vmem:[#allocation9 + $0x1d0] sm:$0xff]
    %v3870 = vld [vmem:[#allocation9 + $0x1d8] sm:$0xff]
    %v3871 = vld [vmem:[#allocation9 + $0x1e0] sm:$0xff]
    %v3872 = vld [vmem:[#allocation9 + $0x1e8] sm:$0xff]
    %v3873 = vld [vmem:[#allocation9 + $0x1f0] sm:$0xff]
    %v3874 = vld [vmem:[#allocation9 + $0x1f8] sm:$0xff]
    %v3875 = vld [vmem:[#allocation9 + $0x200] sm:$0xff]
    %v3876 = vld [vmem:[#allocation9 + $0x208] sm:$0xff]
    %v3877 = vld [vmem:[#allocation9 + $0x210] sm:$0xff]
    %v3878 = vld [vmem:[#allocation9 + $0x218] sm:$0xff]
    %v3879 = vld [vmem:[#allocation9 + $0x220] sm:$0xff]
    %v3880 = vld [vmem:[#allocation9 + $0x228] sm:$0xff]
    %v3881 = vld [vmem:[#allocation9 + $0x230] sm:$0xff]
    %v3882 = vld [vmem:[#allocation9 + $0x238] sm:$0xff]
    %v3883 = vld [vmem:[#allocation9 + $0x240] sm:$0xff]
    %v3884 = vld [vmem:[#allocation9 + $0x248] sm:$0xff]
    %v3885 = vld [vmem:[#allocation9 + $0x250] sm:$0xff]
    %v3886 = vld [vmem:[#allocation9 + $0x258] sm:$0xff]
    %v3887 = vld [vmem:[#allocation9 + $0x260] sm:$0xff]
    %v3888 = vld [vmem:[#allocation9 + $0x268] sm:$0xff]
    %v3889 = vld [vmem:[#allocation9 + $0x270] sm:$0xff]
    %v3890 = vld [vmem:[#allocation9 + $0x278] sm:$0xff]
    %v3891 = vld [vmem:[#allocation9 + $0x280] sm:$0xff]
    %v3892 = vld [vmem:[#allocation9 + $0x288] sm:$0xff]
    %v3893 = vld [vmem:[#allocation9 + $0x290] sm:$0xff]
    %v3894 = vld [vmem:[#allocation9 + $0x298] sm:$0xff]
    %v3895 = vld [vmem:[#allocation9 + $0x2a0] sm:$0xff]
    %v3896 = vld [vmem:[#allocation9 + $0x2a8] sm:$0xff]
    %v3897 = vld [vmem:[#allocation9 + $0x2b0] sm:$0xff]
    %v3898 = vld [vmem:[#allocation9 + $0x2b8] sm:$0xff]
    %v3899 = vld [vmem:[#allocation9 + $0x2c0] sm:$0xff]
    %v3900 = vld [vmem:[#allocation9 + $0x2c8] sm:$0xff]
    %v3901 = vld [vmem:[#allocation9 + $0x2d0] sm:$0xff]
    %v3902 = vld [vmem:[#allocation9 + $0x2d8] sm:$0xff]
    %v3903 = vld [vmem:[#allocation9 + $0x2e0] sm:$0xff]
    %v3904 = vld [vmem:[#allocation9 + $0x2e8] sm:$0xff]
    %v3905 = vld [vmem:[#allocation9 + $0x2f0] sm:$0xff]
    %v3906 = vld [vmem:[#allocation9 + $0x2f8] sm:$0xff]
    %v3907 = vld [vmem:[#allocation9 + $0x300] sm:$0xff]
    %v3908 = vld [vmem:[#allocation9 + $0x308] sm:$0xff]
    %v3909 = vld [vmem:[#allocation9 + $0x310] sm:$0xff]
    %v3910 = vld [vmem:[#allocation9 + $0x318] sm:$0xff]
    %v3911 = vld [vmem:[#allocation9 + $0x320] sm:$0xff]
    %v3912 = vld [vmem:[#allocation9 + $0x328] sm:$0xff]
    %v3913 = vld [vmem:[#allocation9 + $0x330] sm:$0xff]
    %v3914 = vld [vmem:[#allocation9 + $0x338] sm:$0xff]
    %v3915 = vld [vmem:[#allocation9 + $0x340] sm:$0xff]
    %v3916 = vld [vmem:[#allocation9 + $0x348] sm:$0xff]
    %v3917 = vld [vmem:[#allocation9 + $0x350] sm:$0xff]
    %v3918 = vld [vmem:[#allocation9 + $0x358] sm:$0xff]
    %v3919 = vld [vmem:[#allocation9 + $0x360] sm:$0xff]
    %v3920 = vld [vmem:[#allocation9 + $0x368] sm:$0xff]
    %v3921 = vld [vmem:[#allocation9 + $0x370] sm:$0xff]
    %v3922 = vld [vmem:[#allocation9 + $0x378] sm:$0xff]
    %v3923 = vld [vmem:[#allocation9 + $0x380] sm:$0xff]
    %v3924 = vld [vmem:[#allocation9 + $0x388] sm:$0xff]
    %v3925 = vld [vmem:[#allocation9 + $0x390] sm:$0xff]
    %v3926 = vld [vmem:[#allocation9 + $0x398] sm:$0xff]
    %v3927 = vld [vmem:[#allocation9 + $0x3a0] sm:$0xff]
    %v3928 = vld [vmem:[#allocation9 + $0x3a8] sm:$0xff]
    %v3929 = vld [vmem:[#allocation9 + $0x3b0] sm:$0xff]
    %v3930 = vld [vmem:[#allocation9 + $0x3b8] sm:$0xff]
    %v3931 = vld [vmem:[#allocation9 + $0x3c0] sm:$0xff]
    %v3932 = vld [vmem:[#allocation9 + $0x3c8] sm:$0xff]
    %v3933 = vld [vmem:[#allocation9 + $0x3d0] sm:$0xff]
    %v3934 = vld [vmem:[#allocation9 + $0x3d8] sm:$0xff]
    %v3935 = vld [vmem:[#allocation9 + $0x3e0] sm:$0xff]
    %v3936 = vld [vmem:[#allocation9 + $0x3e8] sm:$0xff]
    %v3937 = vld [vmem:[#allocation9 + $0x3f0] sm:$0xff]
    %v3938 = vld [vmem:[#allocation9 + $0x3f8] sm:$0xff]
    %v3939 = vld [vmem:[#allocation9 + $0x400] sm:$0xff]
    %v3940 = vld [vmem:[#allocation9 + $0x408] sm:$0xff]
    %v3941 = vld [vmem:[#allocation9 + $0x410] sm:$0xff]
    %v3942 = vld [vmem:[#allocation9 + $0x418] sm:$0xff]
    %v3943 = vld [vmem:[#allocation9 + $0x420] sm:$0xff]
    %v3944 = vld [vmem:[#allocation9 + $0x428] sm:$0xff]
    %v3945 = vld [vmem:[#allocation9 + $0x430] sm:$0xff]
    %v3946 = vld [vmem:[#allocation9 + $0x438] sm:$0xff]
    %v3947 = vld [vmem:[#allocation9 + $0x440] sm:$0xff]
    %v3948 = vld [vmem:[#allocation9 + $0x448] sm:$0xff]
    %v3949 = vld [vmem:[#allocation9 + $0x450] sm:$0xff]
    %v3950 = vld [vmem:[#allocation9 + $0x458] sm:$0xff]
    %v3951 = vld [vmem:[#allocation9 + $0x460] sm:$0xff]
    %v3952 = vld [vmem:[#allocation9 + $0x468] sm:$0xff]
    %v3953 = vld [vmem:[#allocation9 + $0x470] sm:$0xff]
    %v3954 = vld [vmem:[#allocation9 + $0x478] sm:$0xff]
    %v3955 = vld [vmem:[#allocation9 + $0x480] sm:$0xff]
    %v3956 = vld [vmem:[#allocation9 + $0x488] sm:$0xff]
    %v3957 = vld [vmem:[#allocation9 + $0x490] sm:$0xff]
    %v3958 = vld [vmem:[#allocation9 + $0x498] sm:$0xff]
    %v3959 = vld [vmem:[#allocation9 + $0x4a0] sm:$0xff]
    %v3960 = vld [vmem:[#allocation9 + $0x4a8] sm:$0xff]
    %v3961 = vld [vmem:[#allocation9 + $0x4b0] sm:$0xff]
    %v3962 = vld [vmem:[#allocation9 + $0x4b8] sm:$0xff]
    %v3963 = vld [vmem:[#allocation9 + $0x4c0] sm:$0xff]
    %v3964 = vld [vmem:[#allocation9 + $0x4c8] sm:$0xff]
    %v3965 = vld [vmem:[#allocation9 + $0x4d0] sm:$0xff]
    %v3966 = vld [vmem:[#allocation9 + $0x4d8] sm:$0xff]
    %v3967 = vld [vmem:[#allocation9 + $0x4e0] sm:$0xff]
    %v3968 = vld [vmem:[#allocation9 + $0x4e8] sm:$0xff]
    %v3969 = vld [vmem:[#allocation9 + $0x4f0] sm:$0xff]
    %v3970 = vld [vmem:[#allocation9 + $0x4f8] sm:$0xff]
    %v3971 = vld [vmem:[#allocation9 + $0x500] sm:$0xff]
    %v3972 = vld [vmem:[#allocation9 + $0x508] sm:$0xff]
    %v3973 = vld [vmem:[#allocation9 + $0x510] sm:$0xff]
    %v3974 = vld [vmem:[#allocation9 + $0x518] sm:$0xff]
    %v3975 = vld [vmem:[#allocation9 + $0x520] sm:$0xff]
    %v3976 = vld [vmem:[#allocation9 + $0x528] sm:$0xff]
    %v3977 = vld [vmem:[#allocation9 + $0x530] sm:$0xff]
    %v3978 = vld [vmem:[#allocation9 + $0x538] sm:$0xff]
    %v3979 = vld [vmem:[#allocation9 + $0x540] sm:$0xff]
    %v3980 = vld [vmem:[#allocation9 + $0x548] sm:$0xff]
    %v3981 = vld [vmem:[#allocation9 + $0x550] sm:$0xff]
    %v3982 = vld [vmem:[#allocation9 + $0x558] sm:$0xff]
    %v3983 = vld [vmem:[#allocation9 + $0x560] sm:$0xff]
    %v3984 = vld [vmem:[#allocation9 + $0x568] sm:$0xff]
    %v3985 = vld [vmem:[#allocation9 + $0x570] sm:$0xff]
    %v3986 = vld [vmem:[#allocation9 + $0x578] sm:$0xff]
    %v3987 = vld [vmem:[#allocation9 + $0x580] sm:$0xff]
    %v3988 = vld [vmem:[#allocation9 + $0x588] sm:$0xff]
    %v3989 = vld [vmem:[#allocation9 + $0x590] sm:$0xff]
    %v3990 = vld [vmem:[#allocation9 + $0x598] sm:$0xff]
    %v3991 = vld [vmem:[#allocation9 + $0x5a0] sm:$0xff]
    %v3992 = vld [vmem:[#allocation9 + $0x5a8] sm:$0xff]
    %v3993 = vld [vmem:[#allocation9 + $0x5b0] sm:$0xff]
    %v3994 = vld [vmem:[#allocation9 + $0x5b8] sm:$0xff]
    %v3995 = vld [vmem:[#allocation9 + $0x5c0] sm:$0xff]
    %v3996 = vld [vmem:[#allocation9 + $0x5c8] sm:$0xff]
    %v3997 = vld [vmem:[#allocation9 + $0x5d0] sm:$0xff]
    %v3998 = vld [vmem:[#allocation9 + $0x5d8] sm:$0xff]
    %v3999 = vld [vmem:[#allocation9 + $0x5e0] sm:$0xff]
    %v4000 = vld [vmem:[#allocation9 + $0x5e8] sm:$0xff]
    %v4001 = vld [vmem:[#allocation9 + $0x5f0] sm:$0xff]
    %v4002 = vld [vmem:[#allocation9 + $0x5f8] sm:$0xff]
    %v4003 = vld [vmem:[#allocation9 + $0x600] sm:$0xff]
    %v4004 = vld [vmem:[#allocation9 + $0x608] sm:$0xff]
    %v4005 = vld [vmem:[#allocation9 + $0x610] sm:$0xff]
    %v4006 = vld [vmem:[#allocation9 + $0x618] sm:$0xff]
    %v4007 = vld [vmem:[#allocation9 + $0x620] sm:$0xff]
    %v4008 = vld [vmem:[#allocation9 + $0x628] sm:$0xff]
    %v4009 = vld [vmem:[#allocation9 + $0x630] sm:$0xff]
    %v4010 = vld [vmem:[#allocation9 + $0x638] sm:$0xff]
    %v4011 = vld [vmem:[#allocation9 + $0x640] sm:$0xff]
    %v4012 = vld [vmem:[#allocation9 + $0x648] sm:$0xff]
    %v4013 = vld [vmem:[#allocation9 + $0x650] sm:$0xff]
    %v4014 = vld [vmem:[#allocation9 + $0x658] sm:$0xff]
    %v4015 = vld [vmem:[#allocation9 + $0x660] sm:$0xff]
    %v4016 = vld [vmem:[#allocation9 + $0x668] sm:$0xff]
    %v4017 = vld [vmem:[#allocation9 + $0x670] sm:$0xff]
    %v4018 = vld [vmem:[#allocation9 + $0x678] sm:$0xff]
    %v4019 = vld [vmem:[#allocation9 + $0x680] sm:$0xff]
    %v4020 = vld [vmem:[#allocation9 + $0x688] sm:$0xff]
    %v4021 = vld [vmem:[#allocation9 + $0x690] sm:$0xff]
    %v4022 = vld [vmem:[#allocation9 + $0x698] sm:$0xff]
    %v4023 = vld [vmem:[#allocation9 + $0x6a0] sm:$0xff]
    %v4024 = vld [vmem:[#allocation9 + $0x6a8] sm:$0xff]
    %v4025 = vld [vmem:[#allocation9 + $0x6b0] sm:$0xff]
    %v4026 = vld [vmem:[#allocation9 + $0x6b8] sm:$0xff]
    %v4027 = vld [vmem:[#allocation9 + $0x6c0] sm:$0xff]
    %v4028 = vld [vmem:[#allocation9 + $0x6c8] sm:$0xff]
    %v4029 = vld [vmem:[#allocation9 + $0x6d0] sm:$0xff]
    %v4030 = vld [vmem:[#allocation9 + $0x6d8] sm:$0xff]
    %v4031 = vld [vmem:[#allocation9 + $0x6e0] sm:$0xff]
    %v4032 = vld [vmem:[#allocation9 + $0x6e8] sm:$0xff]
    %v4033 = vld [vmem:[#allocation9 + $0x6f0] sm:$0xff]
    %v4034 = vld [vmem:[#allocation9 + $0x6f8] sm:$0xff]
    %v4035 = vld [vmem:[#allocation9 + $0x700] sm:$0xff]
    %v4036 = vld [vmem:[#allocation9 + $0x708] sm:$0xff]
    %v4037 = vld [vmem:[#allocation9 + $0x710] sm:$0xff]
    %v4038 = vld [vmem:[#allocation9 + $0x718] sm:$0xff]
    %v4039 = vld [vmem:[#allocation9 + $0x720] sm:$0xff]
    %v4040 = vld [vmem:[#allocation9 + $0x728] sm:$0xff]
    %v4041 = vld [vmem:[#allocation9 + $0x730] sm:$0xff]
    %v4042 = vld [vmem:[#allocation9 + $0x738] sm:$0xff]
    %v4043 = vld [vmem:[#allocation9 + $0x740] sm:$0xff]
    %v4044 = vld [vmem:[#allocation9 + $0x748] sm:$0xff]
    %v4045 = vld [vmem:[#allocation9 + $0x750] sm:$0xff]
    %v4046 = vld [vmem:[#allocation9 + $0x758] sm:$0xff]
    %v4047 = vld [vmem:[#allocation9 + $0x760] sm:$0xff]
    %v4048 = vld [vmem:[#allocation9 + $0x768] sm:$0xff]
    %v4049 = vld [vmem:[#allocation9 + $0x770] sm:$0xff]
    %v4050 = vld [vmem:[#allocation9 + $0x778] sm:$0xff]
    %v4051 = vld [vmem:[#allocation9 + $0x780] sm:$0xff]
    %v4052 = vld [vmem:[#allocation9 + $0x788] sm:$0xff]
    %v4053 = vld [vmem:[#allocation9 + $0x790] sm:$0xff]
    %v4054 = vld [vmem:[#allocation9 + $0x798] sm:$0xff]
    %v4055 = vld [vmem:[#allocation9 + $0x7a0] sm:$0xff]
    %v4056 = vld [vmem:[#allocation9 + $0x7a8] sm:$0xff]
    %v4057 = vld [vmem:[#allocation9 + $0x7b0] sm:$0xff]
    %v4058 = vld [vmem:[#allocation9 + $0x7b8] sm:$0xff]
    %v4059 = vld [vmem:[#allocation9 + $0x7c0] sm:$0xff]
    %v4060 = vld [vmem:[#allocation9 + $0x7c8] sm:$0xff]
    %v4061 = vld [vmem:[#allocation9 + $0x7d0] sm:$0xff]
    %v4062 = vld [vmem:[#allocation9 + $0x7d8] sm:$0xff]
    %v4063 = vld [vmem:[#allocation9 + $0x7e0] sm:$0xff]
    %v4064 = vld [vmem:[#allocation9 + $0x7e8] sm:$0xff]
    %v4065 = vld [vmem:[#allocation9 + $0x7f0] sm:$0xff]
    %v4066 = vld [vmem:[#allocation9 + $0x7f8] sm:$0xff]
    %v4067 = vld [vmem:[%s11] sm:$0xff]
    %v4069 = vlaneseq
    %v4070 = vshrl.u32 %v4069, 7
    %v4071 = vsub.s32 0, %v4070
    %v4072 = vrot.slane %v4067, %v4071
    %v4073 = vlaneseq
    %v4074 = vshrl.u32 %v4073, 7
    %v4075 = vsub.s32 1, %v4074
    %v4076 = vrot.slane %v4067, %v4075
    %v4077 = vlaneseq
    %v4078 = vshrl.u32 %v4077, 7
    %v4079 = vsub.s32 2, %v4078
    %v4080 = vrot.slane %v4067, %v4079
    %v4081 = vlaneseq
    %v4082 = vshrl.u32 %v4081, 7
    %v4083 = vsub.s32 3, %v4082
    %v4084 = vrot.slane %v4067, %v4083
    %v4085 = vlaneseq
    %v4086 = vshrl.u32 %v4085, 7
    %v4087 = vsub.s32 4, %v4086
    %v4088 = vrot.slane %v4067, %v4087
    %v4089 = vlaneseq
    %v4090 = vshrl.u32 %v4089, 7
    %v4091 = vsub.s32 5, %v4090
    %v4092 = vrot.slane %v4067, %v4091
    %v4093 = vlaneseq
    %v4094 = vshrl.u32 %v4093, 7
    %v4095 = vsub.s32 6, %v4094
    %v4096 = vrot.slane %v4067, %v4095
    %v4097 = vlaneseq
    %v4098 = vshrl.u32 %v4097, 7
    %v4099 = vsub.s32 7, %v4098
    %v4100 = vrot.slane %v4067, %v4099
    %v4365 = vunpack.c.l.b16 %v3811
    %v4366 = vunpack.c.h.b16 %v3811
    %v4367 = vunpack.c.l.b16 %v3812
    %v4368 = vunpack.c.h.b16 %v3812
    %v4369 = vunpack.c.l.b16 %v3813
    %v4370 = vunpack.c.h.b16 %v3813
    %v4371 = vunpack.c.l.b16 %v3814
    %v4372 = vunpack.c.h.b16 %v3814
    %v4373 = vunpack.c.l.b16 %v3815
    %v4374 = vunpack.c.h.b16 %v3815
    %v4375 = vunpack.c.l.b16 %v3816
    %v4376 = vunpack.c.h.b16 %v3816
    %v4377 = vunpack.c.l.b16 %v3817
    %v4378 = vunpack.c.h.b16 %v3817
    %v4379 = vunpack.c.l.b16 %v3818
    %v4380 = vunpack.c.h.b16 %v3818
    %v4381 = vunpack.c.l.b16 %v3819
    %v4382 = vunpack.c.h.b16 %v3819
    %v4383 = vunpack.c.l.b16 %v3820
    %v4384 = vunpack.c.h.b16 %v3820
    %v4385 = vunpack.c.l.b16 %v3821
    %v4386 = vunpack.c.h.b16 %v3821
    %v4387 = vunpack.c.l.b16 %v3822
    %v4388 = vunpack.c.h.b16 %v3822
    %v4389 = vunpack.c.l.b16 %v3823
    %v4390 = vunpack.c.h.b16 %v3823
    %v4391 = vunpack.c.l.b16 %v3824
    %v4392 = vunpack.c.h.b16 %v3824
    %v4393 = vunpack.c.l.b16 %v3825
    %v4394 = vunpack.c.h.b16 %v3825
    %v4395 = vunpack.c.l.b16 %v3826
    %v4396 = vunpack.c.h.b16 %v3826
    %v4397 = vunpack.c.l.b16 %v3827
    %v4398 = vunpack.c.h.b16 %v3827
    %v4399 = vunpack.c.l.b16 %v3828
    %v4400 = vunpack.c.h.b16 %v3828
    %v4401 = vunpack.c.l.b16 %v3829
    %v4402 = vunpack.c.h.b16 %v3829
    %v4403 = vunpack.c.l.b16 %v3830
    %v4404 = vunpack.c.h.b16 %v3830
    %v4405 = vunpack.c.l.b16 %v3831
    %v4406 = vunpack.c.h.b16 %v3831
    %v4407 = vunpack.c.l.b16 %v3832
    %v4408 = vunpack.c.h.b16 %v3832
    %v4409 = vunpack.c.l.b16 %v3833
    %v4410 = vunpack.c.h.b16 %v3833
    %v4411 = vunpack.c.l.b16 %v3834
    %v4412 = vunpack.c.h.b16 %v3834
    %v4413 = vunpack.c.l.b16 %v3835
    %v4414 = vunpack.c.h.b16 %v3835
    %v4415 = vunpack.c.l.b16 %v3836
    %v4416 = vunpack.c.h.b16 %v3836
    %v4417 = vunpack.c.l.b16 %v3837
    %v4418 = vunpack.c.h.b16 %v3837
    %v4419 = vunpack.c.l.b16 %v3838
    %v4420 = vunpack.c.h.b16 %v3838
    %v4421 = vunpack.c.l.b16 %v3839
    %v4422 = vunpack.c.h.b16 %v3839
    %v4423 = vunpack.c.l.b16 %v3840
    %v4424 = vunpack.c.h.b16 %v3840
    %v4425 = vunpack.c.l.b16 %v3841
    %v4426 = vunpack.c.h.b16 %v3841
    %v4427 = vunpack.c.l.b16 %v3842
    %v4428 = vunpack.c.h.b16 %v3842
    %v4429 = vunpack.c.l.b16 %v3843
    %v4430 = vunpack.c.h.b16 %v3843
    %v4431 = vunpack.c.l.b16 %v3844
    %v4432 = vunpack.c.h.b16 %v3844
    %v4433 = vunpack.c.l.b16 %v3845
    %v4434 = vunpack.c.h.b16 %v3845
    %v4435 = vunpack.c.l.b16 %v3846
    %v4436 = vunpack.c.h.b16 %v3846
    %v4437 = vunpack.c.l.b16 %v3847
    %v4438 = vunpack.c.h.b16 %v3847
    %v4439 = vunpack.c.l.b16 %v3848
    %v4440 = vunpack.c.h.b16 %v3848
    %v4441 = vunpack.c.l.b16 %v3849
    %v4442 = vunpack.c.h.b16 %v3849
    %v4443 = vunpack.c.l.b16 %v3850
    %v4444 = vunpack.c.h.b16 %v3850
    %v4445 = vunpack.c.l.b16 %v3851
    %v4446 = vunpack.c.h.b16 %v3851
    %v4447 = vunpack.c.l.b16 %v3852
    %v4448 = vunpack.c.h.b16 %v3852
    %v4449 = vunpack.c.l.b16 %v3853
    %v4450 = vunpack.c.h.b16 %v3853
    %v4451 = vunpack.c.l.b16 %v3854
    %v4452 = vunpack.c.h.b16 %v3854
    %v4453 = vunpack.c.l.b16 %v3855
    %v4454 = vunpack.c.h.b16 %v3855
    %v4455 = vunpack.c.l.b16 %v3856
    %v4456 = vunpack.c.h.b16 %v3856
    %v4457 = vunpack.c.l.b16 %v3857
    %v4458 = vunpack.c.h.b16 %v3857
    %v4459 = vunpack.c.l.b16 %v3858
    %v4460 = vunpack.c.h.b16 %v3858
    %v4461 = vunpack.c.l.b16 %v3859
    %v4462 = vunpack.c.h.b16 %v3859
    %v4463 = vunpack.c.l.b16 %v3860
    %v4464 = vunpack.c.h.b16 %v3860
    %v4465 = vunpack.c.l.b16 %v3861
    %v4466 = vunpack.c.h.b16 %v3861
    %v4467 = vunpack.c.l.b16 %v3862
    %v4468 = vunpack.c.h.b16 %v3862
    %v4469 = vunpack.c.l.b16 %v3863
    %v4470 = vunpack.c.h.b16 %v3863
    %v4471 = vunpack.c.l.b16 %v3864
    %v4472 = vunpack.c.h.b16 %v3864
    %v4473 = vunpack.c.l.b16 %v3865
    %v4474 = vunpack.c.h.b16 %v3865
    %v4475 = vunpack.c.l.b16 %v3866
    %v4476 = vunpack.c.h.b16 %v3866
    %v4477 = vunpack.c.l.b16 %v3867
    %v4478 = vunpack.c.h.b16 %v3867
    %v4479 = vunpack.c.l.b16 %v3868
    %v4480 = vunpack.c.h.b16 %v3868
    %v4481 = vunpack.c.l.b16 %v3869
    %v4482 = vunpack.c.h.b16 %v3869
    %v4483 = vunpack.c.l.b16 %v3870
    %v4484 = vunpack.c.h.b16 %v3870
    %v4485 = vunpack.c.l.b16 %v3871
    %v4486 = vunpack.c.h.b16 %v3871
    %v4487 = vunpack.c.l.b16 %v3872
    %v4488 = vunpack.c.h.b16 %v3872
    %v4489 = vunpack.c.l.b16 %v3873
    %v4490 = vunpack.c.h.b16 %v3873
    %v4491 = vunpack.c.l.b16 %v3874
    %v4492 = vunpack.c.h.b16 %v3874
    %v4493 = vunpack.c.l.b16 %v3875
    %v4494 = vunpack.c.h.b16 %v3875
    %v4495 = vunpack.c.l.b16 %v3876
    %v4496 = vunpack.c.h.b16 %v3876
    %v4497 = vunpack.c.l.b16 %v3877
    %v4498 = vunpack.c.h.b16 %v3877
    %v4499 = vunpack.c.l.b16 %v3878
    %v4500 = vunpack.c.h.b16 %v3878
    %v4501 = vunpack.c.l.b16 %v3879
    %v4502 = vunpack.c.h.b16 %v3879
    %v4503 = vunpack.c.l.b16 %v3880
    %v4504 = vunpack.c.h.b16 %v3880
    %v4505 = vunpack.c.l.b16 %v3881
    %v4506 = vunpack.c.h.b16 %v3881
    %v4507 = vunpack.c.l.b16 %v3882
    %v4508 = vunpack.c.h.b16 %v3882
    %v4509 = vunpack.c.l.b16 %v3883
    %v4510 = vunpack.c.h.b16 %v3883
    %v4511 = vunpack.c.l.b16 %v3884
    %v4512 = vunpack.c.h.b16 %v3884
    %v4513 = vunpack.c.l.b16 %v3885
    %v4514 = vunpack.c.h.b16 %v3885
    %v4515 = vunpack.c.l.b16 %v3886
    %v4516 = vunpack.c.h.b16 %v3886
    %v4517 = vunpack.c.l.b16 %v3887
    %v4518 = vunpack.c.h.b16 %v3887
    %v4519 = vunpack.c.l.b16 %v3888
    %v4520 = vunpack.c.h.b16 %v3888
    %v4521 = vunpack.c.l.b16 %v3889
    %v4522 = vunpack.c.h.b16 %v3889
    %v4523 = vunpack.c.l.b16 %v3890
    %v4524 = vunpack.c.h.b16 %v3890
    %v4525 = vunpack.c.l.b16 %v3891
    %v4526 = vunpack.c.h.b16 %v3891
    %v4527 = vunpack.c.l.b16 %v3892
    %v4528 = vunpack.c.h.b16 %v3892
    %v4529 = vunpack.c.l.b16 %v3893
    %v4530 = vunpack.c.h.b16 %v3893
    %v4531 = vunpack.c.l.b16 %v3894
    %v4532 = vunpack.c.h.b16 %v3894
    %v4533 = vunpack.c.l.b16 %v3895
    %v4534 = vunpack.c.h.b16 %v3895
    %v4535 = vunpack.c.l.b16 %v3896
    %v4536 = vunpack.c.h.b16 %v3896
    %v4537 = vunpack.c.l.b16 %v3897
    %v4538 = vunpack.c.h.b16 %v3897
    %v4539 = vunpack.c.l.b16 %v3898
    %v4540 = vunpack.c.h.b16 %v3898
    %v4541 = vunpack.c.l.b16 %v3899
    %v4542 = vunpack.c.h.b16 %v3899
    %v4543 = vunpack.c.l.b16 %v3900
    %v4544 = vunpack.c.h.b16 %v3900
    %v4545 = vunpack.c.l.b16 %v3901
    %v4546 = vunpack.c.h.b16 %v3901
    %v4547 = vunpack.c.l.b16 %v3902
    %v4548 = vunpack.c.h.b16 %v3902
    %v4549 = vunpack.c.l.b16 %v3903
    %v4550 = vunpack.c.h.b16 %v3903
    %v4551 = vunpack.c.l.b16 %v3904
    %v4552 = vunpack.c.h.b16 %v3904
    %v4553 = vunpack.c.l.b16 %v3905
    %v4554 = vunpack.c.h.b16 %v3905
    %v4555 = vunpack.c.l.b16 %v3906
    %v4556 = vunpack.c.h.b16 %v3906
    %v4557 = vunpack.c.l.b16 %v3907
    %v4558 = vunpack.c.h.b16 %v3907
    %v4559 = vunpack.c.l.b16 %v3908
    %v4560 = vunpack.c.h.b16 %v3908
    %v4561 = vunpack.c.l.b16 %v3909
    %v4562 = vunpack.c.h.b16 %v3909
    %v4563 = vunpack.c.l.b16 %v3910
    %v4564 = vunpack.c.h.b16 %v3910
    %v4565 = vunpack.c.l.b16 %v3911
    %v4566 = vunpack.c.h.b16 %v3911
    %v4567 = vunpack.c.l.b16 %v3912
    %v4568 = vunpack.c.h.b16 %v3912
    %v4569 = vunpack.c.l.b16 %v3913
    %v4570 = vunpack.c.h.b16 %v3913
    %v4571 = vunpack.c.l.b16 %v3914
    %v4572 = vunpack.c.h.b16 %v3914
    %v4573 = vunpack.c.l.b16 %v3915
    %v4574 = vunpack.c.h.b16 %v3915
    %v4575 = vunpack.c.l.b16 %v3916
    %v4576 = vunpack.c.h.b16 %v3916
    %v4577 = vunpack.c.l.b16 %v3917
    %v4578 = vunpack.c.h.b16 %v3917
    %v4579 = vunpack.c.l.b16 %v3918
    %v4580 = vunpack.c.h.b16 %v3918
    %v4581 = vunpack.c.l.b16 %v3919
    %v4582 = vunpack.c.h.b16 %v3919
    %v4583 = vunpack.c.l.b16 %v3920
    %v4584 = vunpack.c.h.b16 %v3920
    %v4585 = vunpack.c.l.b16 %v3921
    %v4586 = vunpack.c.h.b16 %v3921
    %v4587 = vunpack.c.l.b16 %v3922
    %v4588 = vunpack.c.h.b16 %v3922
    %v4589 = vunpack.c.l.b16 %v3923
    %v4590 = vunpack.c.h.b16 %v3923
    %v4591 = vunpack.c.l.b16 %v3924
    %v4592 = vunpack.c.h.b16 %v3924
    %v4593 = vunpack.c.l.b16 %v3925
    %v4594 = vunpack.c.h.b16 %v3925
    %v4595 = vunpack.c.l.b16 %v3926
    %v4596 = vunpack.c.h.b16 %v3926
    %v4597 = vunpack.c.l.b16 %v3927
    %v4598 = vunpack.c.h.b16 %v3927
    %v4599 = vunpack.c.l.b16 %v3928
    %v4600 = vunpack.c.h.b16 %v3928
    %v4601 = vunpack.c.l.b16 %v3929
    %v4602 = vunpack.c.h.b16 %v3929
    %v4603 = vunpack.c.l.b16 %v3930
    %v4604 = vunpack.c.h.b16 %v3930
    %v4605 = vunpack.c.l.b16 %v3931
    %v4606 = vunpack.c.h.b16 %v3931
    %v4607 = vunpack.c.l.b16 %v3932
    %v4608 = vunpack.c.h.b16 %v3932
    %v4609 = vunpack.c.l.b16 %v3933
    %v4610 = vunpack.c.h.b16 %v3933
    %v4611 = vunpack.c.l.b16 %v3934
    %v4612 = vunpack.c.h.b16 %v3934
    %v4613 = vunpack.c.l.b16 %v3935
    %v4614 = vunpack.c.h.b16 %v3935
    %v4615 = vunpack.c.l.b16 %v3936
    %v4616 = vunpack.c.h.b16 %v3936
    %v4617 = vunpack.c.l.b16 %v3937
    %v4618 = vunpack.c.h.b16 %v3937
    %v4619 = vunpack.c.l.b16 %v3938
    %v4620 = vunpack.c.h.b16 %v3938
    %v4621 = vunpack.c.l.b16 %v3939
    %v4622 = vunpack.c.h.b16 %v3939
    %v4623 = vunpack.c.l.b16 %v3940
    %v4624 = vunpack.c.h.b16 %v3940
    %v4625 = vunpack.c.l.b16 %v3941
    %v4626 = vunpack.c.h.b16 %v3941
    %v4627 = vunpack.c.l.b16 %v3942
    %v4628 = vunpack.c.h.b16 %v3942
    %v4629 = vunpack.c.l.b16 %v3943
    %v4630 = vunpack.c.h.b16 %v3943
    %v4631 = vunpack.c.l.b16 %v3944
    %v4632 = vunpack.c.h.b16 %v3944
    %v4633 = vunpack.c.l.b16 %v3945
    %v4634 = vunpack.c.h.b16 %v3945
    %v4635 = vunpack.c.l.b16 %v3946
    %v4636 = vunpack.c.h.b16 %v3946
    %v4637 = vunpack.c.l.b16 %v3947
    %v4638 = vunpack.c.h.b16 %v3947
    %v4639 = vunpack.c.l.b16 %v3948
    %v4640 = vunpack.c.h.b16 %v3948
    %v4641 = vunpack.c.l.b16 %v3949
    %v4642 = vunpack.c.h.b16 %v3949
    %v4643 = vunpack.c.l.b16 %v3950
    %v4644 = vunpack.c.h.b16 %v3950
    %v4645 = vunpack.c.l.b16 %v3951
    %v4646 = vunpack.c.h.b16 %v3951
    %v4647 = vunpack.c.l.b16 %v3952
    %v4648 = vunpack.c.h.b16 %v3952
    %v4649 = vunpack.c.l.b16 %v3953
    %v4650 = vunpack.c.h.b16 %v3953
    %v4651 = vunpack.c.l.b16 %v3954
    %v4652 = vunpack.c.h.b16 %v3954
    %v4653 = vunpack.c.l.b16 %v3955
    %v4654 = vunpack.c.h.b16 %v3955
    %v4655 = vunpack.c.l.b16 %v3956
    %v4656 = vunpack.c.h.b16 %v3956
    %v4657 = vunpack.c.l.b16 %v3957
    %v4658 = vunpack.c.h.b16 %v3957
    %v4659 = vunpack.c.l.b16 %v3958
    %v4660 = vunpack.c.h.b16 %v3958
    %v4661 = vunpack.c.l.b16 %v3959
    %v4662 = vunpack.c.h.b16 %v3959
    %v4663 = vunpack.c.l.b16 %v3960
    %v4664 = vunpack.c.h.b16 %v3960
    %v4665 = vunpack.c.l.b16 %v3961
    %v4666 = vunpack.c.h.b16 %v3961
    %v4667 = vunpack.c.l.b16 %v3962
    %v4668 = vunpack.c.h.b16 %v3962
    %v4669 = vunpack.c.l.b16 %v3963
    %v4670 = vunpack.c.h.b16 %v3963
    %v4671 = vunpack.c.l.b16 %v3964
    %v4672 = vunpack.c.h.b16 %v3964
    %v4673 = vunpack.c.l.b16 %v3965
    %v4674 = vunpack.c.h.b16 %v3965
    %v4675 = vunpack.c.l.b16 %v3966
    %v4676 = vunpack.c.h.b16 %v3966
    %v4677 = vunpack.c.l.b16 %v3967
    %v4678 = vunpack.c.h.b16 %v3967
    %v4679 = vunpack.c.l.b16 %v3968
    %v4680 = vunpack.c.h.b16 %v3968
    %v4681 = vunpack.c.l.b16 %v3969
    %v4682 = vunpack.c.h.b16 %v3969
    %v4683 = vunpack.c.l.b16 %v3970
    %v4684 = vunpack.c.h.b16 %v3970
    %v4685 = vunpack.c.l.b16 %v3971
    %v4686 = vunpack.c.h.b16 %v3971
    %v4687 = vunpack.c.l.b16 %v3972
    %v4688 = vunpack.c.h.b16 %v3972
    %v4689 = vunpack.c.l.b16 %v3973
    %v4690 = vunpack.c.h.b16 %v3973
    %v4691 = vunpack.c.l.b16 %v3974
    %v4692 = vunpack.c.h.b16 %v3974
    %v4693 = vunpack.c.l.b16 %v3975
    %v4694 = vunpack.c.h.b16 %v3975
    %v4695 = vunpack.c.l.b16 %v3976
    %v4696 = vunpack.c.h.b16 %v3976
    %v4697 = vunpack.c.l.b16 %v3977
    %v4698 = vunpack.c.h.b16 %v3977
    %v4699 = vunpack.c.l.b16 %v3978
    %v4700 = vunpack.c.h.b16 %v3978
    %v4701 = vunpack.c.l.b16 %v3979
    %v4702 = vunpack.c.h.b16 %v3979
    %v4703 = vunpack.c.l.b16 %v3980
    %v4704 = vunpack.c.h.b16 %v3980
    %v4705 = vunpack.c.l.b16 %v3981
    %v4706 = vunpack.c.h.b16 %v3981
    %v4707 = vunpack.c.l.b16 %v3982
    %v4708 = vunpack.c.h.b16 %v3982
    %v4709 = vunpack.c.l.b16 %v3983
    %v4710 = vunpack.c.h.b16 %v3983
    %v4711 = vunpack.c.l.b16 %v3984
    %v4712 = vunpack.c.h.b16 %v3984
    %v4713 = vunpack.c.l.b16 %v3985
    %v4714 = vunpack.c.h.b16 %v3985
    %v4715 = vunpack.c.l.b16 %v3986
    %v4716 = vunpack.c.h.b16 %v3986
    %v4717 = vunpack.c.l.b16 %v3987
    %v4718 = vunpack.c.h.b16 %v3987
    %v4719 = vunpack.c.l.b16 %v3988
    %v4720 = vunpack.c.h.b16 %v3988
    %v4721 = vunpack.c.l.b16 %v3989
    %v4722 = vunpack.c.h.b16 %v3989
    %v4723 = vunpack.c.l.b16 %v3990
    %v4724 = vunpack.c.h.b16 %v3990
    %v4725 = vunpack.c.l.b16 %v3991
    %v4726 = vunpack.c.h.b16 %v3991
    %v4727 = vunpack.c.l.b16 %v3992
    %v4728 = vunpack.c.h.b16 %v3992
    %v4729 = vunpack.c.l.b16 %v3993
    %v4730 = vunpack.c.h.b16 %v3993
    %v4731 = vunpack.c.l.b16 %v3994
    %v4732 = vunpack.c.h.b16 %v3994
    %v4733 = vunpack.c.l.b16 %v3995
    %v4734 = vunpack.c.h.b16 %v3995
    %v4735 = vunpack.c.l.b16 %v3996
    %v4736 = vunpack.c.h.b16 %v3996
    %v4737 = vunpack.c.l.b16 %v3997
    %v4738 = vunpack.c.h.b16 %v3997
    %v4739 = vunpack.c.l.b16 %v3998
    %v4740 = vunpack.c.h.b16 %v3998
    %v4741 = vunpack.c.l.b16 %v3999
    %v4742 = vunpack.c.h.b16 %v3999
    %v4743 = vunpack.c.l.b16 %v4000
    %v4744 = vunpack.c.h.b16 %v4000
    %v4745 = vunpack.c.l.b16 %v4001
    %v4746 = vunpack.c.h.b16 %v4001
    %v4747 = vunpack.c.l.b16 %v4002
    %v4748 = vunpack.c.h.b16 %v4002
    %v4749 = vunpack.c.l.b16 %v4003
    %v4750 = vunpack.c.h.b16 %v4003
    %v4751 = vunpack.c.l.b16 %v4004
    %v4752 = vunpack.c.h.b16 %v4004
    %v4753 = vunpack.c.l.b16 %v4005
    %v4754 = vunpack.c.h.b16 %v4005
    %v4755 = vunpack.c.l.b16 %v4006
    %v4756 = vunpack.c.h.b16 %v4006
    %v4757 = vunpack.c.l.b16 %v4007
    %v4758 = vunpack.c.h.b16 %v4007
    %v4759 = vunpack.c.l.b16 %v4008
    %v4760 = vunpack.c.h.b16 %v4008
    %v4761 = vunpack.c.l.b16 %v4009
    %v4762 = vunpack.c.h.b16 %v4009
    %v4763 = vunpack.c.l.b16 %v4010
    %v4764 = vunpack.c.h.b16 %v4010
    %v4765 = vunpack.c.l.b16 %v4011
    %v4766 = vunpack.c.h.b16 %v4011
    %v4767 = vunpack.c.l.b16 %v4012
    %v4768 = vunpack.c.h.b16 %v4012
    %v4769 = vunpack.c.l.b16 %v4013
    %v4770 = vunpack.c.h.b16 %v4013
    %v4771 = vunpack.c.l.b16 %v4014
    %v4772 = vunpack.c.h.b16 %v4014
    %v4773 = vunpack.c.l.b16 %v4015
    %v4774 = vunpack.c.h.b16 %v4015
    %v4775 = vunpack.c.l.b16 %v4016
    %v4776 = vunpack.c.h.b16 %v4016
    %v4777 = vunpack.c.l.b16 %v4017
    %v4778 = vunpack.c.h.b16 %v4017
    %v4779 = vunpack.c.l.b16 %v4018
    %v4780 = vunpack.c.h.b16 %v4018
    %v4781 = vunpack.c.l.b16 %v4019
    %v4782 = vunpack.c.h.b16 %v4019
    %v4783 = vunpack.c.l.b16 %v4020
    %v4784 = vunpack.c.h.b16 %v4020
    %v4785 = vunpack.c.l.b16 %v4021
    %v4786 = vunpack.c.h.b16 %v4021
    %v4787 = vunpack.c.l.b16 %v4022
    %v4788 = vunpack.c.h.b16 %v4022
    %v4789 = vunpack.c.l.b16 %v4023
    %v4790 = vunpack.c.h.b16 %v4023
    %v4791 = vunpack.c.l.b16 %v4024
    %v4792 = vunpack.c.h.b16 %v4024
    %v4793 = vunpack.c.l.b16 %v4025
    %v4794 = vunpack.c.h.b16 %v4025
    %v4795 = vunpack.c.l.b16 %v4026
    %v4796 = vunpack.c.h.b16 %v4026
    %v4797 = vunpack.c.l.b16 %v4027
    %v4798 = vunpack.c.h.b16 %v4027
    %v4799 = vunpack.c.l.b16 %v4028
    %v4800 = vunpack.c.h.b16 %v4028
    %v4801 = vunpack.c.l.b16 %v4029
    %v4802 = vunpack.c.h.b16 %v4029
    %v4803 = vunpack.c.l.b16 %v4030
    %v4804 = vunpack.c.h.b16 %v4030
    %v4805 = vunpack.c.l.b16 %v4031
    %v4806 = vunpack.c.h.b16 %v4031
    %v4807 = vunpack.c.l.b16 %v4032
    %v4808 = vunpack.c.h.b16 %v4032
    %v4809 = vunpack.c.l.b16 %v4033
    %v4810 = vunpack.c.h.b16 %v4033
    %v4811 = vunpack.c.l.b16 %v4034
    %v4812 = vunpack.c.h.b16 %v4034
    %v4813 = vunpack.c.l.b16 %v4035
    %v4814 = vunpack.c.h.b16 %v4035
    %v4815 = vunpack.c.l.b16 %v4036
    %v4816 = vunpack.c.h.b16 %v4036
    %v4817 = vunpack.c.l.b16 %v4037
    %v4818 = vunpack.c.h.b16 %v4037
    %v4819 = vunpack.c.l.b16 %v4038
    %v4820 = vunpack.c.h.b16 %v4038
    %v4821 = vunpack.c.l.b16 %v4039
    %v4822 = vunpack.c.h.b16 %v4039
    %v4823 = vunpack.c.l.b16 %v4040
    %v4824 = vunpack.c.h.b16 %v4040
    %v4825 = vunpack.c.l.b16 %v4041
    %v4826 = vunpack.c.h.b16 %v4041
    %v4827 = vunpack.c.l.b16 %v4042
    %v4828 = vunpack.c.h.b16 %v4042
    %v4829 = vunpack.c.l.b16 %v4043
    %v4830 = vunpack.c.h.b16 %v4043
    %v4831 = vunpack.c.l.b16 %v4044
    %v4832 = vunpack.c.h.b16 %v4044
    %v4833 = vunpack.c.l.b16 %v4045
    %v4834 = vunpack.c.h.b16 %v4045
    %v4835 = vunpack.c.l.b16 %v4046
    %v4836 = vunpack.c.h.b16 %v4046
    %v4837 = vunpack.c.l.b16 %v4047
    %v4838 = vunpack.c.h.b16 %v4047
    %v4839 = vunpack.c.l.b16 %v4048
    %v4840 = vunpack.c.h.b16 %v4048
    %v4841 = vunpack.c.l.b16 %v4049
    %v4842 = vunpack.c.h.b16 %v4049
    %v4843 = vunpack.c.l.b16 %v4050
    %v4844 = vunpack.c.h.b16 %v4050
    %v4845 = vunpack.c.l.b16 %v4051
    %v4846 = vunpack.c.h.b16 %v4051
    %v4847 = vunpack.c.l.b16 %v4052
    %v4848 = vunpack.c.h.b16 %v4052
    %v4849 = vunpack.c.l.b16 %v4053
    %v4850 = vunpack.c.h.b16 %v4053
    %v4851 = vunpack.c.l.b16 %v4054
    %v4852 = vunpack.c.h.b16 %v4054
    %v4853 = vunpack.c.l.b16 %v4055
    %v4854 = vunpack.c.h.b16 %v4055
    %v4855 = vunpack.c.l.b16 %v4056
    %v4856 = vunpack.c.h.b16 %v4056
    %v4857 = vunpack.c.l.b16 %v4057
    %v4858 = vunpack.c.h.b16 %v4057
    %v4859 = vunpack.c.l.b16 %v4058
    %v4860 = vunpack.c.h.b16 %v4058
    %v4861 = vunpack.c.l.b16 %v4059
    %v4862 = vunpack.c.h.b16 %v4059
    %v4863 = vunpack.c.l.b16 %v4060
    %v4864 = vunpack.c.h.b16 %v4060
    %v4865 = vunpack.c.l.b16 %v4061
    %v4866 = vunpack.c.h.b16 %v4061
    %v4867 = vunpack.c.l.b16 %v4062
    %v4868 = vunpack.c.h.b16 %v4062
    %v4869 = vunpack.c.l.b16 %v4063
    %v4870 = vunpack.c.h.b16 %v4063
    %v4871 = vunpack.c.l.b16 %v4064
    %v4872 = vunpack.c.h.b16 %v4064
    %v4873 = vunpack.c.l.b16 %v4065
    %v4874 = vunpack.c.h.b16 %v4065
    %v4875 = vunpack.c.l.b16 %v4066
    %v4876 = vunpack.c.h.b16 %v4066
    %v4877 = vpack.c.b16 %v4373, %v4365
    %v4878 = vpack.c.b16 %v4374, %v4366
    %v4879 = vpack.c.b16 %v4375, %v4367
    %v4880 = vpack.c.b16 %v4376, %v4368
    %v4881 = vpack.c.b16 %v4377, %v4369
    %v4882 = vpack.c.b16 %v4378, %v4370
    %v4883 = vpack.c.b16 %v4379, %v4371
    %v4884 = vpack.c.b16 %v4380, %v4372
    %v4885 = vpack.c.b16 %v4389, %v4381
    %v4886 = vpack.c.b16 %v4390, %v4382
    %v4887 = vpack.c.b16 %v4391, %v4383
    %v4888 = vpack.c.b16 %v4392, %v4384
    %v4889 = vpack.c.b16 %v4393, %v4385
    %v4890 = vpack.c.b16 %v4394, %v4386
    %v4891 = vpack.c.b16 %v4395, %v4387
    %v4892 = vpack.c.b16 %v4396, %v4388
    %v4893 = vpack.c.b16 %v4405, %v4397
    %v4894 = vpack.c.b16 %v4406, %v4398
    %v4895 = vpack.c.b16 %v4407, %v4399
    %v4896 = vpack.c.b16 %v4408, %v4400
    %v4897 = vpack.c.b16 %v4409, %v4401
    %v4898 = vpack.c.b16 %v4410, %v4402
    %v4899 = vpack.c.b16 %v4411, %v4403
    %v4900 = vpack.c.b16 %v4412, %v4404
    %v4901 = vpack.c.b16 %v4421, %v4413
    %v4902 = vpack.c.b16 %v4422, %v4414
    %v4903 = vpack.c.b16 %v4423, %v4415
    %v4904 = vpack.c.b16 %v4424, %v4416
    %v4905 = vpack.c.b16 %v4425, %v4417
    %v4906 = vpack.c.b16 %v4426, %v4418
    %v4907 = vpack.c.b16 %v4427, %v4419
    %v4908 = vpack.c.b16 %v4428, %v4420
    %v4909 = vpack.c.b16 %v4437, %v4429
    %v4910 = vpack.c.b16 %v4438, %v4430
    %v4911 = vpack.c.b16 %v4439, %v4431
    %v4912 = vpack.c.b16 %v4440, %v4432
    %v4913 = vpack.c.b16 %v4441, %v4433
    %v4914 = vpack.c.b16 %v4442, %v4434
    %v4915 = vpack.c.b16 %v4443, %v4435
    %v4916 = vpack.c.b16 %v4444, %v4436
    %v4917 = vpack.c.b16 %v4453, %v4445
    %v4918 = vpack.c.b16 %v4454, %v4446
    %v4919 = vpack.c.b16 %v4455, %v4447
    %v4920 = vpack.c.b16 %v4456, %v4448
    %v4921 = vpack.c.b16 %v4457, %v4449
    %v4922 = vpack.c.b16 %v4458, %v4450
    %v4923 = vpack.c.b16 %v4459, %v4451
    %v4924 = vpack.c.b16 %v4460, %v4452
    %v4925 = vpack.c.b16 %v4469, %v4461
    %v4926 = vpack.c.b16 %v4470, %v4462
    %v4927 = vpack.c.b16 %v4471, %v4463
    %v4928 = vpack.c.b16 %v4472, %v4464
    %v4929 = vpack.c.b16 %v4473, %v4465
    %v4930 = vpack.c.b16 %v4474, %v4466
    %v4931 = vpack.c.b16 %v4475, %v4467
    %v4932 = vpack.c.b16 %v4476, %v4468
    %v4933 = vpack.c.b16 %v4485, %v4477
    %v4934 = vpack.c.b16 %v4486, %v4478
    %v4935 = vpack.c.b16 %v4487, %v4479
    %v4936 = vpack.c.b16 %v4488, %v4480
    %v4937 = vpack.c.b16 %v4489, %v4481
    %v4938 = vpack.c.b16 %v4490, %v4482
    %v4939 = vpack.c.b16 %v4491, %v4483
    %v4940 = vpack.c.b16 %v4492, %v4484
    %v4941 = vpack.c.b16 %v4501, %v4493
    %v4942 = vpack.c.b16 %v4502, %v4494
    %v4943 = vpack.c.b16 %v4503, %v4495
    %v4944 = vpack.c.b16 %v4504, %v4496
    %v4945 = vpack.c.b16 %v4505, %v4497
    %v4946 = vpack.c.b16 %v4506, %v4498
    %v4947 = vpack.c.b16 %v4507, %v4499
    %v4948 = vpack.c.b16 %v4508, %v4500
    %v4949 = vpack.c.b16 %v4517, %v4509
    %v4950 = vpack.c.b16 %v4518, %v4510
    %v4951 = vpack.c.b16 %v4519, %v4511
    %v4952 = vpack.c.b16 %v4520, %v4512
    %v4953 = vpack.c.b16 %v4521, %v4513
    %v4954 = vpack.c.b16 %v4522, %v4514
    %v4955 = vpack.c.b16 %v4523, %v4515
    %v4956 = vpack.c.b16 %v4524, %v4516
    %v4957 = vpack.c.b16 %v4533, %v4525
    %v4958 = vpack.c.b16 %v4534, %v4526
    %v4959 = vpack.c.b16 %v4535, %v4527
    %v4960 = vpack.c.b16 %v4536, %v4528
    %v4961 = vpack.c.b16 %v4537, %v4529
    %v4962 = vpack.c.b16 %v4538, %v4530
    %v4963 = vpack.c.b16 %v4539, %v4531
    %v4964 = vpack.c.b16 %v4540, %v4532
    %v4965 = vpack.c.b16 %v4549, %v4541
    %v4966 = vpack.c.b16 %v4550, %v4542
    %v4967 = vpack.c.b16 %v4551, %v4543
    %v4968 = vpack.c.b16 %v4552, %v4544
    %v4969 = vpack.c.b16 %v4553, %v4545
    %v4970 = vpack.c.b16 %v4554, %v4546
    %v4971 = vpack.c.b16 %v4555, %v4547
    %v4972 = vpack.c.b16 %v4556, %v4548
    %v4973 = vpack.c.b16 %v4565, %v4557
    %v4974 = vpack.c.b16 %v4566, %v4558
    %v4975 = vpack.c.b16 %v4567, %v4559
    %v4976 = vpack.c.b16 %v4568, %v4560
    %v4977 = vpack.c.b16 %v4569, %v4561
    %v4978 = vpack.c.b16 %v4570, %v4562
    %v4979 = vpack.c.b16 %v4571, %v4563
    %v4980 = vpack.c.b16 %v4572, %v4564
    %v4981 = vpack.c.b16 %v4581, %v4573
    %v4982 = vpack.c.b16 %v4582, %v4574
    %v4983 = vpack.c.b16 %v4583, %v4575
    %v4984 = vpack.c.b16 %v4584, %v4576
    %v4985 = vpack.c.b16 %v4585, %v4577
    %v4986 = vpack.c.b16 %v4586, %v4578
    %v4987 = vpack.c.b16 %v4587, %v4579
    %v4988 = vpack.c.b16 %v4588, %v4580
    %v4989 = vpack.c.b16 %v4597, %v4589
    %v4990 = vpack.c.b16 %v4598, %v4590
    %v4991 = vpack.c.b16 %v4599, %v4591
    %v4992 = vpack.c.b16 %v4600, %v4592
    %v4993 = vpack.c.b16 %v4601, %v4593
    %v4994 = vpack.c.b16 %v4602, %v4594
    %v4995 = vpack.c.b16 %v4603, %v4595
    %v4996 = vpack.c.b16 %v4604, %v4596
    %v4997 = vpack.c.b16 %v4613, %v4605
    %v4998 = vpack.c.b16 %v4614, %v4606
    %v4999 = vpack.c.b16 %v4615, %v4607
    %v5000 = vpack.c.b16 %v4616, %v4608
    %v5001 = vpack.c.b16 %v4617, %v4609
    %v5002 = vpack.c.b16 %v4618, %v4610
    %v5003 = vpack.c.b16 %v4619, %v4611
    %v5004 = vpack.c.b16 %v4620, %v4612
    %v5005 = vpack.c.b16 %v4629, %v4621
    %v5006 = vpack.c.b16 %v4630, %v4622
    %v5007 = vpack.c.b16 %v4631, %v4623
    %v5008 = vpack.c.b16 %v4632, %v4624
    %v5009 = vpack.c.b16 %v4633, %v4625
    %v5010 = vpack.c.b16 %v4634, %v4626
    %v5011 = vpack.c.b16 %v4635, %v4627
    %v5012 = vpack.c.b16 %v4636, %v4628
    %v5013 = vpack.c.b16 %v4645, %v4637
    %v5014 = vpack.c.b16 %v4646, %v4638
    %v5015 = vpack.c.b16 %v4647, %v4639
    %v5016 = vpack.c.b16 %v4648, %v4640
    %v5017 = vpack.c.b16 %v4649, %v4641
    %v5018 = vpack.c.b16 %v4650, %v4642
    %v5019 = vpack.c.b16 %v4651, %v4643
    %v5020 = vpack.c.b16 %v4652, %v4644
    %v5021 = vpack.c.b16 %v4661, %v4653
    %v5022 = vpack.c.b16 %v4662, %v4654
    %v5023 = vpack.c.b16 %v4663, %v4655
    %v5024 = vpack.c.b16 %v4664, %v4656
    %v5025 = vpack.c.b16 %v4665, %v4657
    %v5026 = vpack.c.b16 %v4666, %v4658
    %v5027 = vpack.c.b16 %v4667, %v4659
    %v5028 = vpack.c.b16 %v4668, %v4660
    %v5029 = vpack.c.b16 %v4677, %v4669
    %v5030 = vpack.c.b16 %v4678, %v4670
    %v5031 = vpack.c.b16 %v4679, %v4671
    %v5032 = vpack.c.b16 %v4680, %v4672
    %v5033 = vpack.c.b16 %v4681, %v4673
    %v5034 = vpack.c.b16 %v4682, %v4674
    %v5035 = vpack.c.b16 %v4683, %v4675
    %v5036 = vpack.c.b16 %v4684, %v4676
    %v5037 = vpack.c.b16 %v4693, %v4685
    %v5038 = vpack.c.b16 %v4694, %v4686
    %v5039 = vpack.c.b16 %v4695, %v4687
    %v5040 = vpack.c.b16 %v4696, %v4688
    %v5041 = vpack.c.b16 %v4697, %v4689
    %v5042 = vpack.c.b16 %v4698, %v4690
    %v5043 = vpack.c.b16 %v4699, %v4691
    %v5044 = vpack.c.b16 %v4700, %v4692
    %v5045 = vpack.c.b16 %v4709, %v4701
    %v5046 = vpack.c.b16 %v4710, %v4702
    %v5047 = vpack.c.b16 %v4711, %v4703
    %v5048 = vpack.c.b16 %v4712, %v4704
    %v5049 = vpack.c.b16 %v4713, %v4705
    %v5050 = vpack.c.b16 %v4714, %v4706
    %v5051 = vpack.c.b16 %v4715, %v4707
    %v5052 = vpack.c.b16 %v4716, %v4708
    %v5053 = vpack.c.b16 %v4725, %v4717
    %v5054 = vpack.c.b16 %v4726, %v4718
    %v5055 = vpack.c.b16 %v4727, %v4719
    %v5056 = vpack.c.b16 %v4728, %v4720
    %v5057 = vpack.c.b16 %v4729, %v4721
    %v5058 = vpack.c.b16 %v4730, %v4722
    %v5059 = vpack.c.b16 %v4731, %v4723
    %v5060 = vpack.c.b16 %v4732, %v4724
    %v5061 = vpack.c.b16 %v4741, %v4733
    %v5062 = vpack.c.b16 %v4742, %v4734
    %v5063 = vpack.c.b16 %v4743, %v4735
    %v5064 = vpack.c.b16 %v4744, %v4736
    %v5065 = vpack.c.b16 %v4745, %v4737
    %v5066 = vpack.c.b16 %v4746, %v4738
    %v5067 = vpack.c.b16 %v4747, %v4739
    %v5068 = vpack.c.b16 %v4748, %v4740
    %v5069 = vpack.c.b16 %v4757, %v4749
    %v5070 = vpack.c.b16 %v4758, %v4750
    %v5071 = vpack.c.b16 %v4759, %v4751
    %v5072 = vpack.c.b16 %v4760, %v4752
    %v5073 = vpack.c.b16 %v4761, %v4753
    %v5074 = vpack.c.b16 %v4762, %v4754
    %v5075 = vpack.c.b16 %v4763, %v4755
    %v5076 = vpack.c.b16 %v4764, %v4756
    %v5077 = vpack.c.b16 %v4773, %v4765
    %v5078 = vpack.c.b16 %v4774, %v4766
    %v5079 = vpack.c.b16 %v4775, %v4767
    %v5080 = vpack.c.b16 %v4776, %v4768
    %v5081 = vpack.c.b16 %v4777, %v4769
    %v5082 = vpack.c.b16 %v4778, %v4770
    %v5083 = vpack.c.b16 %v4779, %v4771
    %v5084 = vpack.c.b16 %v4780, %v4772
    %v5085 = vpack.c.b16 %v4789, %v4781
    %v5086 = vpack.c.b16 %v4790, %v4782
    %v5087 = vpack.c.b16 %v4791, %v4783
    %v5088 = vpack.c.b16 %v4792, %v4784
    %v5089 = vpack.c.b16 %v4793, %v4785
    %v5090 = vpack.c.b16 %v4794, %v4786
    %v5091 = vpack.c.b16 %v4795, %v4787
    %v5092 = vpack.c.b16 %v4796, %v4788
    %v5093 = vpack.c.b16 %v4805, %v4797
    %v5094 = vpack.c.b16 %v4806, %v4798
    %v5095 = vpack.c.b16 %v4807, %v4799
    %v5096 = vpack.c.b16 %v4808, %v4800
    %v5097 = vpack.c.b16 %v4809, %v4801
    %v5098 = vpack.c.b16 %v4810, %v4802
    %v5099 = vpack.c.b16 %v4811, %v4803
    %v5100 = vpack.c.b16 %v4812, %v4804
    %v5101 = vpack.c.b16 %v4821, %v4813
    %v5102 = vpack.c.b16 %v4822, %v4814
    %v5103 = vpack.c.b16 %v4823, %v4815
    %v5104 = vpack.c.b16 %v4824, %v4816
    %v5105 = vpack.c.b16 %v4825, %v4817
    %v5106 = vpack.c.b16 %v4826, %v4818
    %v5107 = vpack.c.b16 %v4827, %v4819
    %v5108 = vpack.c.b16 %v4828, %v4820
    %v5109 = vpack.c.b16 %v4837, %v4829
    %v5110 = vpack.c.b16 %v4838, %v4830
    %v5111 = vpack.c.b16 %v4839, %v4831
    %v5112 = vpack.c.b16 %v4840, %v4832
    %v5113 = vpack.c.b16 %v4841, %v4833
    %v5114 = vpack.c.b16 %v4842, %v4834
    %v5115 = vpack.c.b16 %v4843, %v4835
    %v5116 = vpack.c.b16 %v4844, %v4836
    %v5117 = vpack.c.b16 %v4853, %v4845
    %v5118 = vpack.c.b16 %v4854, %v4846
    %v5119 = vpack.c.b16 %v4855, %v4847
    %v5120 = vpack.c.b16 %v4856, %v4848
    %v5121 = vpack.c.b16 %v4857, %v4849
    %v5122 = vpack.c.b16 %v4858, %v4850
    %v5123 = vpack.c.b16 %v4859, %v4851
    %v5124 = vpack.c.b16 %v4860, %v4852
    %v5125 = vpack.c.b16 %v4869, %v4861
    %v5126 = vpack.c.b16 %v4870, %v4862
    %v5127 = vpack.c.b16 %v4871, %v4863
    %v5128 = vpack.c.b16 %v4872, %v4864
    %v5129 = vpack.c.b16 %v4873, %v4865
    %v5130 = vpack.c.b16 %v4874, %v4866
    %v5131 = vpack.c.b16 %v4875, %v4867
    %v5132 = vpack.c.b16 %v4876, %v4868
    %5389 = vmatprep.subr.bf16.mxu0 %v4878
    %5390 = vmatpush1.bf16.msra.mxu0 %v4877
    %5391 = vmatprep.subr.bf16.mxu0 %v4886
    %5392 = vmatpush1.bf16.msra.mxu0 %v4885
    %5393 = vmatprep.subr.bf16.mxu0 %v4894
    %5394 = vmatpush1.bf16.msra.mxu0 %v4893
    %5395 = vmatprep.subr.bf16.mxu0 %v4902
    %5396 = vmatpush1.bf16.msra.mxu0 %v4901
    %5397 = vmatprep.subr.bf16.mxu0 %v4910
    %5398 = vmatpush1.bf16.msra.mxu0 %v4909
    %5399 = vmatprep.subr.bf16.mxu0 %v4918
    %5400 = vmatpush1.bf16.msra.mxu0 %v4917
    %5401 = vmatprep.subr.bf16.mxu0 %v4926
    %5402 = vmatpush1.bf16.msra.mxu0 %v4925
    %5403 = vmatprep.subr.bf16.mxu0 %v4934
    %5404 = vmatpush1.bf16.msra.mxu0 %v4933
    %5405 = vmatprep.subr.bf16.mxu0 %v4942
    %5406 = vmatpush1.bf16.msra.mxu0 %v4941
    %5407 = vmatprep.subr.bf16.mxu0 %v4950
    %5408 = vmatpush1.bf16.msra.mxu0 %v4949
    %5409 = vmatprep.subr.bf16.mxu0 %v4958
    %5410 = vmatpush1.bf16.msra.mxu0 %v4957
    %5411 = vmatprep.subr.bf16.mxu0 %v4966
    %5412 = vmatpush1.bf16.msra.mxu0 %v4965
    %5413 = vmatprep.subr.bf16.mxu0 %v4974
    %5414 = vmatpush1.bf16.msra.mxu0 %v4973
    %5415 = vmatprep.subr.bf16.mxu0 %v4982
    %5416 = vmatpush1.bf16.msra.mxu0 %v4981
    %5417 = vmatprep.subr.bf16.mxu0 %v4990
    %5418 = vmatpush1.bf16.msra.mxu0 %v4989
    %5419 = vmatprep.subr.bf16.mxu0 %v4998
    %5420 = vmatpush1.bf16.msra.mxu0 %v4997
    %5421 = vmatprep.mubr.bf16.mxu0 %v3808
    %5422 = vmatmul.mubr.bf16.gmra.mrb[0].mxu0 %v3807
    %v5423 = vpop.f32.mrb[0].mxu0
    %v5424 = vadd.f32 %v4072, %v5423
    %v5425 = vpop.f32.mrb[0].mxu0
    %v5426 = vadd.f32 %v4076, %v5425
    %v5427 = vpop.f32.mrb[0].mxu0
    %v5428 = vpop.f32.mrb[0].mxu0
    %5429 = vdwg.mxu0
    %5430 = vmatprep.subr.bf16.mxu0 %v5006
    %5431 = vmatpush1.bf16.msra.mxu0 %v5005
    %5432 = vmatprep.subr.bf16.mxu0 %v5014
    %5433 = vmatpush1.bf16.msra.mxu0 %v5013
    %5434 = vmatprep.subr.bf16.mxu0 %v5022
    %5435 = vmatpush1.bf16.msra.mxu0 %v5021
    %5436 = vmatprep.subr.bf16.mxu0 %v5030
    %5437 = vmatpush1.bf16.msra.mxu0 %v5029
    %5438 = vmatprep.subr.bf16.mxu0 %v5038
    %5439 = vmatpush1.bf16.msra.mxu0 %v5037
    %5440 = vmatprep.subr.bf16.mxu0 %v5046
    %5441 = vmatpush1.bf16.msra.mxu0 %v5045
    %5442 = vmatprep.subr.bf16.mxu0 %v5054
    %5443 = vmatpush1.bf16.msra.mxu0 %v5053
    %5444 = vmatprep.subr.bf16.mxu0 %v5062
    %5445 = vmatpush1.bf16.msra.mxu0 %v5061
    %5446 = vmatprep.subr.bf16.mxu0 %v5070
    %5447 = vmatpush1.bf16.msra.mxu0 %v5069
    %5448 = vmatprep.subr.bf16.mxu0 %v5078
    %5449 = vmatpush1.bf16.msra.mxu0 %v5077
    %5450 = vmatprep.subr.bf16.mxu0 %v5086
    %5451 = vmatpush1.bf16.msra.mxu0 %v5085
    %5452 = vmatprep.subr.bf16.mxu0 %v5094
    %5453 = vmatpush1.bf16.msra.mxu0 %v5093
    %5454 = vmatprep.subr.bf16.mxu0 %v5102
    %5455 = vmatpush1.bf16.msra.mxu0 %v5101
    %5456 = vmatprep.subr.bf16.mxu0 %v5110
    %5457 = vmatpush1.bf16.msra.mxu0 %v5109
    %5458 = vmatprep.subr.bf16.mxu0 %v5118
    %5459 = vmatpush1.bf16.msra.mxu0 %v5117
    %5460 = vmatprep.subr.bf16.mxu0 %v5126
    %5461 = vmatpush1.bf16.msra.mxu0 %v5125
    %5462 = vmatprep.mubr.bf16.mxu0 %v3810
    %5463 = vmatmul.mubr.bf16.gmra.mrb[0].mxu0 %v3809
    %v5464 = vpop.f32.mrb[0].mxu0
    %v5465 = vadd.f32 %v5424, %v5464
    %v5466 = vpop.f32.mrb[0].mxu0
    %v5467 = vadd.f32 %v5426, %v5466
    %v5468 = vpop.f32.mrb[0].mxu0
    %v5469 = vpop.f32.mrb[0].mxu0
    %5470 = vdwg.mxu0
    %5471 = vmatprep.subr.bf16.mxu0 %v4880
    %5472 = vmatpush1.bf16.msra.mxu0 %v4879
    %5473 = vmatprep.subr.bf16.mxu0 %v4888
    %5474 = vmatpush1.bf16.msra.mxu0 %v4887
    %5475 = vmatprep.subr.bf16.mxu0 %v4896
    %5476 = vmatpush1.bf16.msra.mxu0 %v4895
    %5477 = vmatprep.subr.bf16.mxu0 %v4904
    %5478 = vmatpush1.bf16.msra.mxu0 %v4903
    %5479 = vmatprep.subr.bf16.mxu0 %v4912
    %5480 = vmatpush1.bf16.msra.mxu0 %v4911
    %5481 = vmatprep.subr.bf16.mxu0 %v4920
    %5482 = vmatpush1.bf16.msra.mxu0 %v4919
    %5483 = vmatprep.subr.bf16.mxu0 %v4928
    %5484 = vmatpush1.bf16.msra.mxu0 %v4927
    %5485 = vmatprep.subr.bf16.mxu0 %v4936
    %5486 = vmatpush1.bf16.msra.mxu0 %v4935
    %5487 = vmatprep.subr.bf16.mxu0 %v4944
    %5488 = vmatpush1.bf16.msra.mxu0 %v4943
    %5489 = vmatprep.subr.bf16.mxu0 %v4952
    %5490 = vmatpush1.bf16.msra.mxu0 %v4951
    %5491 = vmatprep.subr.bf16.mxu0 %v4960
    %5492 = vmatpush1.bf16.msra.mxu0 %v4959
    %5493 = vmatprep.subr.bf16.mxu0 %v4968
    %5494 = vmatpush1.bf16.msra.mxu0 %v4967
    %5495 = vmatprep.subr.bf16.mxu0 %v4976
    %5496 = vmatpush1.bf16.msra.mxu0 %v4975
    %5497 = vmatprep.subr.bf16.mxu0 %v4984
    %5498 = vmatpush1.bf16.msra.mxu0 %v4983
    %5499 = vmatprep.subr.bf16.mxu0 %v4992
    %5500 = vmatpush1.bf16.msra.mxu0 %v4991
    %5501 = vmatprep.subr.bf16.mxu0 %v5000
    %5502 = vmatpush1.bf16.msra.mxu0 %v4999
    %5503 = vmatprep.mubr.bf16.mxu0 %v3808
    %5504 = vmatmul.mubr.bf16.gmra.mrb[0].mxu0 %v3807
    %v5505 = vpop.f32.mrb[0].mxu0
    %v5506 = vadd.f32 %v4080, %v5505
    %v5507 = vpop.f32.mrb[0].mxu0
    %v5508 = vadd.f32 %v4084, %v5507
    %v5509 = vpop.f32.mrb[0].mxu0
    %v5510 = vpop.f32.mrb[0].mxu0
    %5511 = vdwg.mxu0
    %5512 = vmatprep.subr.bf16.mxu0 %v5008
    %5513 = vmatpush1.bf16.msra.mxu0 %v5007
    %5514 = vmatprep.subr.bf16.mxu0 %v5016
    %5515 = vmatpush1.bf16.msra.mxu0 %v5015
    %5516 = vmatprep.subr.bf16.mxu0 %v5024
    %5517 = vmatpush1.bf16.msra.mxu0 %v5023
    %5518 = vmatprep.subr.bf16.mxu0 %v5032
    %5519 = vmatpush1.bf16.msra.mxu0 %v5031
    %5520 = vmatprep.subr.bf16.mxu0 %v5040
    %5521 = vmatpush1.bf16.msra.mxu0 %v5039
    %5522 = vmatprep.subr.bf16.mxu0 %v5048
    %5523 = vmatpush1.bf16.msra.mxu0 %v5047
    %5524 = vmatprep.subr.bf16.mxu0 %v5056
    %5525 = vmatpush1.bf16.msra.mxu0 %v5055
    %5526 = vmatprep.subr.bf16.mxu0 %v5064
    %5527 = vmatpush1.bf16.msra.mxu0 %v5063
    %5528 = vmatprep.subr.bf16.mxu0 %v5072
    %5529 = vmatpush1.bf16.msra.mxu0 %v5071
    %5530 = vmatprep.subr.bf16.mxu0 %v5080
    %5531 = vmatpush1.bf16.msra.mxu0 %v5079
    %5532 = vmatprep.subr.bf16.mxu0 %v5088
    %5533 = vmatpush1.bf16.msra.mxu0 %v5087
    %5534 = vmatprep.subr.bf16.mxu0 %v5096
    %5535 = vmatpush1.bf16.msra.mxu0 %v5095
    %5536 = vmatprep.subr.bf16.mxu0 %v5104
    %5537 = vmatpush1.bf16.msra.mxu0 %v5103
    %5538 = vmatprep.subr.bf16.mxu0 %v5112
    %5539 = vmatpush1.bf16.msra.mxu0 %v5111
    %5540 = vmatprep.subr.bf16.mxu0 %v5120
    %5541 = vmatpush1.bf16.msra.mxu0 %v5119
    %5542 = vmatprep.subr.bf16.mxu0 %v5128
    %5543 = vmatpush1.bf16.msra.mxu0 %v5127
    %5544 = vmatprep.mubr.bf16.mxu0 %v3810
    %5545 = vmatmul.mubr.bf16.gmra.mrb[0].mxu0 %v3809
    %v5546 = vpop.f32.mrb[0].mxu0
    %v5547 = vadd.f32 %v5506, %v5546
    %v5548 = vpop.f32.mrb[0].mxu0
    %v5549 = vadd.f32 %v5508, %v5548
    %v5550 = vpop.f32.mrb[0].mxu0
    %v5551 = vpop.f32.mrb[0].mxu0
    %5552 = vdwg.mxu0
    %5553 = vmatprep.subr.bf16.mxu0 %v4882
    %5554 = vmatpush1.bf16.msra.mxu0 %v4881
    %5555 = vmatprep.subr.bf16.mxu0 %v4890
    %5556 = vmatpush1.bf16.msra.mxu0 %v4889
    %5557 = vmatprep.subr.bf16.mxu0 %v4898
    %5558 = vmatpush1.bf16.msra.mxu0 %v4897
    %5559 = vmatprep.subr.bf16.mxu0 %v4906
    %5560 = vmatpush1.bf16.msra.mxu0 %v4905
    %5561 = vmatprep.subr.bf16.mxu0 %v4914
    %5562 = vmatpush1.bf16.msra.mxu0 %v4913
    %5563 = vmatprep.subr.bf16.mxu0 %v4922
    %5564 = vmatpush1.bf16.msra.mxu0 %v4921
    %5565 = vmatprep.subr.bf16.mxu0 %v4930
    %5566 = vmatpush1.bf16.msra.mxu0 %v4929
    %5567 = vmatprep.subr.bf16.mxu0 %v4938
    %5568 = vmatpush1.bf16.msra.mxu0 %v4937
    %5569 = vmatprep.subr.bf16.mxu0 %v4946
    %5570 = vmatpush1.bf16.msra.mxu0 %v4945
    %5571 = vmatprep.subr.bf16.mxu0 %v4954
    %5572 = vmatpush1.bf16.msra.mxu0 %v4953
    %5573 = vmatprep.subr.bf16.mxu0 %v4962
    %5574 = vmatpush1.bf16.msra.mxu0 %v4961
    %5575 = vmatprep.subr.bf16.mxu0 %v4970
    %5576 = vmatpush1.bf16.msra.mxu0 %v4969
    %5577 = vmatprep.subr.bf16.mxu0 %v4978
    %5578 = vmatpush1.bf16.msra.mxu0 %v4977
    %5579 = vmatprep.subr.bf16.mxu0 %v4986
    %5580 = vmatpush1.bf16.msra.mxu0 %v4985
    %5581 = vmatprep.subr.bf16.mxu0 %v4994
    %5582 = vmatpush1.bf16.msra.mxu0 %v4993
    %5583 = vmatprep.subr.bf16.mxu0 %v5002
    %5584 = vmatpush1.bf16.msra.mxu0 %v5001
    %5585 = vmatprep.mubr.bf16.mxu0 %v3808
    %5586 = vmatmul.mubr.bf16.gmra.mrb[0].mxu0 %v3807
    %v5587 = vpop.f32.mrb[0].mxu0
    %v5588 = vadd.f32 %v4088, %v5587
    %v5589 = vpop.f32.mrb[0].mxu0
    %v5590 = vadd.f32 %v4092, %v5589
    %v5591 = vpop.f32.mrb[0].mxu0
    %v5592 = vpop.f32.mrb[0].mxu0
    %5593 = vdwg.mxu0
    %5594 = vmatprep.subr.bf16.mxu0 %v5010
    %5595 = vmatpush1.bf16.msra.mxu0 %v5009
    %5596 = vmatprep.subr.bf16.mxu0 %v5018
    %5597 = vmatpush1.bf16.msra.mxu0 %v5017
    %5598 = vmatprep.subr.bf16.mxu0 %v5026
    %5599 = vmatpush1.bf16.msra.mxu0 %v5025
    %5600 = vmatprep.subr.bf16.mxu0 %v5034
    %5601 = vmatpush1.bf16.msra.mxu0 %v5033
    %5602 = vmatprep.subr.bf16.mxu0 %v5042
    %5603 = vmatpush1.bf16.msra.mxu0 %v5041
    %5604 = vmatprep.subr.bf16.mxu0 %v5050
    %5605 = vmatpush1.bf16.msra.mxu0 %v5049
    %5606 = vmatprep.subr.bf16.mxu0 %v5058
    %5607 = vmatpush1.bf16.msra.mxu0 %v5057
    %5608 = vmatprep.subr.bf16.mxu0 %v5066
    %5609 = vmatpush1.bf16.msra.mxu0 %v5065
    %5610 = vmatprep.subr.bf16.mxu0 %v5074
    %5611 = vmatpush1.bf16.msra.mxu0 %v5073
    %5612 = vmatprep.subr.bf16.mxu0 %v5082
    %5613 = vmatpush1.bf16.msra.mxu0 %v5081
    %5614 = vmatprep.subr.bf16.mxu0 %v5090
    %5615 = vmatpush1.bf16.msra.mxu0 %v5089
    %5616 = vmatprep.subr.bf16.mxu0 %v5098
    %5617 = vmatpush1.bf16.msra.mxu0 %v5097
    %5618 = vmatprep.subr.bf16.mxu0 %v5106
    %5619 = vmatpush1.bf16.msra.mxu0 %v5105
    %5620 = vmatprep.subr.bf16.mxu0 %v5114
    %5621 = vmatpush1.bf16.msra.mxu0 %v5113
    %5622 = vmatprep.subr.bf16.mxu0 %v5122
    %5623 = vmatpush1.bf16.msra.mxu0 %v5121
    %5624 = vmatprep.subr.bf16.mxu0 %v5130
    %5625 = vmatpush1.bf16.msra.mxu0 %v5129
    %5626 = vmatprep.mubr.bf16.mxu0 %v3810
    %5627 = vmatmul.mubr.bf16.gmra.mrb[0].mxu0 %v3809
    %v5628 = vpop.f32.mrb[0].mxu0
    %v5629 = vadd.f32 %v5588, %v5628
    %v5630 = vpop.f32.mrb[0].mxu0
    %v5631 = vadd.f32 %v5590, %v5630
    %v5632 = vpop.f32.mrb[0].mxu0
    %v5633 = vpop.f32.mrb[0].mxu0
    %5634 = vdwg.mxu0
    %5635 = vmatprep.subr.bf16.mxu0 %v4884
    %5636 = vmatpush1.bf16.msra.mxu0 %v4883
    %5637 = vmatprep.subr.bf16.mxu0 %v4892
    %5638 = vmatpush1.bf16.msra.mxu0 %v4891
    %5639 = vmatprep.subr.bf16.mxu0 %v4900
    %5640 = vmatpush1.bf16.msra.mxu0 %v4899
    %5641 = vmatprep.subr.bf16.mxu0 %v4908
    %5642 = vmatpush1.bf16.msra.mxu0 %v4907
    %5643 = vmatprep.subr.bf16.mxu0 %v4916
    %5644 = vmatpush1.bf16.msra.mxu0 %v4915
    %5645 = vmatprep.subr.bf16.mxu0 %v4924
    %5646 = vmatpush1.bf16.msra.mxu0 %v4923
    %5647 = vmatprep.subr.bf16.mxu0 %v4932
    %5648 = vmatpush1.bf16.msra.mxu0 %v4931
    %5649 = vmatprep.subr.bf16.mxu0 %v4940
    %5650 = vmatpush1.bf16.msra.mxu0 %v4939
    %5651 = vmatprep.subr.bf16.mxu0 %v4948
    %5652 = vmatpush1.bf16.msra.mxu0 %v4947
    %5653 = vmatprep.subr.bf16.mxu0 %v4956
    %5654 = vmatpush1.bf16.msra.mxu0 %v4955
    %5655 = vmatprep.subr.bf16.mxu0 %v4964
    %5656 = vmatpush1.bf16.msra.mxu0 %v4963
    %5657 = vmatprep.subr.bf16.mxu0 %v4972
    %5658 = vmatpush1.bf16.msra.mxu0 %v4971
    %5659 = vmatprep.subr.bf16.mxu0 %v4980
    %5660 = vmatpush1.bf16.msra.mxu0 %v4979
    %5661 = vmatprep.subr.bf16.mxu0 %v4988
    %5662 = vmatpush1.bf16.msra.mxu0 %v4987
    %5663 = vmatprep.subr.bf16.mxu0 %v4996
    %5664 = vmatpush1.bf16.msra.mxu0 %v4995
    %5665 = vmatprep.subr.bf16.mxu0 %v5004
    %5666 = vmatpush1.bf16.msra.mxu0 %v5003
    %5667 = vmatprep.mubr.bf16.mxu0 %v3808
    %5668 = vmatmul.mubr.bf16.gmra.mrb[0].mxu0 %v3807
    %v5669 = vpop.f32.mrb[0].mxu0
    %v5670 = vadd.f32 %v4096, %v5669
    %v5671 = vpop.f32.mrb[0].mxu0
    %v5672 = vadd.f32 %v4100, %v5671
    %v5673 = vpop.f32.mrb[0].mxu0
    %v5674 = vpop.f32.mrb[0].mxu0
    %5675 = vdwg.mxu0
    %5676 = vmatprep.subr.bf16.mxu0 %v5012
    %5677 = vmatpush1.bf16.msra.mxu0 %v5011
    %5678 = vmatprep.subr.bf16.mxu0 %v5020
    %5679 = vmatpush1.bf16.msra.mxu0 %v5019
    %5680 = vmatprep.subr.bf16.mxu0 %v5028
    %5681 = vmatpush1.bf16.msra.mxu0 %v5027
    %5682 = vmatprep.subr.bf16.mxu0 %v5036
    %5683 = vmatpush1.bf16.msra.mxu0 %v5035
    %5684 = vmatprep.subr.bf16.mxu0 %v5044
    %5685 = vmatpush1.bf16.msra.mxu0 %v5043
    %5686 = vmatprep.subr.bf16.mxu0 %v5052
    %5687 = vmatpush1.bf16.msra.mxu0 %v5051
    %5688 = vmatprep.subr.bf16.mxu0 %v5060
    %5689 = vmatpush1.bf16.msra.mxu0 %v5059
    %5690 = vmatprep.subr.bf16.mxu0 %v5068
    %5691 = vmatpush1.bf16.msra.mxu0 %v5067
    %5692 = vmatprep.subr.bf16.mxu0 %v5076
    %5693 = vmatpush1.bf16.msra.mxu0 %v5075
    %5694 = vmatprep.subr.bf16.mxu0 %v5084
    %5695 = vmatpush1.bf16.msra.mxu0 %v5083
    %5696 = vmatprep.subr.bf16.mxu0 %v5092
    %5697 = vmatpush1.bf16.msra.mxu0 %v5091
    %5698 = vmatprep.subr.bf16.mxu0 %v5100
    %5699 = vmatpush1.bf16.msra.mxu0 %v5099
    %5700 = vmatprep.subr.bf16.mxu0 %v5108
    %5701 = vmatpush1.bf16.msra.mxu0 %v5107
    %5702 = vmatprep.subr.bf16.mxu0 %v5116
    %5703 = vmatpush1.bf16.msra.mxu0 %v5115
    %5704 = vmatprep.subr.bf16.mxu0 %v5124
    %5705 = vmatpush1.bf16.msra.mxu0 %v5123
    %5706 = vmatprep.subr.bf16.mxu0 %v5132
    %5707 = vmatpush1.bf16.msra.mxu0 %v5131
    %5708 = vmatprep.mubr.bf16.mxu0 %v3810
    %5709 = vmatmul.mubr.bf16.gmra.mrb[0].mxu0 %v3809
    %v5710 = vpop.f32.mrb[0].mxu0
    %v5711 = vadd.f32 %v5670, %v5710
    %v5712 = vpop.f32.mrb[0].mxu0
    %v5713 = vadd.f32 %v5672, %v5712
    %v5714 = vpop.f32.mrb[0].mxu0
    %v5715 = vpop.f32.mrb[0].mxu0
    %5716 = vdwg.mxu0
    %v5717 = vmax.f32 %v5465, 0.0
    %v5718 = vmax.f32 %v5467, 0.0
    %v5719 = vmax.f32 %v5547, 0.0
    %v5720 = vmax.f32 %v5549, 0.0
    %v5721 = vmax.f32 %v5629, 0.0
    %v5722 = vmax.f32 %v5631, 0.0
    %v5723 = vmax.f32 %v5711, 0.0
    %v5724 = vmax.f32 %v5713, 0.0
    %v5725 = vpack.c.bf16 %v5717, %v5717
    %v5726 = vpack.c.bf16 %v5718, %v5718
    %v5727 = vpack.c.bf16 %v5719, %v5719
    %v5728 = vpack.c.bf16 %v5720, %v5720
    %v5729 = vpack.c.bf16 %v5721, %v5721
    %v5730 = vpack.c.bf16 %v5722, %v5722
    %v5731 = vpack.c.bf16 %v5723, %v5723
    %v5732 = vpack.c.bf16 %v5724, %v5724
    %v5733 = vld [vmem:[#allocation10] sm:$0xff]
    %v5734 = vld [vmem:[#allocation10 + $0x8] sm:$0xff]
    %v5735 = vld [vmem:[#allocation10 + $0x10] sm:$0xff]
    %v5736 = vld [vmem:[#allocation10 + $0x18] sm:$0xff]
    %v5737 = vld [vmem:[#allocation10 + $0x20] sm:$0xff]
    %v5738 = vld [vmem:[#allocation10 + $0x28] sm:$0xff]
    %v5739 = vld [vmem:[#allocation10 + $0x30] sm:$0xff]
    %v5740 = vld [vmem:[#allocation10 + $0x38] sm:$0xff]
    %v5741 = vld [vmem:[#allocation10 + $0x40] sm:$0xff]
    %v5742 = vld [vmem:[#allocation10 + $0x48] sm:$0xff]
    %v5743 = vld [vmem:[#allocation10 + $0x50] sm:$0xff]
    %v5744 = vld [vmem:[#allocation10 + $0x58] sm:$0xff]
    %v5745 = vld [vmem:[#allocation10 + $0x60] sm:$0xff]
    %v5746 = vld [vmem:[#allocation10 + $0x68] sm:$0xff]
    %v5747 = vld [vmem:[#allocation10 + $0x70] sm:$0xff]
    %v5748 = vld [vmem:[#allocation10 + $0x78] sm:$0xff]
    %v5749 = vld [vmem:[#allocation10 + $0x80] sm:$0xff]
    %v5750 = vld [vmem:[#allocation10 + $0x88] sm:$0xff]
    %v5751 = vld [vmem:[#allocation10 + $0x90] sm:$0xff]
    %v5752 = vld [vmem:[#allocation10 + $0x98] sm:$0xff]
    %v5753 = vld [vmem:[#allocation10 + $0xa0] sm:$0xff]
    %v5754 = vld [vmem:[#allocation10 + $0xa8] sm:$0xff]
    %v5755 = vld [vmem:[#allocation10 + $0xb0] sm:$0xff]
    %v5756 = vld [vmem:[#allocation10 + $0xb8] sm:$0xff]
    %v5757 = vld [vmem:[#allocation10 + $0xc0] sm:$0xff]
    %v5758 = vld [vmem:[#allocation10 + $0xc8] sm:$0xff]
    %v5759 = vld [vmem:[#allocation10 + $0xd0] sm:$0xff]
    %v5760 = vld [vmem:[#allocation10 + $0xd8] sm:$0xff]
    %v5761 = vld [vmem:[#allocation10 + $0xe0] sm:$0xff]
    %v5762 = vld [vmem:[#allocation10 + $0xe8] sm:$0xff]
    %v5763 = vld [vmem:[#allocation10 + $0xf0] sm:$0xff]
    %v5764 = vld [vmem:[#allocation10 + $0xf8] sm:$0xff]
    %v5765 = vld [vmem:[#allocation10 + $0x100] sm:$0xff]
    %v5766 = vld [vmem:[#allocation10 + $0x108] sm:$0xff]
    %v5767 = vld [vmem:[#allocation10 + $0x110] sm:$0xff]
    %v5768 = vld [vmem:[#allocation10 + $0x118] sm:$0xff]
    %v5769 = vld [vmem:[#allocation10 + $0x120] sm:$0xff]
    %v5770 = vld [vmem:[#allocation10 + $0x128] sm:$0xff]
    %v5771 = vld [vmem:[#allocation10 + $0x130] sm:$0xff]
    %v5772 = vld [vmem:[#allocation10 + $0x138] sm:$0xff]
    %v5773 = vld [vmem:[#allocation10 + $0x140] sm:$0xff]
    %v5774 = vld [vmem:[#allocation10 + $0x148] sm:$0xff]
    %v5775 = vld [vmem:[#allocation10 + $0x150] sm:$0xff]
    %v5776 = vld [vmem:[#allocation10 + $0x158] sm:$0xff]
    %v5777 = vld [vmem:[#allocation10 + $0x160] sm:$0xff]
    %v5778 = vld [vmem:[#allocation10 + $0x168] sm:$0xff]
    %v5779 = vld [vmem:[#allocation10 + $0x170] sm:$0xff]
    %v5780 = vld [vmem:[#allocation10 + $0x178] sm:$0xff]
    %v5781 = vld [vmem:[#allocation10 + $0x180] sm:$0xff]
    %v5782 = vld [vmem:[#allocation10 + $0x188] sm:$0xff]
    %v5783 = vld [vmem:[#allocation10 + $0x190] sm:$0xff]
    %v5784 = vld [vmem:[#allocation10 + $0x198] sm:$0xff]
    %v5785 = vld [vmem:[#allocation10 + $0x1a0] sm:$0xff]
    %v5786 = vld [vmem:[#allocation10 + $0x1a8] sm:$0xff]
    %v5787 = vld [vmem:[#allocation10 + $0x1b0] sm:$0xff]
    %v5788 = vld [vmem:[#allocation10 + $0x1b8] sm:$0xff]
    %v5789 = vld [vmem:[#allocation10 + $0x1c0] sm:$0xff]
    %v5790 = vld [vmem:[#allocation10 + $0x1c8] sm:$0xff]
    %v5791 = vld [vmem:[#allocation10 + $0x1d0] sm:$0xff]
    %v5792 = vld [vmem:[#allocation10 + $0x1d8] sm:$0xff]
    %v5793 = vld [vmem:[#allocation10 + $0x1e0] sm:$0xff]
    %v5794 = vld [vmem:[#allocation10 + $0x1e8] sm:$0xff]
    %v5795 = vld [vmem:[#allocation10 + $0x1f0] sm:$0xff]
    %v5796 = vld [vmem:[#allocation10 + $0x1f8] sm:$0xff]
    %v5797 = vld [vmem:[#allocation10 + $0x200] sm:$0xff]
    %v5798 = vld [vmem:[#allocation10 + $0x208] sm:$0xff]
    %v5799 = vld [vmem:[#allocation10 + $0x210] sm:$0xff]
    %v5800 = vld [vmem:[#allocation10 + $0x218] sm:$0xff]
    %v5801 = vld [vmem:[#allocation10 + $0x220] sm:$0xff]
    %v5802 = vld [vmem:[#allocation10 + $0x228] sm:$0xff]
    %v5803 = vld [vmem:[#allocation10 + $0x230] sm:$0xff]
    %v5804 = vld [vmem:[#allocation10 + $0x238] sm:$0xff]
    %v5805 = vld [vmem:[#allocation10 + $0x240] sm:$0xff]
    %v5806 = vld [vmem:[#allocation10 + $0x248] sm:$0xff]
    %v5807 = vld [vmem:[#allocation10 + $0x250] sm:$0xff]
    %v5808 = vld [vmem:[#allocation10 + $0x258] sm:$0xff]
    %v5809 = vld [vmem:[#allocation10 + $0x260] sm:$0xff]
    %v5810 = vld [vmem:[#allocation10 + $0x268] sm:$0xff]
    %v5811 = vld [vmem:[#allocation10 + $0x270] sm:$0xff]
    %v5812 = vld [vmem:[#allocation10 + $0x278] sm:$0xff]
    %v5813 = vld [vmem:[#allocation10 + $0x280] sm:$0xff]
    %v5814 = vld [vmem:[#allocation10 + $0x288] sm:$0xff]
    %v5815 = vld [vmem:[#allocation10 + $0x290] sm:$0xff]
    %v5816 = vld [vmem:[#allocation10 + $0x298] sm:$0xff]
    %v5817 = vld [vmem:[#allocation10 + $0x2a0] sm:$0xff]
    %v5818 = vld [vmem:[#allocation10 + $0x2a8] sm:$0xff]
    %v5819 = vld [vmem:[#allocation10 + $0x2b0] sm:$0xff]
    %v5820 = vld [vmem:[#allocation10 + $0x2b8] sm:$0xff]
    %v5821 = vld [vmem:[#allocation10 + $0x2c0] sm:$0xff]
    %v5822 = vld [vmem:[#allocation10 + $0x2c8] sm:$0xff]
    %v5823 = vld [vmem:[#allocation10 + $0x2d0] sm:$0xff]
    %v5824 = vld [vmem:[#allocation10 + $0x2d8] sm:$0xff]
    %v5825 = vld [vmem:[#allocation10 + $0x2e0] sm:$0xff]
    %v5826 = vld [vmem:[#allocation10 + $0x2e8] sm:$0xff]
    %v5827 = vld [vmem:[#allocation10 + $0x2f0] sm:$0xff]
    %v5828 = vld [vmem:[#allocation10 + $0x2f8] sm:$0xff]
    %v5829 = vld [vmem:[#allocation10 + $0x300] sm:$0xff]
    %v5830 = vld [vmem:[#allocation10 + $0x308] sm:$0xff]
    %v5831 = vld [vmem:[#allocation10 + $0x310] sm:$0xff]
    %v5832 = vld [vmem:[#allocation10 + $0x318] sm:$0xff]
    %v5833 = vld [vmem:[#allocation10 + $0x320] sm:$0xff]
    %v5834 = vld [vmem:[#allocation10 + $0x328] sm:$0xff]
    %v5835 = vld [vmem:[#allocation10 + $0x330] sm:$0xff]
    %v5836 = vld [vmem:[#allocation10 + $0x338] sm:$0xff]
    %v5837 = vld [vmem:[#allocation10 + $0x340] sm:$0xff]
    %v5838 = vld [vmem:[#allocation10 + $0x348] sm:$0xff]
    %v5839 = vld [vmem:[#allocation10 + $0x350] sm:$0xff]
    %v5840 = vld [vmem:[#allocation10 + $0x358] sm:$0xff]
    %v5841 = vld [vmem:[#allocation10 + $0x360] sm:$0xff]
    %v5842 = vld [vmem:[#allocation10 + $0x368] sm:$0xff]
    %v5843 = vld [vmem:[#allocation10 + $0x370] sm:$0xff]
    %v5844 = vld [vmem:[#allocation10 + $0x378] sm:$0xff]
    %v5845 = vld [vmem:[#allocation10 + $0x380] sm:$0xff]
    %v5846 = vld [vmem:[#allocation10 + $0x388] sm:$0xff]
    %v5847 = vld [vmem:[#allocation10 + $0x390] sm:$0xff]
    %v5848 = vld [vmem:[#allocation10 + $0x398] sm:$0xff]
    %v5849 = vld [vmem:[#allocation10 + $0x3a0] sm:$0xff]
    %v5850 = vld [vmem:[#allocation10 + $0x3a8] sm:$0xff]
    %v5851 = vld [vmem:[#allocation10 + $0x3b0] sm:$0xff]
    %v5852 = vld [vmem:[#allocation10 + $0x3b8] sm:$0xff]
    %v5853 = vld [vmem:[#allocation10 + $0x3c0] sm:$0xff]
    %v5854 = vld [vmem:[#allocation10 + $0x3c8] sm:$0xff]
    %v5855 = vld [vmem:[#allocation10 + $0x3d0] sm:$0xff]
    %v5856 = vld [vmem:[#allocation10 + $0x3d8] sm:$0xff]
    %v5857 = vld [vmem:[#allocation10 + $0x3e0] sm:$0xff]
    %v5858 = vld [vmem:[#allocation10 + $0x3e8] sm:$0xff]
    %v5859 = vld [vmem:[#allocation10 + $0x3f0] sm:$0xff]
    %v5860 = vld [vmem:[#allocation10 + $0x3f8] sm:$0xff]
    %v5861 = vld [vmem:[%s13] sm:$0x3]
    %v5863 = vlaneseq
    %v5864 = vshrl.u32 %v5863, 7
    %v5865 = vsub.s32 0, %v5864
    %v5866 = vrot.slane %v5861, %v5865
    %v5867 = vlaneseq
    %v5868 = vshrl.u32 %v5867, 7
    %v5869 = vsub.s32 1, %v5868
    %v5870 = vrot.slane %v5861, %v5869
    %v6001 = vunpack.c.l.b16 %v5733
    %v6002 = vunpack.c.h.b16 %v5733
    %v6003 = vunpack.c.l.b16 %v5734
    %v6004 = vunpack.c.h.b16 %v5734
    %v6005 = vunpack.c.l.b16 %v5735
    %v6006 = vunpack.c.h.b16 %v5735
    %v6007 = vunpack.c.l.b16 %v5736
    %v6008 = vunpack.c.h.b16 %v5736
    %v6009 = vunpack.c.l.b16 %v5737
    %v6010 = vunpack.c.h.b16 %v5737
    %v6011 = vunpack.c.l.b16 %v5738
    %v6012 = vunpack.c.h.b16 %v5738
    %v6013 = vunpack.c.l.b16 %v5739
    %v6014 = vunpack.c.h.b16 %v5739
    %v6015 = vunpack.c.l.b16 %v5740
    %v6016 = vunpack.c.h.b16 %v5740
    %v6017 = vunpack.c.l.b16 %v5741
    %v6018 = vunpack.c.h.b16 %v5741
    %v6019 = vunpack.c.l.b16 %v5742
    %v6020 = vunpack.c.h.b16 %v5742
    %v6021 = vunpack.c.l.b16 %v5743
    %v6022 = vunpack.c.h.b16 %v5743
    %v6023 = vunpack.c.l.b16 %v5744
    %v6024 = vunpack.c.h.b16 %v5744
    %v6025 = vunpack.c.l.b16 %v5745
    %v6026 = vunpack.c.h.b16 %v5745
    %v6027 = vunpack.c.l.b16 %v5746
    %v6028 = vunpack.c.h.b16 %v5746
    %v6029 = vunpack.c.l.b16 %v5747
    %v6030 = vunpack.c.h.b16 %v5747
    %v6031 = vunpack.c.l.b16 %v5748
    %v6032 = vunpack.c.h.b16 %v5748
    %v6033 = vunpack.c.l.b16 %v5749
    %v6034 = vunpack.c.h.b16 %v5749
    %v6035 = vunpack.c.l.b16 %v5750
    %v6036 = vunpack.c.h.b16 %v5750
    %v6037 = vunpack.c.l.b16 %v5751
    %v6038 = vunpack.c.h.b16 %v5751
    %v6039 = vunpack.c.l.b16 %v5752
    %v6040 = vunpack.c.h.b16 %v5752
    %v6041 = vunpack.c.l.b16 %v5753
    %v6042 = vunpack.c.h.b16 %v5753
    %v6043 = vunpack.c.l.b16 %v5754
    %v6044 = vunpack.c.h.b16 %v5754
    %v6045 = vunpack.c.l.b16 %v5755
    %v6046 = vunpack.c.h.b16 %v5755
    %v6047 = vunpack.c.l.b16 %v5756
    %v6048 = vunpack.c.h.b16 %v5756
    %v6049 = vunpack.c.l.b16 %v5757
    %v6050 = vunpack.c.h.b16 %v5757
    %v6051 = vunpack.c.l.b16 %v5758
    %v6052 = vunpack.c.h.b16 %v5758
    %v6053 = vunpack.c.l.b16 %v5759
    %v6054 = vunpack.c.h.b16 %v5759
    %v6055 = vunpack.c.l.b16 %v5760
    %v6056 = vunpack.c.h.b16 %v5760
    %v6057 = vunpack.c.l.b16 %v5761
    %v6058 = vunpack.c.h.b16 %v5761
    %v6059 = vunpack.c.l.b16 %v5762
    %v6060 = vunpack.c.h.b16 %v5762
    %v6061 = vunpack.c.l.b16 %v5763
    %v6062 = vunpack.c.h.b16 %v5763
    %v6063 = vunpack.c.l.b16 %v5764
    %v6064 = vunpack.c.h.b16 %v5764
    %v6065 = vunpack.c.l.b16 %v5765
    %v6066 = vunpack.c.h.b16 %v5765
    %v6067 = vunpack.c.l.b16 %v5766
    %v6068 = vunpack.c.h.b16 %v5766
    %v6069 = vunpack.c.l.b16 %v5767
    %v6070 = vunpack.c.h.b16 %v5767
    %v6071 = vunpack.c.l.b16 %v5768
    %v6072 = vunpack.c.h.b16 %v5768
    %v6073 = vunpack.c.l.b16 %v5769
    %v6074 = vunpack.c.h.b16 %v5769
    %v6075 = vunpack.c.l.b16 %v5770
    %v6076 = vunpack.c.h.b16 %v5770
    %v6077 = vunpack.c.l.b16 %v5771
    %v6078 = vunpack.c.h.b16 %v5771
    %v6079 = vunpack.c.l.b16 %v5772
    %v6080 = vunpack.c.h.b16 %v5772
    %v6081 = vunpack.c.l.b16 %v5773
    %v6082 = vunpack.c.h.b16 %v5773
    %v6083 = vunpack.c.l.b16 %v5774
    %v6084 = vunpack.c.h.b16 %v5774
    %v6085 = vunpack.c.l.b16 %v5775
    %v6086 = vunpack.c.h.b16 %v5775
    %v6087 = vunpack.c.l.b16 %v5776
    %v6088 = vunpack.c.h.b16 %v5776
    %v6089 = vunpack.c.l.b16 %v5777
    %v6090 = vunpack.c.h.b16 %v5777
    %v6091 = vunpack.c.l.b16 %v5778
    %v6092 = vunpack.c.h.b16 %v5778
    %v6093 = vunpack.c.l.b16 %v5779
    %v6094 = vunpack.c.h.b16 %v5779
    %v6095 = vunpack.c.l.b16 %v5780
    %v6096 = vunpack.c.h.b16 %v5780
    %v6097 = vunpack.c.l.b16 %v5781
    %v6098 = vunpack.c.h.b16 %v5781
    %v6099 = vunpack.c.l.b16 %v5782
    %v6100 = vunpack.c.h.b16 %v5782
    %v6101 = vunpack.c.l.b16 %v5783
    %v6102 = vunpack.c.h.b16 %v5783
    %v6103 = vunpack.c.l.b16 %v5784
    %v6104 = vunpack.c.h.b16 %v5784
    %v6105 = vunpack.c.l.b16 %v5785
    %v6106 = vunpack.c.h.b16 %v5785
    %v6107 = vunpack.c.l.b16 %v5786
    %v6108 = vunpack.c.h.b16 %v5786
    %v6109 = vunpack.c.l.b16 %v5787
    %v6110 = vunpack.c.h.b16 %v5787
    %v6111 = vunpack.c.l.b16 %v5788
    %v6112 = vunpack.c.h.b16 %v5788
    %v6113 = vunpack.c.l.b16 %v5789
    %v6114 = vunpack.c.h.b16 %v5789
    %v6115 = vunpack.c.l.b16 %v5790
    %v6116 = vunpack.c.h.b16 %v5790
    %v6117 = vunpack.c.l.b16 %v5791
    %v6118 = vunpack.c.h.b16 %v5791
    %v6119 = vunpack.c.l.b16 %v5792
    %v6120 = vunpack.c.h.b16 %v5792
    %v6121 = vunpack.c.l.b16 %v5793
    %v6122 = vunpack.c.h.b16 %v5793
    %v6123 = vunpack.c.l.b16 %v5794
    %v6124 = vunpack.c.h.b16 %v5794
    %v6125 = vunpack.c.l.b16 %v5795
    %v6126 = vunpack.c.h.b16 %v5795
    %v6127 = vunpack.c.l.b16 %v5796
    %v6128 = vunpack.c.h.b16 %v5796
    %v6129 = vunpack.c.l.b16 %v5797
    %v6130 = vunpack.c.h.b16 %v5797
    %v6131 = vunpack.c.l.b16 %v5798
    %v6132 = vunpack.c.h.b16 %v5798
    %v6133 = vunpack.c.l.b16 %v5799
    %v6134 = vunpack.c.h.b16 %v5799
    %v6135 = vunpack.c.l.b16 %v5800
    %v6136 = vunpack.c.h.b16 %v5800
    %v6137 = vunpack.c.l.b16 %v5801
    %v6138 = vunpack.c.h.b16 %v5801
    %v6139 = vunpack.c.l.b16 %v5802
    %v6140 = vunpack.c.h.b16 %v5802
    %v6141 = vunpack.c.l.b16 %v5803
    %v6142 = vunpack.c.h.b16 %v5803
    %v6143 = vunpack.c.l.b16 %v5804
    %v6144 = vunpack.c.h.b16 %v5804
    %v6145 = vunpack.c.l.b16 %v5805
    %v6146 = vunpack.c.h.b16 %v5805
    %v6147 = vunpack.c.l.b16 %v5806
    %v6148 = vunpack.c.h.b16 %v5806
    %v6149 = vunpack.c.l.b16 %v5807
    %v6150 = vunpack.c.h.b16 %v5807
    %v6151 = vunpack.c.l.b16 %v5808
    %v6152 = vunpack.c.h.b16 %v5808
    %v6153 = vunpack.c.l.b16 %v5809
    %v6154 = vunpack.c.h.b16 %v5809
    %v6155 = vunpack.c.l.b16 %v5810
    %v6156 = vunpack.c.h.b16 %v5810
    %v6157 = vunpack.c.l.b16 %v5811
    %v6158 = vunpack.c.h.b16 %v5811
    %v6159 = vunpack.c.l.b16 %v5812
    %v6160 = vunpack.c.h.b16 %v5812
    %v6161 = vunpack.c.l.b16 %v5813
    %v6162 = vunpack.c.h.b16 %v5813
    %v6163 = vunpack.c.l.b16 %v5814
    %v6164 = vunpack.c.h.b16 %v5814
    %v6165 = vunpack.c.l.b16 %v5815
    %v6166 = vunpack.c.h.b16 %v5815
    %v6167 = vunpack.c.l.b16 %v5816
    %v6168 = vunpack.c.h.b16 %v5816
    %v6169 = vunpack.c.l.b16 %v5817
    %v6170 = vunpack.c.h.b16 %v5817
    %v6171 = vunpack.c.l.b16 %v5818
    %v6172 = vunpack.c.h.b16 %v5818
    %v6173 = vunpack.c.l.b16 %v5819
    %v6174 = vunpack.c.h.b16 %v5819
    %v6175 = vunpack.c.l.b16 %v5820
    %v6176 = vunpack.c.h.b16 %v5820
    %v6177 = vunpack.c.l.b16 %v5821
    %v6178 = vunpack.c.h.b16 %v5821
    %v6179 = vunpack.c.l.b16 %v5822
    %v6180 = vunpack.c.h.b16 %v5822
    %v6181 = vunpack.c.l.b16 %v5823
    %v6182 = vunpack.c.h.b16 %v5823
    %v6183 = vunpack.c.l.b16 %v5824
    %v6184 = vunpack.c.h.b16 %v5824
    %v6185 = vunpack.c.l.b16 %v5825
    %v6186 = vunpack.c.h.b16 %v5825
    %v6187 = vunpack.c.l.b16 %v5826
    %v6188 = vunpack.c.h.b16 %v5826
    %v6189 = vunpack.c.l.b16 %v5827
    %v6190 = vunpack.c.h.b16 %v5827
    %v6191 = vunpack.c.l.b16 %v5828
    %v6192 = vunpack.c.h.b16 %v5828
    %v6193 = vunpack.c.l.b16 %v5829
    %v6194 = vunpack.c.h.b16 %v5829
    %v6195 = vunpack.c.l.b16 %v5830
    %v6196 = vunpack.c.h.b16 %v5830
    %v6197 = vunpack.c.l.b16 %v5831
    %v6198 = vunpack.c.h.b16 %v5831
    %v6199 = vunpack.c.l.b16 %v5832
    %v6200 = vunpack.c.h.b16 %v5832
    %v6201 = vunpack.c.l.b16 %v5833
    %v6202 = vunpack.c.h.b16 %v5833
    %v6203 = vunpack.c.l.b16 %v5834
    %v6204 = vunpack.c.h.b16 %v5834
    %v6205 = vunpack.c.l.b16 %v5835
    %v6206 = vunpack.c.h.b16 %v5835
    %v6207 = vunpack.c.l.b16 %v5836
    %v6208 = vunpack.c.h.b16 %v5836
    %v6209 = vunpack.c.l.b16 %v5837
    %v6210 = vunpack.c.h.b16 %v5837
    %v6211 = vunpack.c.l.b16 %v5838
    %v6212 = vunpack.c.h.b16 %v5838
    %v6213 = vunpack.c.l.b16 %v5839
    %v6214 = vunpack.c.h.b16 %v5839
    %v6215 = vunpack.c.l.b16 %v5840
    %v6216 = vunpack.c.h.b16 %v5840
    %v6217 = vunpack.c.l.b16 %v5841
    %v6218 = vunpack.c.h.b16 %v5841
    %v6219 = vunpack.c.l.b16 %v5842
    %v6220 = vunpack.c.h.b16 %v5842
    %v6221 = vunpack.c.l.b16 %v5843
    %v6222 = vunpack.c.h.b16 %v5843
    %v6223 = vunpack.c.l.b16 %v5844
    %v6224 = vunpack.c.h.b16 %v5844
    %v6225 = vunpack.c.l.b16 %v5845
    %v6226 = vunpack.c.h.b16 %v5845
    %v6227 = vunpack.c.l.b16 %v5846
    %v6228 = vunpack.c.h.b16 %v5846
    %v6229 = vunpack.c.l.b16 %v5847
    %v6230 = vunpack.c.h.b16 %v5847
    %v6231 = vunpack.c.l.b16 %v5848
    %v6232 = vunpack.c.h.b16 %v5848
    %v6233 = vunpack.c.l.b16 %v5849
    %v6234 = vunpack.c.h.b16 %v5849
    %v6235 = vunpack.c.l.b16 %v5850
    %v6236 = vunpack.c.h.b16 %v5850
    %v6237 = vunpack.c.l.b16 %v5851
    %v6238 = vunpack.c.h.b16 %v5851
    %v6239 = vunpack.c.l.b16 %v5852
    %v6240 = vunpack.c.h.b16 %v5852
    %v6241 = vunpack.c.l.b16 %v5853
    %v6242 = vunpack.c.h.b16 %v5853
    %v6243 = vunpack.c.l.b16 %v5854
    %v6244 = vunpack.c.h.b16 %v5854
    %v6245 = vunpack.c.l.b16 %v5855
    %v6246 = vunpack.c.h.b16 %v5855
    %v6247 = vunpack.c.l.b16 %v5856
    %v6248 = vunpack.c.h.b16 %v5856
    %v6249 = vunpack.c.l.b16 %v5857
    %v6250 = vunpack.c.h.b16 %v5857
    %v6251 = vunpack.c.l.b16 %v5858
    %v6252 = vunpack.c.h.b16 %v5858
    %v6253 = vunpack.c.l.b16 %v5859
    %v6254 = vunpack.c.h.b16 %v5859
    %v6255 = vunpack.c.l.b16 %v5860
    %v6256 = vunpack.c.h.b16 %v5860
    %v6257 = vpack.c.b16 %v6003, %v6001
    %v6258 = vpack.c.b16 %v6004, %v6002
    %v6259 = vpack.c.b16 %v6007, %v6005
    %v6260 = vpack.c.b16 %v6008, %v6006
    %v6261 = vpack.c.b16 %v6011, %v6009
    %v6262 = vpack.c.b16 %v6012, %v6010
    %v6263 = vpack.c.b16 %v6015, %v6013
    %v6264 = vpack.c.b16 %v6016, %v6014
    %v6265 = vpack.c.b16 %v6019, %v6017
    %v6266 = vpack.c.b16 %v6020, %v6018
    %v6267 = vpack.c.b16 %v6023, %v6021
    %v6268 = vpack.c.b16 %v6024, %v6022
    %v6269 = vpack.c.b16 %v6027, %v6025
    %v6270 = vpack.c.b16 %v6028, %v6026
    %v6271 = vpack.c.b16 %v6031, %v6029
    %v6272 = vpack.c.b16 %v6032, %v6030
    %v6273 = vpack.c.b16 %v6035, %v6033
    %v6274 = vpack.c.b16 %v6036, %v6034
    %v6275 = vpack.c.b16 %v6039, %v6037
    %v6276 = vpack.c.b16 %v6040, %v6038
    %v6277 = vpack.c.b16 %v6043, %v6041
    %v6278 = vpack.c.b16 %v6044, %v6042
    %v6279 = vpack.c.b16 %v6047, %v6045
    %v6280 = vpack.c.b16 %v6048, %v6046
    %v6281 = vpack.c.b16 %v6051, %v6049
    %v6282 = vpack.c.b16 %v6052, %v6050
    %v6283 = vpack.c.b16 %v6055, %v6053
    %v6284 = vpack.c.b16 %v6056, %v6054
    %v6285 = vpack.c.b16 %v6059, %v6057
    %v6286 = vpack.c.b16 %v6060, %v6058
    %v6287 = vpack.c.b16 %v6063, %v6061
    %v6288 = vpack.c.b16 %v6064, %v6062
    %v6289 = vpack.c.b16 %v6067, %v6065
    %v6290 = vpack.c.b16 %v6068, %v6066
    %v6291 = vpack.c.b16 %v6071, %v6069
    %v6292 = vpack.c.b16 %v6072, %v6070
    %v6293 = vpack.c.b16 %v6075, %v6073
    %v6294 = vpack.c.b16 %v6076, %v6074
    %v6295 = vpack.c.b16 %v6079, %v6077
    %v6296 = vpack.c.b16 %v6080, %v6078
    %v6297 = vpack.c.b16 %v6083, %v6081
    %v6298 = vpack.c.b16 %v6084, %v6082
    %v6299 = vpack.c.b16 %v6087, %v6085
    %v6300 = vpack.c.b16 %v6088, %v6086
    %v6301 = vpack.c.b16 %v6091, %v6089
    %v6302 = vpack.c.b16 %v6092, %v6090
    %v6303 = vpack.c.b16 %v6095, %v6093
    %v6304 = vpack.c.b16 %v6096, %v6094
    %v6305 = vpack.c.b16 %v6099, %v6097
    %v6306 = vpack.c.b16 %v6100, %v6098
    %v6307 = vpack.c.b16 %v6103, %v6101
    %v6308 = vpack.c.b16 %v6104, %v6102
    %v6309 = vpack.c.b16 %v6107, %v6105
    %v6310 = vpack.c.b16 %v6108, %v6106
    %v6311 = vpack.c.b16 %v6111, %v6109
    %v6312 = vpack.c.b16 %v6112, %v6110
    %v6313 = vpack.c.b16 %v6115, %v6113
    %v6314 = vpack.c.b16 %v6116, %v6114
    %v6315 = vpack.c.b16 %v6119, %v6117
    %v6316 = vpack.c.b16 %v6120, %v6118
    %v6317 = vpack.c.b16 %v6123, %v6121
    %v6318 = vpack.c.b16 %v6124, %v6122
    %v6319 = vpack.c.b16 %v6127, %v6125
    %v6320 = vpack.c.b16 %v6128, %v6126
    %v6321 = vpack.c.b16 %v6131, %v6129
    %v6322 = vpack.c.b16 %v6132, %v6130
    %v6323 = vpack.c.b16 %v6135, %v6133
    %v6324 = vpack.c.b16 %v6136, %v6134
    %v6325 = vpack.c.b16 %v6139, %v6137
    %v6326 = vpack.c.b16 %v6140, %v6138
    %v6327 = vpack.c.b16 %v6143, %v6141
    %v6328 = vpack.c.b16 %v6144, %v6142
    %v6329 = vpack.c.b16 %v6147, %v6145
    %v6330 = vpack.c.b16 %v6148, %v6146
    %v6331 = vpack.c.b16 %v6151, %v6149
    %v6332 = vpack.c.b16 %v6152, %v6150
    %v6333 = vpack.c.b16 %v6155, %v6153
    %v6334 = vpack.c.b16 %v6156, %v6154
    %v6335 = vpack.c.b16 %v6159, %v6157
    %v6336 = vpack.c.b16 %v6160, %v6158
    %v6337 = vpack.c.b16 %v6163, %v6161
    %v6338 = vpack.c.b16 %v6164, %v6162
    %v6339 = vpack.c.b16 %v6167, %v6165
    %v6340 = vpack.c.b16 %v6168, %v6166
    %v6341 = vpack.c.b16 %v6171, %v6169
    %v6342 = vpack.c.b16 %v6172, %v6170
    %v6343 = vpack.c.b16 %v6175, %v6173
    %v6344 = vpack.c.b16 %v6176, %v6174
    %v6345 = vpack.c.b16 %v6179, %v6177
    %v6346 = vpack.c.b16 %v6180, %v6178
    %v6347 = vpack.c.b16 %v6183, %v6181
    %v6348 = vpack.c.b16 %v6184, %v6182
    %v6349 = vpack.c.b16 %v6187, %v6185
    %v6350 = vpack.c.b16 %v6188, %v6186
    %v6351 = vpack.c.b16 %v6191, %v6189
    %v6352 = vpack.c.b16 %v6192, %v6190
    %v6353 = vpack.c.b16 %v6195, %v6193
    %v6354 = vpack.c.b16 %v6196, %v6194
    %v6355 = vpack.c.b16 %v6199, %v6197
    %v6356 = vpack.c.b16 %v6200, %v6198
    %v6357 = vpack.c.b16 %v6203, %v6201
    %v6358 = vpack.c.b16 %v6204, %v6202
    %v6359 = vpack.c.b16 %v6207, %v6205
    %v6360 = vpack.c.b16 %v6208, %v6206
    %v6361 = vpack.c.b16 %v6211, %v6209
    %v6362 = vpack.c.b16 %v6212, %v6210
    %v6363 = vpack.c.b16 %v6215, %v6213
    %v6364 = vpack.c.b16 %v6216, %v6214
    %v6365 = vpack.c.b16 %v6219, %v6217
    %v6366 = vpack.c.b16 %v6220, %v6218
    %v6367 = vpack.c.b16 %v6223, %v6221
    %v6368 = vpack.c.b16 %v6224, %v6222
    %v6369 = vpack.c.b16 %v6227, %v6225
    %v6370 = vpack.c.b16 %v6228, %v6226
    %v6371 = vpack.c.b16 %v6231, %v6229
    %v6372 = vpack.c.b16 %v6232, %v6230
    %v6373 = vpack.c.b16 %v6235, %v6233
    %v6374 = vpack.c.b16 %v6236, %v6234
    %v6375 = vpack.c.b16 %v6239, %v6237
    %v6376 = vpack.c.b16 %v6240, %v6238
    %v6377 = vpack.c.b16 %v6243, %v6241
    %v6378 = vpack.c.b16 %v6244, %v6242
    %v6379 = vpack.c.b16 %v6247, %v6245
    %v6380 = vpack.c.b16 %v6248, %v6246
    %v6381 = vpack.c.b16 %v6251, %v6249
    %v6382 = vpack.c.b16 %v6252, %v6250
    %v6383 = vpack.c.b16 %v6255, %v6253
    %v6384 = vpack.c.b16 %v6256, %v6254
    %6513 = vmatprep.subr.bf16.mxu0 %v6258
    %6514 = vmatpush1.bf16.msra.mxu0 %v6257
    %6515 = vmatprep.subr.bf16.mxu0 %v6260
    %6516 = vmatpush1.bf16.msra.mxu0 %v6259
    %6517 = vmatprep.subr.bf16.mxu0 %v6262
    %6518 = vmatpush1.bf16.msra.mxu0 %v6261
    %6519 = vmatprep.subr.bf16.mxu0 %v6264
    %6520 = vmatpush1.bf16.msra.mxu0 %v6263
    %6521 = vmatprep.subr.bf16.mxu0 %v6266
    %6522 = vmatpush1.bf16.msra.mxu0 %v6265
    %6523 = vmatprep.subr.bf16.mxu0 %v6268
    %6524 = vmatpush1.bf16.msra.mxu0 %v6267
    %6525 = vmatprep.subr.bf16.mxu0 %v6270
    %6526 = vmatpush1.bf16.msra.mxu0 %v6269
    %6527 = vmatprep.subr.bf16.mxu0 %v6272
    %6528 = vmatpush1.bf16.msra.mxu0 %v6271
    %6529 = vmatprep.subr.bf16.mxu0 %v6274
    %6530 = vmatpush1.bf16.msra.mxu0 %v6273
    %6531 = vmatprep.subr.bf16.mxu0 %v6276
    %6532 = vmatpush1.bf16.msra.mxu0 %v6275
    %6533 = vmatprep.subr.bf16.mxu0 %v6278
    %6534 = vmatpush1.bf16.msra.mxu0 %v6277
    %6535 = vmatprep.subr.bf16.mxu0 %v6280
    %6536 = vmatpush1.bf16.msra.mxu0 %v6279
    %6537 = vmatprep.subr.bf16.mxu0 %v6282
    %6538 = vmatpush1.bf16.msra.mxu0 %v6281
    %6539 = vmatprep.subr.bf16.mxu0 %v6284
    %6540 = vmatpush1.bf16.msra.mxu0 %v6283
    %6541 = vmatprep.subr.bf16.mxu0 %v6286
    %6542 = vmatpush1.bf16.msra.mxu0 %v6285
    %6543 = vmatprep.subr.bf16.mxu0 %v6288
    %6544 = vmatpush1.bf16.msra.mxu0 %v6287
    %6545 = vmatprep.mubr.bf16.mxu0 %v5726
    %6546 = vmatmul.mubr.bf16.gmra.mrb[0].mxu0 %v5725
    %v6547 = vpop.f32.mrb[0].mxu0
    %v6548 = vadd.f32 %v5866, %v6547
    %v6549 = vpop.f32.mrb[0].mxu0
    %v6550 = vadd.f32 %v5870, %v6549
    %v6551 = vpop.f32.mrb[0].mxu0
    %v6552 = vpop.f32.mrb[0].mxu0
    %6553 = vdwg.mxu0
    %6554 = vmatprep.subr.bf16.mxu0 %v6290
    %6555 = vmatpush1.bf16.msra.mxu0 %v6289
    %6556 = vmatprep.subr.bf16.mxu0 %v6292
    %6557 = vmatpush1.bf16.msra.mxu0 %v6291
    %6558 = vmatprep.subr.bf16.mxu0 %v6294
    %6559 = vmatpush1.bf16.msra.mxu0 %v6293
    %6560 = vmatprep.subr.bf16.mxu0 %v6296
    %6561 = vmatpush1.bf16.msra.mxu0 %v6295
    %6562 = vmatprep.subr.bf16.mxu0 %v6298
    %6563 = vmatpush1.bf16.msra.mxu0 %v6297
    %6564 = vmatprep.subr.bf16.mxu0 %v6300
    %6565 = vmatpush1.bf16.msra.mxu0 %v6299
    %6566 = vmatprep.subr.bf16.mxu0 %v6302
    %6567 = vmatpush1.bf16.msra.mxu0 %v6301
    %6568 = vmatprep.subr.bf16.mxu0 %v6304
    %6569 = vmatpush1.bf16.msra.mxu0 %v6303
    %6570 = vmatprep.subr.bf16.mxu0 %v6306
    %6571 = vmatpush1.bf16.msra.mxu0 %v6305
    %6572 = vmatprep.subr.bf16.mxu0 %v6308
    %6573 = vmatpush1.bf16.msra.mxu0 %v6307
    %6574 = vmatprep.subr.bf16.mxu0 %v6310
    %6575 = vmatpush1.bf16.msra.mxu0 %v6309
    %6576 = vmatprep.subr.bf16.mxu0 %v6312
    %6577 = vmatpush1.bf16.msra.mxu0 %v6311
    %6578 = vmatprep.subr.bf16.mxu0 %v6314
    %6579 = vmatpush1.bf16.msra.mxu0 %v6313
    %6580 = vmatprep.subr.bf16.mxu0 %v6316
    %6581 = vmatpush1.bf16.msra.mxu0 %v6315
    %6582 = vmatprep.subr.bf16.mxu0 %v6318
    %6583 = vmatpush1.bf16.msra.mxu0 %v6317
    %6584 = vmatprep.subr.bf16.mxu0 %v6320
    %6585 = vmatpush1.bf16.msra.mxu0 %v6319
    %6586 = vmatprep.mubr.bf16.mxu0 %v5728
    %6587 = vmatmul.mubr.bf16.gmra.mrb[0].mxu0 %v5727
    %v6588 = vpop.f32.mrb[0].mxu0
    %v6589 = vadd.f32 %v6548, %v6588
    %v6590 = vpop.f32.mrb[0].mxu0
    %v6591 = vadd.f32 %v6550, %v6590
    %v6592 = vpop.f32.mrb[0].mxu0
    %v6593 = vpop.f32.mrb[0].mxu0
    %6594 = vdwg.mxu0
    %6595 = vmatprep.subr.bf16.mxu0 %v6322
    %6596 = vmatpush1.bf16.msra.mxu0 %v6321
    %6597 = vmatprep.subr.bf16.mxu0 %v6324
    %6598 = vmatpush1.bf16.msra.mxu0 %v6323
    %6599 = vmatprep.subr.bf16.mxu0 %v6326
    %6600 = vmatpush1.bf16.msra.mxu0 %v6325
    %6601 = vmatprep.subr.bf16.mxu0 %v6328
    %6602 = vmatpush1.bf16.msra.mxu0 %v6327
    %6603 = vmatprep.subr.bf16.mxu0 %v6330
    %6604 = vmatpush1.bf16.msra.mxu0 %v6329
    %6605 = vmatprep.subr.bf16.mxu0 %v6332
    %6606 = vmatpush1.bf16.msra.mxu0 %v6331
    %6607 = vmatprep.subr.bf16.mxu0 %v6334
    %6608 = vmatpush1.bf16.msra.mxu0 %v6333
    %6609 = vmatprep.subr.bf16.mxu0 %v6336
    %6610 = vmatpush1.bf16.msra.mxu0 %v6335
    %6611 = vmatprep.subr.bf16.mxu0 %v6338
    %6612 = vmatpush1.bf16.msra.mxu0 %v6337
    %6613 = vmatprep.subr.bf16.mxu0 %v6340
    %6614 = vmatpush1.bf16.msra.mxu0 %v6339
    %6615 = vmatprep.subr.bf16.mxu0 %v6342
    %6616 = vmatpush1.bf16.msra.mxu0 %v6341
    %6617 = vmatprep.subr.bf16.mxu0 %v6344
    %6618 = vmatpush1.bf16.msra.mxu0 %v6343
    %6619 = vmatprep.subr.bf16.mxu0 %v6346
    %6620 = vmatpush1.bf16.msra.mxu0 %v6345
    %6621 = vmatprep.subr.bf16.mxu0 %v6348
    %6622 = vmatpush1.bf16.msra.mxu0 %v6347
    %6623 = vmatprep.subr.bf16.mxu0 %v6350
    %6624 = vmatpush1.bf16.msra.mxu0 %v6349
    %6625 = vmatprep.subr.bf16.mxu0 %v6352
    %6626 = vmatpush1.bf16.msra.mxu0 %v6351
    %6627 = vmatprep.mubr.bf16.mxu0 %v5730
    %6628 = vmatmul.mubr.bf16.gmra.mrb[0].mxu0 %v5729
    %v6629 = vpop.f32.mrb[0].mxu0
    %v6630 = vadd.f32 %v6589, %v6629
    %v6631 = vpop.f32.mrb[0].mxu0
    %v6632 = vadd.f32 %v6591, %v6631
    %v6633 = vpop.f32.mrb[0].mxu0
    %v6634 = vpop.f32.mrb[0].mxu0
    %6635 = vdwg.mxu0
    %6636 = vmatprep.subr.bf16.mxu0 %v6354
    %6637 = vmatpush1.bf16.msra.mxu0 %v6353
    %6638 = vmatprep.subr.bf16.mxu0 %v6356
    %6639 = vmatpush1.bf16.msra.mxu0 %v6355
    %6640 = vmatprep.subr.bf16.mxu0 %v6358
    %6641 = vmatpush1.bf16.msra.mxu0 %v6357
    %6642 = vmatprep.subr.bf16.mxu0 %v6360
    %6643 = vmatpush1.bf16.msra.mxu0 %v6359
    %6644 = vmatprep.subr.bf16.mxu0 %v6362
    %6645 = vmatpush1.bf16.msra.mxu0 %v6361
    %6646 = vmatprep.subr.bf16.mxu0 %v6364
    %6647 = vmatpush1.bf16.msra.mxu0 %v6363
    %6648 = vmatprep.subr.bf16.mxu0 %v6366
    %6649 = vmatpush1.bf16.msra.mxu0 %v6365
    %6650 = vmatprep.subr.bf16.mxu0 %v6368
    %6651 = vmatpush1.bf16.msra.mxu0 %v6367
    %6652 = vmatprep.subr.bf16.mxu0 %v6370
    %6653 = vmatpush1.bf16.msra.mxu0 %v6369
    %6654 = vmatprep.subr.bf16.mxu0 %v6372
    %6655 = vmatpush1.bf16.msra.mxu0 %v6371
    %6656 = vmatprep.subr.bf16.mxu0 %v6374
    %6657 = vmatpush1.bf16.msra.mxu0 %v6373
    %6658 = vmatprep.subr.bf16.mxu0 %v6376
    %6659 = vmatpush1.bf16.msra.mxu0 %v6375
    %6660 = vmatprep.subr.bf16.mxu0 %v6378
    %6661 = vmatpush1.bf16.msra.mxu0 %v6377
    %6662 = vmatprep.subr.bf16.mxu0 %v6380
    %6663 = vmatpush1.bf16.msra.mxu0 %v6379
    %6664 = vmatprep.subr.bf16.mxu0 %v6382
    %6665 = vmatpush1.bf16.msra.mxu0 %v6381
    %6666 = vmatprep.subr.bf16.mxu0 %v6384
    %6667 = vmatpush1.bf16.msra.mxu0 %v6383
    %6668 = vmatprep.mubr.bf16.mxu0 %v5732
    %6669 = vmatmul.mubr.bf16.gmra.mrb[0].mxu0 %v5731
    %v6670 = vpop.f32.mrb[0].mxu0
    %v6671 = vadd.f32 %v6630, %v6670
    %v6672 = vpop.f32.mrb[0].mxu0
    %v6673 = vadd.f32 %v6632, %v6672
    %v6674 = vpop.f32.mrb[0].mxu0
    %v6675 = vpop.f32.mrb[0].mxu0
    %6676 = vdwg.mxu0
    %v6677 = vxor.u32 %v6671, 2147483648
    %v6678 = vxor.u32 %v6673, 2147483648
    %v6679 = vmul.f32 %v6677, 1.442695
    %v6680 = vpow.pop %v6679
    %v6681 = vmul.f32 %v6678, 1.442695
    %v6682 = vpow.pop %v6681
    %v6683 = vadd.f32 %v6680, 1.0
    %v6684 = vadd.f32 %v6682, 1.0
    %v6685 = vrcp.pop %v6683
    %v6686 = vmul.f32 1.0, %v6685
    %v6687 = vrcp.pop %v6684
    %v6688 = vmul.f32 1.0, %v6687
    %6689 = vst [vmem:[%s15] sm:$0xff] %v6686
    %6690 = vst [vmem:[%s15 + $0x8] sm:$0xff] %v6688
    // Predicated region
    $region82: #{conv_vae_forward.1} parent=1 // pred_check
      _
    $region83: #{conv_vae_forward.1} parent=1 // pred_check_branch
      %6692 = sbr.rel (0) target = $region85
    $region84: #{conv_vae_forward.1} parent=1 // pred_region
      _
    $region85: #{conv_vae_forward.1} parent=1 // pred_fallthru
      _
    // Predicated region
    $region86: #{conv_vae_forward.1} parent=1 // pred_check
      _
    $region87: #{conv_vae_forward.1} parent=1 // pred_check_branch
      %6694 = sbr.rel (0) target = $region89
    $region88: #{conv_vae_forward.1} parent=1 // pred_region
      _
    $region89: #{conv_vae_forward.1} parent=1 // pred_fallthru
      _
    // Predicated region
    $region90: #{conv_vae_forward.1} parent=1 // pred_check
      _
    $region91: #{conv_vae_forward.1} parent=1 // pred_check_branch
      %6696 = sbr.rel (0) target = $region93
    $region92: #{conv_vae_forward.1} parent=1 // pred_region
      _
    $region93: #{conv_vae_forward.1} parent=1 // pred_fallthru
      _
    // Predicated region
    $region94: #{conv_vae_forward.1} parent=1 // pred_check
      _
    $region95: #{conv_vae_forward.1} parent=1 // pred_check_branch
      %6698 = sbr.rel (0) target = $region97
    $region96: #{conv_vae_forward.1} parent=1 // pred_region
      _
    $region97: #{conv_vae_forward.1} parent=1 // pred_fallthru
      _
    %6699 = vsyncpa [#allocation3], 1
    %6700 = vsyncpa [#allocation5], 1
    %6701 = vsyncpa [#allocation8], 1
    %6702 = vsyncpa [#allocation11], 1

</llo_original>
